<compile_context>
chip_gen: v6e
topology: v6e:2x2x1
jax: 0.10.0
libtpu: 0.0.40
codegen_flags: <defaults>
</compile_context>

<pallas_src>
import functools

import jax
import jax.numpy as jnp
from jax.experimental import pallas as pl
from jax.experimental.pallas import tpu as pltpu


# ----------------------------------------------------------------------------
# Dense operator for nn.Upsample(scale=2, bilinear, align_corners=True)
# followed by F.pad (zero pad) -- applied inside the kernel as one matmul.
# ----------------------------------------------------------------------------
def _bilinear_matrix(in_size, out_size):
    if out_size == 1:
        src = jnp.zeros((1,), jnp.float32)
    else:
        scale = (in_size - 1) / (out_size - 1)            # align_corners=True
        src = jnp.arange(out_size, dtype=jnp.float32) * scale
    i0 = jnp.clip(jnp.floor(src).astype(jnp.int32), 0, in_size - 1)
    i1 = jnp.clip(i0 + 1, 0, in_size - 1)
    frac = src - i0.astype(jnp.float32)
    rows = jnp.arange(out_size)
    A = jnp.zeros((out_size, in_size), jnp.float32)
    A = A.at[rows, i0].add(1.0 - frac)
    A = A.at[rows, i1].add(frac)
    return A


def _upsample_pad_matrix(in_size, target_size):
    up_size = 2 * in_size
    diff = target_size - up_size
    assert diff >= 0, "only non-negative F.pad is handled"
    A = jnp.zeros((target_size, in_size), jnp.float32)
    A = A.at[diff // 2: diff // 2 + up_size, :].set(_bilinear_matrix(in_size, up_size))
    return A


def _tap_masks(H, W):
    # mask[k, p] == 1 iff pixel p's (ky,kx) conv-tap neighbour is in bounds
    # (this is exactly the conv's zero padding, applied to rolled columns).
    yy, xx = jnp.meshgrid(jnp.arange(H), jnp.arange(W), indexing="ij")
    rows = []
    for ky in range(3):
        for kx in range(3):
            dy, dx = ky - 1, kx - 1
            ok = ((yy + dy >= 0) & (yy + dy < H) &
                  (xx + dx >= 0) & (xx + dx < W))
            rows.append(ok.reshape(-1))
    return jnp.stack(rows, axis=0).astype(jnp.float32)     # (9, H*W)


# ----------------------------------------------------------------------------
# Kernel: one image per grid step, everything channel-major (C, H*W).
# ----------------------------------------------------------------------------
def _up_kernel(x1_ref, x2_ref, cond_ref, mt_ref, w1_ref, w2_ref, aff_ref,
               mask_ref, out_ref, *, H, W, groups, eps):
    HW = H * W
    Cout = out_ref.shape[0]
    gs = Cout // groups

    def conv3x3(act, w_ref, bias):
        # act: (Cin, HW) f32 channel-major; w_ref: (9, Cout, Cin) bf16;
        # bias: (Cout, 1) f32.  Each tap = XLU lane-roll of the flattened
        # pixel axis + boundary mask, then one MXU matmul with a lane-dense
        # (Cout, HW) f32 result.  Masking the RHS columns == conv zero pad.
        acc = None
        for k in range(9):
            dy, dx = k // 3 - 1, k % 3 - 1
            off = dy * W + dx
            if off == 0:
                tap = act
            else:
                tap = pltpu.roll(act, (-off) % HW, axis=1) * mask_ref[k:k + 1, :]
            part = jnp.dot(w_ref[k], tap.astype(jnp.bfloat16),
                           preferred_element_type=jnp.float32)
            acc = part if acc is None else acc + part
        return acc + bias

    def gn_silu(y, gamma, beta):
        # GroupNorm(groups) + SiLU on a (Cout, HW) f32 slab.  Moments via lane
        # then sublane reductions on a (groups, gs, HW) view (no MXU, no
        # per-image loop); variance is centered (two-pass) for robustness.
        yg = y.reshape(groups, gs, HW)
        inv_n = 1.0 / (gs * HW)
        mu = jnp.sum(jnp.sum(yg, axis=2, keepdims=True), axis=1,
                     keepdims=True) * inv_n
        d = yg - mu
        var = jnp.sum(jnp.sum(d * d, axis=2, keepdims=True), axis=1,
                      keepdims=True) * inv_n
        z = (d * jax.lax.rsqrt(var + eps)).reshape(Cout, HW)
        z = z * gamma + beta
        return z * jax.nn.sigmoid(z)             # SiLU via the EUP logistic

    # nn.Upsample(bilinear, align_corners=True) + F.pad as one lane-dense
    # matmul: (C1, H1W1) @ M^T(H1W1, HW) -> (C1, HW), f32 accumulation.
    up = jnp.dot(x1_ref[...], mt_ref[...], preferred_element_type=jnp.float32)

    # conv1 input (channel-major): rows [0:C2) = skip x2, [C2:) = upsampled x1
    # (matches torch.cat([x2, x1_up], dim=1)).
    act1 = jnp.concatenate([x2_ref[...].astype(jnp.float32), up], axis=0)
    h1 = gn_silu(conv3x3(act1, w1_ref, aff_ref[:, 0:1]),
                 aff_ref[:, 1:2], aff_ref[:, 2:3])

    # conv2 input: [h1, cond broadcast over all pixels].
    act2 = jnp.concatenate([h1, cond_ref[...].astype(jnp.float32)], axis=0)
    h2 = gn_silu(conv3x3(act2, w2_ref, aff_ref[:, 3:4]),
                 aff_ref[:, 4:5], aff_ref[:, 5:6])

    # Lane-dense writeback, already channel-first: (Cout, HW).
    out_ref[...] = h2.astype(out_ref.dtype)


# ----------------------------------------------------------------------------
# Wrapper
# ----------------------------------------------------------------------------
def up_forward(x1, x2, cond, params):
    N, C1, H1, W1 = x1.shape
    _, C2, H, W = x2.shape
    Cd = cond.shape[1]
    HW = H * W
    w1, w2 = params["w1"], params["w2"]              # HWIO: (3, 3, Cin, Cout)
    Cin1, Cout = w1.shape[2], w1.shape[3]
    Cin2 = w2.shape[2]
    assert Cin1 == C1 + C2 and Cin2 == Cout + Cd and Cout % 8 == 0

    # Channel-major (C, pixels) staging -- NCHW already has pixels minor, so
    # no host-side transposes; MXU operands in bf16 (f32 accumulation in-kernel).
    x1f = x1.reshape(N, C1, H1 * W1).astype(jnp.bfloat16)
    x2f = x2.reshape(N, C2, HW).astype(jnp.bfloat16)
    condb = jnp.broadcast_to(cond.reshape(N, Cd, 1), (N, Cd, HW)).astype(jnp.bfloat16)

    # Upsample+pad operator (transposed for a lane-dense result), per-tap
    # conv boundary masks, channel-major weights, packed affine params.
    mt = jnp.kron(_upsample_pad_matrix(H1, H),
                  _upsample_pad_matrix(W1, W)).T.astype(jnp.bfloat16)   # (H1W1, HW)
    mask = _tap_masks(H, W)                                             # (9, HW)
    w1r = jnp.transpose(w1.reshape(9, Cin1, Cout), (0, 2, 1)).astype(jnp.bfloat16)
    w2r = jnp.transpose(w2.reshape(9, Cin2, Cout), (0, 2, 1)).astype(jnp.bfloat16)
    aff = jnp.stack([params["b1"], params["g1"], params["t1"],
                     params["b2"], params["g2"], params["t2"]],
                    axis=1).astype(jnp.float32)                         # (Cout, 6)

    kern = functools.partial(_up_kernel, H=H, W=W, groups=8, eps=1e-5)
    out = pl.pallas_call(
        kern,
        out_shape=jax.ShapeDtypeStruct((N, Cout, HW), jnp.float32),
        grid=(N,),
        in_specs=[
            pl.BlockSpec((None, C1, H1 * W1), lambda n: (n, 0, 0)),   # x1
            pl.BlockSpec((None, C2, HW), lambda n: (n, 0, 0)),        # x2 skip
            pl.BlockSpec((None, Cd, HW), lambda n: (n, 0, 0)),        # cond
            pl.BlockSpec((H1 * W1, HW), lambda n: (0, 0)),            # M^T
            pl.BlockSpec((9, Cout, Cin1), lambda n: (0, 0, 0)),       # w1 taps
            pl.BlockSpec((9, Cout, Cin2), lambda n: (0, 0, 0)),       # w2 taps
            pl.BlockSpec((Cout, 6), lambda n: (0, 0)),                # affine
            pl.BlockSpec((9, HW), lambda n: (0, 0)),                  # tap masks
        ],
        out_specs=pl.BlockSpec((None, Cout, HW), lambda n: (n, 0, 0)),
        compiler_params=pltpu.CompilerParams(
            dimension_semantics=("parallel",)),
    )(x1f, x2f, condb, mt, w1r, w2r, aff, mask)

    # Output is already channels-first; just split H*W back into (H, W).
    return out.reshape(N, Cout, H, W)


# ----------------------------------------------------------------------------
# Pure-JAX reference (same math, XLA conv).  `operand_dtype=bfloat16` mirrors
# the kernel's mixed-precision MXU path (bf16 operands, f32 accumulation) for
# a tight correctness check; default f32 is the exact PyTorch-module math.
# ----------------------------------------------------------------------------
def up_reference(x1, x2, cond, params, operand_dtype=jnp.float32):
    rd = lambda a: a.astype(operand_dtype).astype(jnp.float32)
    N, C1, H1, W1 = x1.shape
    _, C2, H, W = x2.shape
    Cd = cond.shape[1]
    M = jnp.kron(_upsample_pad_matrix(H1, H), _upsample_pad_matrix(W1, W))
    x1f = jnp.transpose(x1, (0, 2, 3, 1)).reshape(N, H1 * W1, C1).astype(jnp.float32)
    up = jnp.einsum("pq,nqc->npc", rd(M), rd(x1f)).reshape(N, H, W, C1)
    x = jnp.concatenate(
        [jnp.transpose(x2, (0, 2, 3, 1)).astype(jnp.float32), up], axis=-1)

    def conv(x, w, b):
        y = jax.lax.conv_general_dilated(
            rd(x), rd(w), (1, 1), ((1, 1), (1, 1)),
            dimension_numbers=("NHWC", "HWIO", "NHWC"))
        return y + b.reshape(1, 1, 1, -1)

    def gn_silu(x, g, t, groups=8, eps=1e-5):
        n, h, w, c = x.shape
        xr = x.reshape(n, h, w, groups, c // groups)
        mu = xr.mean(axis=(1, 2, 4), keepdims=True)
        var = jnp.mean((xr - mu) ** 2, axis=(1, 2, 4), keepdims=True)
        y = ((xr - mu) * jax.lax.rsqrt(var + eps)).reshape(n, h, w, c)
        y = y * g.reshape(1, 1, 1, -1) + t.reshape(1, 1, 1, -1)
        return y * jax.nn.sigmoid(y)

    h1 = gn_silu(conv(x, params["w1"], params["b1"]), params["g1"], params["t1"])
    cb = jnp.broadcast_to(cond.reshape(N, 1, 1, Cd).astype(jnp.float32), (N, H, W, Cd))
    h2 = gn_silu(conv(jnp.concatenate([h1, cb], axis=-1), params["w2"], params["b2"]),
                 params["g2"], params["t2"])
    return jnp.transpose(h2, (0, 3, 1, 2))


if __name__ == "__main__":
    key = jax.random.PRNGKey(0)
    # Up(in_channels=16, out_channels=16, cond_dim=4); x1 is 2x-upsampled to x2's size.
    N, C1, C2, H1, W1, Cout, Cd = 2, 8, 8, 8, 8, 16, 4
    H, W = 2 * H1, 2 * W1
    Cin1, Cin2 = C1 + C2, Cout + Cd

    ks = jax.random.split(key, 11)
    params = {
        "w1": 0.1 * jax.random.normal(ks[0], (3, 3, Cin1, Cout), jnp.float32),
        "b1": 0.05 * jax.random.normal(ks[1], (Cout,), jnp.float32),
        "g1": 1.0 + 0.1 * jax.random.normal(ks[2], (Cout,), jnp.float32),
        "t1": 0.05 * jax.random.normal(ks[3], (Cout,), jnp.float32),
        "w2": 0.1 * jax.random.normal(ks[4], (3, 3, Cin2, Cout), jnp.float32),
        "b2": 0.05 * jax.random.normal(ks[5], (Cout,), jnp.float32),
        "g2": 1.0 + 0.1 * jax.random.normal(ks[6], (Cout,), jnp.float32),
        "t2": 0.05 * jax.random.normal(ks[7], (Cout,), jnp.float32),
    }
    x1 = jax.random.normal(ks[8], (N, C1, H1, W1), jnp.float32)
    x2 = jax.random.normal(ks[9], (N, C2, H, W), jnp.float32)
    cond = jax.random.normal(ks[10], (N, Cd, 1, 1), jnp.float32)

    out = jax.block_until_ready(jax.jit(up_forward)(x1, x2, cond, params))
    assert out.shape == (N, Cout, H, W)

    # Tight check vs. a reference with the same bf16-rounded matmul operands.
    ref_bf16 = up_reference(x1, x2, cond, params, operand_dtype=jnp.bfloat16)
    err_b = float(jnp.max(jnp.abs(out - ref_bf16)))
    assert err_b < 5e-3, f"bf16-matched max abs err {err_b}"
    # Loose check vs. the pure-f32 module math (difference = bf16 rounding only).
    ref_f32 = up_reference(x1, x2, cond, params)
    err_f = float(jnp.max(jnp.abs(out - ref_f32)))
    assert err_f < 1e-1, f"f32 max abs err {err_f}"
    print("KERNEL_OK")
</pallas_src>

<mosaic_0001>
module attributes {stable_mosaic.version = 11 : i64} {
  func.func private @main(%arg0: i32) attributes {dimension_semantics = [#tpu.dimension_semantics<core_parallel>], iteration_bounds = array<i64: 2>, tpu.core_type = #tpu.core_type<sc_scalar_subcore>, window_params = []} {
    return
  }
}

module attributes {stable_mosaic.version = 11 : i64} {
  func.func private @main(%arg0: i32) attributes {dimension_semantics = [#tpu.dimension_semantics<core_parallel>], iteration_bounds = array<i64: 2>, tpu.core_type = #tpu.core_type<sc_scalar_subcore>, window_params = []} {
    return
  }
}

module attributes {stable_mosaic.version = 11 : i64} {
  func.func @_up_kernel(%arg0: i32, %arg1: memref<1x8x64xbf16, #tpu.memory_space<vmem>>, %arg2: memref<1x8x256xbf16, #tpu.memory_space<vmem>>, %arg3: memref<1x4x256xbf16, #tpu.memory_space<vmem>>, %arg4: memref<64x256xbf16, #tpu.memory_space<vmem>>, %arg5: memref<9x16x16xbf16, #tpu.memory_space<vmem>>, %arg6: memref<9x16x20xbf16, #tpu.memory_space<vmem>>, %arg7: memref<16x6xf32, #tpu.memory_space<vmem>>, %arg8: memref<9x256xf32, #tpu.memory_space<vmem>>, %arg9: memref<1x16x256xf32, #tpu.memory_space<vmem>>) attributes {dimension_semantics = [#tpu.dimension_semantics<parallel>], iteration_bounds = array<i64: 2>, scalar_prefetch = 0 : i64, scratch_operands = 0 : i64, tpu.core_type = #tpu.core_type<tc>, window_params = [{transform_indices = @transform_0, window_bounds = array<i64: 1, 8, 64>}, {transform_indices = @transform_1, window_bounds = array<i64: 1, 8, 256>}, {transform_indices = @transform_2, window_bounds = array<i64: 1, 4, 256>}, {pipeline_mode = #tpu.pipeline_mode<synchronous>, transform_indices = @transform_3, window_bounds = array<i64: 64, 256>}, {pipeline_mode = #tpu.pipeline_mode<synchronous>, transform_indices = @transform_4, window_bounds = array<i64: 9, 16, 16>}, {pipeline_mode = #tpu.pipeline_mode<synchronous>, transform_indices = @transform_5, window_bounds = array<i64: 9, 16, 20>}, {pipeline_mode = #tpu.pipeline_mode<synchronous>, transform_indices = @transform_6, window_bounds = array<i64: 16, 6>}, {pipeline_mode = #tpu.pipeline_mode<synchronous>, transform_indices = @transform_7, window_bounds = array<i64: 9, 256>}, {transform_indices = @transform_8, window_bounds = array<i64: 1, 16, 256>}]} {
    %c0 = arith.constant 0 : index
    %c0_0 = arith.constant 0 : index
    %c0_1 = arith.constant 0 : index
    %0 = vector.load %arg1[%c0, %c0_0, %c0_1] : memref<1x8x64xbf16, #tpu.memory_space<vmem>>, vector<1x8x64xbf16>
    %1 = vector.shape_cast %0 : vector<1x8x64xbf16> to vector<8x64xbf16>
    %c0_2 = arith.constant 0 : index
    %c0_3 = arith.constant 0 : index
    %2 = vector.load %arg4[%c0_2, %c0_3] : memref<64x256xbf16, #tpu.memory_space<vmem>>, vector<64x256xbf16>
    %cst = arith.constant dense<0.000000e+00> : vector<8x256xf32>
    %3 = tpu.matmul %1, %2, %cst {dimension_numbers = #tpu.dot_dimension_numbers<[1], [0], [0], [1], [0, 0, 1, 1], [], []>} : vector<8x64xbf16>, vector<64x256xbf16>, vector<8x256xf32> -> vector<8x256xf32>
    %c0_4 = arith.constant 0 : index
    %c0_5 = arith.constant 0 : index
    %c0_6 = arith.constant 0 : index
    %4 = vector.load %arg2[%c0_4, %c0_5, %c0_6] : memref<1x8x256xbf16, #tpu.memory_space<vmem>>, vector<1x8x256xbf16>
    %5 = vector.shape_cast %4 : vector<1x8x256xbf16> to vector<8x256xbf16>
    %6 = arith.extf %5 : vector<8x256xbf16> to vector<8x256xf32>
    %7 = tpu.concatenate %6, %3 in 0 : vector<8x256xf32>, vector<8x256xf32> -> vector<16x256xf32>
    %c0_7 = arith.constant 0 : index
    %c0_8 = arith.constant 0 : index
    %8 = vector.load %arg7[%c0_7, %c0_8] : memref<16x6xf32, #tpu.memory_space<vmem>>, vector<16x1xf32>
    %c17_i32 = arith.constant 17 : i32
    %9 = tpu.dynamic_rotate %7 by %c17_i32 dim 1 : vector<16x256xf32>, i32 -> vector<16x256xf32>
    %c0_9 = arith.constant 0 : index
    %c0_10 = arith.constant 0 : index
    %10 = vector.load %arg8[%c0_9, %c0_10] : memref<9x256xf32, #tpu.memory_space<vmem>>, vector<1x256xf32>
    %11 = vector.broadcast %10 : vector<1x256xf32> to vector<16x256xf32>
    %12 = arith.mulf %9, %11 : vector<16x256xf32>
    %c0_11 = arith.constant 0 : index
    %c0_12 = arith.constant 0 : index
    %c0_13 = arith.constant 0 : index
    %13 = vector.load %arg5[%c0_11, %c0_12, %c0_13] : memref<9x16x16xbf16, #tpu.memory_space<vmem>>, vector<1x16x16xbf16>
    %14 = vector.shape_cast %13 : vector<1x16x16xbf16> to vector<16x16xbf16>
    %15 = arith.truncf %12 : vector<16x256xf32> to vector<16x256xbf16>
    %cst_14 = arith.constant dense<0.000000e+00> : vector<16x256xf32>
    %16 = tpu.matmul %14, %15, %cst_14 {dimension_numbers = #tpu.dot_dimension_numbers<[1], [0], [0], [1], [0, 0, 1, 1], [], []>} : vector<16x16xbf16>, vector<16x256xbf16>, vector<16x256xf32> -> vector<16x256xf32>
    %c16_i32 = arith.constant 16 : i32
    %17 = tpu.dynamic_rotate %7 by %c16_i32 dim 1 : vector<16x256xf32>, i32 -> vector<16x256xf32>
    %c1 = arith.constant 1 : index
    %c0_15 = arith.constant 0 : index
    %18 = vector.load %arg8[%c1, %c0_15] : memref<9x256xf32, #tpu.memory_space<vmem>>, vector<1x256xf32>
    %19 = vector.broadcast %18 : vector<1x256xf32> to vector<16x256xf32>
    %20 = arith.mulf %17, %19 : vector<16x256xf32>
    %c1_16 = arith.constant 1 : index
    %c0_17 = arith.constant 0 : index
    %c0_18 = arith.constant 0 : index
    %21 = vector.load %arg5[%c1_16, %c0_17, %c0_18] : memref<9x16x16xbf16, #tpu.memory_space<vmem>>, vector<1x16x16xbf16>
    %22 = vector.shape_cast %21 : vector<1x16x16xbf16> to vector<16x16xbf16>
    %23 = arith.truncf %20 : vector<16x256xf32> to vector<16x256xbf16>
    %cst_19 = arith.constant dense<0.000000e+00> : vector<16x256xf32>
    %24 = tpu.matmul %22, %23, %cst_19 {dimension_numbers = #tpu.dot_dimension_numbers<[1], [0], [0], [1], [0, 0, 1, 1], [], []>} : vector<16x16xbf16>, vector<16x256xbf16>, vector<16x256xf32> -> vector<16x256xf32>
    %25 = arith.addf %16, %24 : vector<16x256xf32>
    %c15_i32 = arith.constant 15 : i32
    %26 = tpu.dynamic_rotate %7 by %c15_i32 dim 1 : vector<16x256xf32>, i32 -> vector<16x256xf32>
    %c2 = arith.constant 2 : index
    %c0_20 = arith.constant 0 : index
    %27 = vector.load %arg8[%c2, %c0_20] : memref<9x256xf32, #tpu.memory_space<vmem>>, vector<1x256xf32>
    %28 = vector.broadcast %27 : vector<1x256xf32> to vector<16x256xf32>
    %29 = arith.mulf %26, %28 : vector<16x256xf32>
    %c2_21 = arith.constant 2 : index
    %c0_22 = arith.constant 0 : index
    %c0_23 = arith.constant 0 : index
    %30 = vector.load %arg5[%c2_21, %c0_22, %c0_23] : memref<9x16x16xbf16, #tpu.memory_space<vmem>>, vector<1x16x16xbf16>
    %31 = vector.shape_cast %30 : vector<1x16x16xbf16> to vector<16x16xbf16>
    %32 = arith.truncf %29 : vector<16x256xf32> to vector<16x256xbf16>
    %cst_24 = arith.constant dense<0.000000e+00> : vector<16x256xf32>
    %33 = tpu.matmul %31, %32, %cst_24 {dimension_numbers = #tpu.dot_dimension_numbers<[1], [0], [0], [1], [0, 0, 1, 1], [], []>} : vector<16x16xbf16>, vector<16x256xbf16>, vector<16x256xf32> -> vector<16x256xf32>
    %34 = arith.addf %25, %33 : vector<16x256xf32>
    %c1_i32 = arith.constant 1 : i32
    %35 = tpu.dynamic_rotate %7 by %c1_i32 dim 1 : vector<16x256xf32>, i32 -> vector<16x256xf32>
    %c3 = arith.constant 3 : index
    %c0_25 = arith.constant 0 : index
    %36 = vector.load %arg8[%c3, %c0_25] : memref<9x256xf32, #tpu.memory_space<vmem>>, vector<1x256xf32>
    %37 = vector.broadcast %36 : vector<1x256xf32> to vector<16x256xf32>
    %38 = arith.mulf %35, %37 : vector<16x256xf32>
    %c3_26 = arith.constant 3 : index
    %c0_27 = arith.constant 0 : index
    %c0_28 = arith.constant 0 : index
    %39 = vector.load %arg5[%c3_26, %c0_27, %c0_28] : memref<9x16x16xbf16, #tpu.memory_space<vmem>>, vector<1x16x16xbf16>
    %40 = vector.shape_cast %39 : vector<1x16x16xbf16> to vector<16x16xbf16>
    %41 = arith.truncf %38 : vector<16x256xf32> to vector<16x256xbf16>
    %cst_29 = arith.constant dense<0.000000e+00> : vector<16x256xf32>
    %42 = tpu.matmul %40, %41, %cst_29 {dimension_numbers = #tpu.dot_dimension_numbers<[1], [0], [0], [1], [0, 0, 1, 1], [], []>} : vector<16x16xbf16>, vector<16x256xbf16>, vector<16x256xf32> -> vector<16x256xf32>
    %43 = arith.addf %34, %42 : vector<16x256xf32>
    %c4 = arith.constant 4 : index
    %c0_30 = arith.constant 0 : index
    %c0_31 = arith.constant 0 : index
    %44 = vector.load %arg5[%c4, %c0_30, %c0_31] : memref<9x16x16xbf16, #tpu.memory_space<vmem>>, vector<1x16x16xbf16>
    %45 = vector.shape_cast %44 : vector<1x16x16xbf16> to vector<16x16xbf16>
    %46 = arith.truncf %7 : vector<16x256xf32> to vector<16x256xbf16>
    %cst_32 = arith.constant dense<0.000000e+00> : vector<16x256xf32>
    %47 = tpu.matmul %45, %46, %cst_32 {dimension_numbers = #tpu.dot_dimension_numbers<[1], [0], [0], [1], [0, 0, 1, 1], [], []>} : vector<16x16xbf16>, vector<16x256xbf16>, vector<16x256xf32> -> vector<16x256xf32>
    %48 = arith.addf %43, %47 : vector<16x256xf32>
    %c255_i32 = arith.constant 255 : i32
    %49 = tpu.dynamic_rotate %7 by %c255_i32 dim 1 : vector<16x256xf32>, i32 -> vector<16x256xf32>
    %c5 = arith.constant 5 : index
    %c0_33 = arith.constant 0 : index
    %50 = vector.load %arg8[%c5, %c0_33] : memref<9x256xf32, #tpu.memory_space<vmem>>, vector<1x256xf32>
    %51 = vector.broadcast %50 : vector<1x256xf32> to vector<16x256xf32>
    %52 = arith.mulf %49, %51 : vector<16x256xf32>
    %c5_34 = arith.constant 5 : index
    %c0_35 = arith.constant 0 : index
    %c0_36 = arith.constant 0 : index
    %53 = vector.load %arg5[%c5_34, %c0_35, %c0_36] : memref<9x16x16xbf16, #tpu.memory_space<vmem>>, vector<1x16x16xbf16>
    %54 = vector.shape_cast %53 : vector<1x16x16xbf16> to vector<16x16xbf16>
    %55 = arith.truncf %52 : vector<16x256xf32> to vector<16x256xbf16>
    %cst_37 = arith.constant dense<0.000000e+00> : vector<16x256xf32>
    %56 = tpu.matmul %54, %55, %cst_37 {dimension_numbers = #tpu.dot_dimension_numbers<[1], [0], [0], [1], [0, 0, 1, 1], [], []>} : vector<16x16xbf16>, vector<16x256xbf16>, vector<16x256xf32> -> vector<16x256xf32>
    %57 = arith.addf %48, %56 : vector<16x256xf32>
    %c241_i32 = arith.constant 241 : i32
    %58 = tpu.dynamic_rotate %7 by %c241_i32 dim 1 : vector<16x256xf32>, i32 -> vector<16x256xf32>
    %c6 = arith.constant 6 : index
    %c0_38 = arith.constant 0 : index
    %59 = vector.load %arg8[%c6, %c0_38] : memref<9x256xf32, #tpu.memory_space<vmem>>, vector<1x256xf32>
    %60 = vector.broadcast %59 : vector<1x256xf32> to vector<16x256xf32>
    %61 = arith.mulf %58, %60 : vector<16x256xf32>
    %c6_39 = arith.constant 6 : index
    %c0_40 = arith.constant 0 : index
    %c0_41 = arith.constant 0 : index
    %62 = vector.load %arg5[%c6_39, %c0_40, %c0_41] : memref<9x16x16xbf16, #tpu.memory_space<vmem>>, vector<1x16x16xbf16>
    %63 = vector.shape_cast %62 : vector<1x16x16xbf16> to vector<16x16xbf16>
    %64 = arith.truncf %61 : vector<16x256xf32> to vector<16x256xbf16>
    %cst_42 = arith.constant dense<0.000000e+00> : vector<16x256xf32>
    %65 = tpu.matmul %63, %64, %cst_42 {dimension_numbers = #tpu.dot_dimension_numbers<[1], [0], [0], [1], [0, 0, 1, 1], [], []>} : vector<16x16xbf16>, vector<16x256xbf16>, vector<16x256xf32> -> vector<16x256xf32>
    %66 = arith.addf %57, %65 : vector<16x256xf32>
    %c240_i32 = arith.constant 240 : i32
    %67 = tpu.dynamic_rotate %7 by %c240_i32 dim 1 : vector<16x256xf32>, i32 -> vector<16x256xf32>
    %c7 = arith.constant 7 : index
    %c0_43 = arith.constant 0 : index
    %68 = vector.load %arg8[%c7, %c0_43] : memref<9x256xf32, #tpu.memory_space<vmem>>, vector<1x256xf32>
    %69 = vector.broadcast %68 : vector<1x256xf32> to vector<16x256xf32>
    %70 = arith.mulf %67, %69 : vector<16x256xf32>
    %c7_44 = arith.constant 7 : index
    %c0_45 = arith.constant 0 : index
    %c0_46 = arith.constant 0 : index
    %71 = vector.load %arg5[%c7_44, %c0_45, %c0_46] : memref<9x16x16xbf16, #tpu.memory_space<vmem>>, vector<1x16x16xbf16>
    %72 = vector.shape_cast %71 : vector<1x16x16xbf16> to vector<16x16xbf16>
    %73 = arith.truncf %70 : vector<16x256xf32> to vector<16x256xbf16>
    %cst_47 = arith.constant dense<0.000000e+00> : vector<16x256xf32>
    %74 = tpu.matmul %72, %73, %cst_47 {dimension_numbers = #tpu.dot_dimension_numbers<[1], [0], [0], [1], [0, 0, 1, 1], [], []>} : vector<16x16xbf16>, vector<16x256xbf16>, vector<16x256xf32> -> vector<16x256xf32>
    %75 = arith.addf %66, %74 : vector<16x256xf32>
    %c239_i32 = arith.constant 239 : i32
    %76 = tpu.dynamic_rotate %7 by %c239_i32 dim 1 : vector<16x256xf32>, i32 -> vector<16x256xf32>
    %c8 = arith.constant 8 : index
    %c0_48 = arith.constant 0 : index
    %77 = vector.load %arg8[%c8, %c0_48] : memref<9x256xf32, #tpu.memory_space<vmem>>, vector<1x256xf32>
    %78 = vector.broadcast %77 : vector<1x256xf32> to vector<16x256xf32>
    %79 = arith.mulf %76, %78 : vector<16x256xf32>
    %c8_49 = arith.constant 8 : index
    %c0_50 = arith.constant 0 : index
    %c0_51 = arith.constant 0 : index
    %80 = vector.load %arg5[%c8_49, %c0_50, %c0_51] : memref<9x16x16xbf16, #tpu.memory_space<vmem>>, vector<1x16x16xbf16>
    %81 = vector.shape_cast %80 : vector<1x16x16xbf16> to vector<16x16xbf16>
    %82 = arith.truncf %79 : vector<16x256xf32> to vector<16x256xbf16>
    %cst_52 = arith.constant dense<0.000000e+00> : vector<16x256xf32>
    %83 = tpu.matmul %81, %82, %cst_52 {dimension_numbers = #tpu.dot_dimension_numbers<[1], [0], [0], [1], [0, 0, 1, 1], [], []>} : vector<16x16xbf16>, vector<16x256xbf16>, vector<16x256xf32> -> vector<16x256xf32>
    %84 = arith.addf %75, %83 : vector<16x256xf32>
    %85 = vector.broadcast %8 : vector<16x1xf32> to vector<16x256xf32>
    %86 = arith.addf %84, %85 : vector<16x256xf32>
    %c0_53 = arith.constant 0 : index
    %c1_54 = arith.constant 1 : index
    %87 = vector.load %arg7[%c0_53, %c1_54] : memref<16x6xf32, #tpu.memory_space<vmem>>, vector<16x1xf32>
    %c0_55 = arith.constant 0 : index
    %c2_56 = arith.constant 2 : index
    %88 = vector.load %arg7[%c0_55, %c2_56] : memref<16x6xf32, #tpu.memory_space<vmem>>, vector<16x1xf32>
    %89 = vector.shape_cast %86 : vector<16x256xf32> to vector<8x2x256xf32>
    %cst_57 = arith.constant dense<0.000000e+00> : vector<8x2xf32>
    %90 = vector.multi_reduction <add>, %89, %cst_57 [2] : vector<8x2x256xf32> to vector<8x2xf32>
    %91 = vector.shape_cast %90 : vector<8x2xf32> to vector<8x2x1xf32>
    %cst_58 = arith.constant dense<0.000000e+00> : vector<8x1xf32>
    %92 = vector.multi_reduction <add>, %91, %cst_58 [1] : vector<8x2x1xf32> to vector<8x1xf32>
    %93 = vector.shape_cast %92 : vector<8x1xf32> to vector<8x1x1xf32>
    %cst_59 = arith.constant 0.001953125 : f32
    %94 = vector.broadcast %cst_59 : f32 to vector<8x1x1xf32>
    %95 = arith.mulf %93, %94 : vector<8x1x1xf32>
    %96 = vector.broadcast %95 : vector<8x1x1xf32> to vector<8x2x256xf32>
    %97 = arith.subf %89, %96 : vector<8x2x256xf32>
    %98 = arith.mulf %97, %97 : vector<8x2x256xf32>
    %cst_60 = arith.constant dense<0.000000e+00> : vector<8x2xf32>
    %99 = vector.multi_reduction <add>, %98, %cst_60 [2] : vector<8x2x256xf32> to vector<8x2xf32>
    %100 = vector.shape_cast %99 : vector<8x2xf32> to vector<8x2x1xf32>
    %cst_61 = arith.constant dense<0.000000e+00> : vector<8x1xf32>
    %101 = vector.multi_reduction <add>, %100, %cst_61 [1] : vector<8x2x1xf32> to vector<8x1xf32>
    %102 = vector.shape_cast %101 : vector<8x1xf32> to vector<8x1x1xf32>
    %cst_62 = arith.constant 0.001953125 : f32
    %103 = vector.broadcast %cst_62 : f32 to vector<8x1x1xf32>
    %104 = arith.mulf %102, %103 : vector<8x1x1xf32>
    %cst_63 = arith.constant 9.99999974E-6 : f32
    %105 = vector.broadcast %cst_63 : f32 to vector<8x1x1xf32>
    %106 = arith.addf %104, %105 : vector<8x1x1xf32>
    %107 = math.rsqrt %106 : vector<8x1x1xf32>
    %108 = vector.broadcast %107 : vector<8x1x1xf32> to vector<8x2x256xf32>
    %109 = arith.mulf %97, %108 : vector<8x2x256xf32>
    %110 = vector.shape_cast %109 : vector<8x2x256xf32> to vector<16x256xf32>
    %111 = vector.broadcast %87 : vector<16x1xf32> to vector<16x256xf32>
    %112 = arith.mulf %110, %111 : vector<16x256xf32>
    %113 = vector.broadcast %88 : vector<16x1xf32> to vector<16x256xf32>
    %114 = arith.addf %112, %113 : vector<16x256xf32>
    %115 = arith.negf %114 : vector<16x256xf32>
    %116 = math.exp %115 : vector<16x256xf32>
    %cst_64 = arith.constant 1.000000e+00 : f32
    %117 = vector.broadcast %cst_64 : f32 to vector<16x256xf32>
    %118 = arith.addf %117, %116 : vector<16x256xf32>
    %119 = arith.divf %117, %118 : vector<16x256xf32>
    %120 = arith.mulf %114, %119 : vector<16x256xf32>
    %c0_65 = arith.constant 0 : index
    %c0_66 = arith.constant 0 : index
    %c0_67 = arith.constant 0 : index
    %121 = vector.load %arg3[%c0_65, %c0_66, %c0_67] : memref<1x4x256xbf16, #tpu.memory_space<vmem>>, vector<1x4x256xbf16>
    %122 = vector.shape_cast %121 : vector<1x4x256xbf16> to vector<4x256xbf16>
    %123 = arith.extf %122 : vector<4x256xbf16> to vector<4x256xf32>
    %124 = tpu.concatenate %120, %123 in 0 : vector<16x256xf32>, vector<4x256xf32> -> vector<20x256xf32>
    %c0_68 = arith.constant 0 : index
    %c3_69 = arith.constant 3 : index
    %125 = vector.load %arg7[%c0_68, %c3_69] : memref<16x6xf32, #tpu.memory_space<vmem>>, vector<16x1xf32>
    %c17_i32_70 = arith.constant 17 : i32
    %126 = tpu.dynamic_rotate %124 by %c17_i32_70 dim 1 : vector<20x256xf32>, i32 -> vector<20x256xf32>
    %c0_71 = arith.constant 0 : index
    %c0_72 = arith.constant 0 : index
    %127 = vector.load %arg8[%c0_71, %c0_72] : memref<9x256xf32, #tpu.memory_space<vmem>>, vector<1x256xf32>
    %128 = vector.broadcast %127 : vector<1x256xf32> to vector<20x256xf32>
    %129 = arith.mulf %126, %128 : vector<20x256xf32>
    %c0_73 = arith.constant 0 : index
    %c0_74 = arith.constant 0 : index
    %c0_75 = arith.constant 0 : index
    %130 = vector.load %arg6[%c0_73, %c0_74, %c0_75] : memref<9x16x20xbf16, #tpu.memory_space<vmem>>, vector<1x16x20xbf16>
    %131 = vector.shape_cast %130 : vector<1x16x20xbf16> to vector<16x20xbf16>
    %132 = arith.truncf %129 : vector<20x256xf32> to vector<20x256xbf16>
    %cst_76 = arith.constant dense<0.000000e+00> : vector<16x256xf32>
    %133 = tpu.matmul %131, %132, %cst_76 {dimension_numbers = #tpu.dot_dimension_numbers<[1], [0], [0], [1], [0, 0, 1, 1], [], []>} : vector<16x20xbf16>, vector<20x256xbf16>, vector<16x256xf32> -> vector<16x256xf32>
    %c16_i32_77 = arith.constant 16 : i32
    %134 = tpu.dynamic_rotate %124 by %c16_i32_77 dim 1 : vector<20x256xf32>, i32 -> vector<20x256xf32>
    %c1_78 = arith.constant 1 : index
    %c0_79 = arith.constant 0 : index
    %135 = vector.load %arg8[%c1_78, %c0_79] : memref<9x256xf32, #tpu.memory_space<vmem>>, vector<1x256xf32>
    %136 = vector.broadcast %135 : vector<1x256xf32> to vector<20x256xf32>
    %137 = arith.mulf %134, %136 : vector<20x256xf32>
    %c1_80 = arith.constant 1 : index
    %c0_81 = arith.constant 0 : index
    %c0_82 = arith.constant 0 : index
    %138 = vector.load %arg6[%c1_80, %c0_81, %c0_82] : memref<9x16x20xbf16, #tpu.memory_space<vmem>>, vector<1x16x20xbf16>
    %139 = vector.shape_cast %138 : vector<1x16x20xbf16> to vector<16x20xbf16>
    %140 = arith.truncf %137 : vector<20x256xf32> to vector<20x256xbf16>
    %cst_83 = arith.constant dense<0.000000e+00> : vector<16x256xf32>
    %141 = tpu.matmul %139, %140, %cst_83 {dimension_numbers = #tpu.dot_dimension_numbers<[1], [0], [0], [1], [0, 0, 1, 1], [], []>} : vector<16x20xbf16>, vector<20x256xbf16>, vector<16x256xf32> -> vector<16x256xf32>
    %142 = arith.addf %133, %141 : vector<16x256xf32>
    %c15_i32_84 = arith.constant 15 : i32
    %143 = tpu.dynamic_rotate %124 by %c15_i32_84 dim 1 : vector<20x256xf32>, i32 -> vector<20x256xf32>
    %c2_85 = arith.constant 2 : index
    %c0_86 = arith.constant 0 : index
    %144 = vector.load %arg8[%c2_85, %c0_86] : memref<9x256xf32, #tpu.memory_space<vmem>>, vector<1x256xf32>
    %145 = vector.broadcast %144 : vector<1x256xf32> to vector<20x256xf32>
    %146 = arith.mulf %143, %145 : vector<20x256xf32>
    %c2_87 = arith.constant 2 : index
    %c0_88 = arith.constant 0 : index
    %c0_89 = arith.constant 0 : index
    %147 = vector.load %arg6[%c2_87, %c0_88, %c0_89] : memref<9x16x20xbf16, #tpu.memory_space<vmem>>, vector<1x16x20xbf16>
    %148 = vector.shape_cast %147 : vector<1x16x20xbf16> to vector<16x20xbf16>
    %149 = arith.truncf %146 : vector<20x256xf32> to vector<20x256xbf16>
    %cst_90 = arith.constant dense<0.000000e+00> : vector<16x256xf32>
    %150 = tpu.matmul %148, %149, %cst_90 {dimension_numbers = #tpu.dot_dimension_numbers<[1], [0], [0], [1], [0, 0, 1, 1], [], []>} : vector<16x20xbf16>, vector<20x256xbf16>, vector<16x256xf32> -> vector<16x256xf32>
    %151 = arith.addf %142, %150 : vector<16x256xf32>
    %c1_i32_91 = arith.constant 1 : i32
    %152 = tpu.dynamic_rotate %124 by %c1_i32_91 dim 1 : vector<20x256xf32>, i32 -> vector<20x256xf32>
    %c3_92 = arith.constant 3 : index
    %c0_93 = arith.constant 0 : index
    %153 = vector.load %arg8[%c3_92, %c0_93] : memref<9x256xf32, #tpu.memory_space<vmem>>, vector<1x256xf32>
    %154 = vector.broadcast %153 : vector<1x256xf32> to vector<20x256xf32>
    %155 = arith.mulf %152, %154 : vector<20x256xf32>
    %c3_94 = arith.constant 3 : index
    %c0_95 = arith.constant 0 : index
    %c0_96 = arith.constant 0 : index
    %156 = vector.load %arg6[%c3_94, %c0_95, %c0_96] : memref<9x16x20xbf16, #tpu.memory_space<vmem>>, vector<1x16x20xbf16>
    %157 = vector.shape_cast %156 : vector<1x16x20xbf16> to vector<16x20xbf16>
    %158 = arith.truncf %155 : vector<20x256xf32> to vector<20x256xbf16>
    %cst_97 = arith.constant dense<0.000000e+00> : vector<16x256xf32>
    %159 = tpu.matmul %157, %158, %cst_97 {dimension_numbers = #tpu.dot_dimension_numbers<[1], [0], [0], [1], [0, 0, 1, 1], [], []>} : vector<16x20xbf16>, vector<20x256xbf16>, vector<16x256xf32> -> vector<16x256xf32>
    %160 = arith.addf %151, %159 : vector<16x256xf32>
    %c4_98 = arith.constant 4 : index
    %c0_99 = arith.constant 0 : index
    %c0_100 = arith.constant 0 : index
    %161 = vector.load %arg6[%c4_98, %c0_99, %c0_100] : memref<9x16x20xbf16, #tpu.memory_space<vmem>>, vector<1x16x20xbf16>
    %162 = vector.shape_cast %161 : vector<1x16x20xbf16> to vector<16x20xbf16>
    %163 = arith.truncf %124 : vector<20x256xf32> to vector<20x256xbf16>
    %cst_101 = arith.constant dense<0.000000e+00> : vector<16x256xf32>
    %164 = tpu.matmul %162, %163, %cst_101 {dimension_numbers = #tpu.dot_dimension_numbers<[1], [0], [0], [1], [0, 0, 1, 1], [], []>} : vector<16x20xbf16>, vector<20x256xbf16>, vector<16x256xf32> -> vector<16x256xf32>
    %165 = arith.addf %160, %164 : vector<16x256xf32>
    %c255_i32_102 = arith.constant 255 : i32
    %166 = tpu.dynamic_rotate %124 by %c255_i32_102 dim 1 : vector<20x256xf32>, i32 -> vector<20x256xf32>
    %c5_103 = arith.constant 5 : index
    %c0_104 = arith.constant 0 : index
    %167 = vector.load %arg8[%c5_103, %c0_104] : memref<9x256xf32, #tpu.memory_space<vmem>>, vector<1x256xf32>
    %168 = vector.broadcast %167 : vector<1x256xf32> to vector<20x256xf32>
    %169 = arith.mulf %166, %168 : vector<20x256xf32>
    %c5_105 = arith.constant 5 : index
    %c0_106 = arith.constant 0 : index
    %c0_107 = arith.constant 0 : index
    %170 = vector.load %arg6[%c5_105, %c0_106, %c0_107] : memref<9x16x20xbf16, #tpu.memory_space<vmem>>, vector<1x16x20xbf16>
    %171 = vector.shape_cast %170 : vector<1x16x20xbf16> to vector<16x20xbf16>
    %172 = arith.truncf %169 : vector<20x256xf32> to vector<20x256xbf16>
    %cst_108 = arith.constant dense<0.000000e+00> : vector<16x256xf32>
    %173 = tpu.matmul %171, %172, %cst_108 {dimension_numbers = #tpu.dot_dimension_numbers<[1], [0], [0], [1], [0, 0, 1, 1], [], []>} : vector<16x20xbf16>, vector<20x256xbf16>, vector<16x256xf32> -> vector<16x256xf32>
    %174 = arith.addf %165, %173 : vector<16x256xf32>
    %c241_i32_109 = arith.constant 241 : i32
    %175 = tpu.dynamic_rotate %124 by %c241_i32_109 dim 1 : vector<20x256xf32>, i32 -> vector<20x256xf32>
    %c6_110 = arith.constant 6 : index
    %c0_111 = arith.constant 0 : index
    %176 = vector.load %arg8[%c6_110, %c0_111] : memref<9x256xf32, #tpu.memory_space<vmem>>, vector<1x256xf32>
    %177 = vector.broadcast %176 : vector<1x256xf32> to vector<20x256xf32>
    %178 = arith.mulf %175, %177 : vector<20x256xf32>
    %c6_112 = arith.constant 6 : index
    %c0_113 = arith.constant 0 : index
    %c0_114 = arith.constant 0 : index
    %179 = vector.load %arg6[%c6_112, %c0_113, %c0_114] : memref<9x16x20xbf16, #tpu.memory_space<vmem>>, vector<1x16x20xbf16>
    %180 = vector.shape_cast %179 : vector<1x16x20xbf16> to vector<16x20xbf16>
    %181 = arith.truncf %178 : vector<20x256xf32> to vector<20x256xbf16>
    %cst_115 = arith.constant dense<0.000000e+00> : vector<16x256xf32>
    %182 = tpu.matmul %180, %181, %cst_115 {dimension_numbers = #tpu.dot_dimension_numbers<[1], [0], [0], [1], [0, 0, 1, 1], [], []>} : vector<16x20xbf16>, vector<20x256xbf16>, vector<16x256xf32> -> vector<16x256xf32>
    %183 = arith.addf %174, %182 : vector<16x256xf32>
    %c240_i32_116 = arith.constant 240 : i32
    %184 = tpu.dynamic_rotate %124 by %c240_i32_116 dim 1 : vector<20x256xf32>, i32 -> vector<20x256xf32>
    %c7_117 = arith.constant 7 : index
    %c0_118 = arith.constant 0 : index
    %185 = vector.load %arg8[%c7_117, %c0_118] : memref<9x256xf32, #tpu.memory_space<vmem>>, vector<1x256xf32>
    %186 = vector.broadcast %185 : vector<1x256xf32> to vector<20x256xf32>
    %187 = arith.mulf %184, %186 : vector<20x256xf32>
    %c7_119 = arith.constant 7 : index
    %c0_120 = arith.constant 0 : index
    %c0_121 = arith.constant 0 : index
    %188 = vector.load %arg6[%c7_119, %c0_120, %c0_121] : memref<9x16x20xbf16, #tpu.memory_space<vmem>>, vector<1x16x20xbf16>
    %189 = vector.shape_cast %188 : vector<1x16x20xbf16> to vector<16x20xbf16>
    %190 = arith.truncf %187 : vector<20x256xf32> to vector<20x256xbf16>
    %cst_122 = arith.constant dense<0.000000e+00> : vector<16x256xf32>
    %191 = tpu.matmul %189, %190, %cst_122 {dimension_numbers = #tpu.dot_dimension_numbers<[1], [0], [0], [1], [0, 0, 1, 1], [], []>} : vector<16x20xbf16>, vector<20x256xbf16>, vector<16x256xf32> -> vector<16x256xf32>
    %192 = arith.addf %183, %191 : vector<16x256xf32>
    %c239_i32_123 = arith.constant 239 : i32
    %193 = tpu.dynamic_rotate %124 by %c239_i32_123 dim 1 : vector<20x256xf32>, i32 -> vector<20x256xf32>
    %c8_124 = arith.constant 8 : index
    %c0_125 = arith.constant 0 : index
    %194 = vector.load %arg8[%c8_124, %c0_125] : memref<9x256xf32, #tpu.memory_space<vmem>>, vector<1x256xf32>
    %195 = vector.broadcast %194 : vector<1x256xf32> to vector<20x256xf32>
    %196 = arith.mulf %193, %195 : vector<20x256xf32>
    %c8_126 = arith.constant 8 : index
    %c0_127 = arith.constant 0 : index
    %c0_128 = arith.constant 0 : index
    %197 = vector.load %arg6[%c8_126, %c0_127, %c0_128] : memref<9x16x20xbf16, #tpu.memory_space<vmem>>, vector<1x16x20xbf16>
    %198 = vector.shape_cast %197 : vector<1x16x20xbf16> to vector<16x20xbf16>
    %199 = arith.truncf %196 : vector<20x256xf32> to vector<20x256xbf16>
    %cst_129 = arith.constant dense<0.000000e+00> : vector<16x256xf32>
    %200 = tpu.matmul %198, %199, %cst_129 {dimension_numbers = #tpu.dot_dimension_numbers<[1], [0], [0], [1], [0, 0, 1, 1], [], []>} : vector<16x20xbf16>, vector<20x256xbf16>, vector<16x256xf32> -> vector<16x256xf32>
    %201 = arith.addf %192, %200 : vector<16x256xf32>
    %202 = vector.broadcast %125 : vector<16x1xf32> to vector<16x256xf32>
    %203 = arith.addf %201, %202 : vector<16x256xf32>
    %c0_130 = arith.constant 0 : index
    %c4_131 = arith.constant 4 : index
    %204 = vector.load %arg7[%c0_130, %c4_131] : memref<16x6xf32, #tpu.memory_space<vmem>>, vector<16x1xf32>
    %c0_132 = arith.constant 0 : index
    %c5_133 = arith.constant 5 : index
    %205 = vector.load %arg7[%c0_132, %c5_133] : memref<16x6xf32, #tpu.memory_space<vmem>>, vector<16x1xf32>
    %206 = vector.shape_cast %203 : vector<16x256xf32> to vector<8x2x256xf32>
    %cst_134 = arith.constant dense<0.000000e+00> : vector<8x2xf32>
    %207 = vector.multi_reduction <add>, %206, %cst_134 [2] : vector<8x2x256xf32> to vector<8x2xf32>
    %208 = vector.shape_cast %207 : vector<8x2xf32> to vector<8x2x1xf32>
    %cst_135 = arith.constant dense<0.000000e+00> : vector<8x1xf32>
    %209 = vector.multi_reduction <add>, %208, %cst_135 [1] : vector<8x2x1xf32> to vector<8x1xf32>
    %210 = vector.shape_cast %209 : vector<8x1xf32> to vector<8x1x1xf32>
    %cst_136 = arith.constant 0.001953125 : f32
    %211 = vector.broadcast %cst_136 : f32 to vector<8x1x1xf32>
    %212 = arith.mulf %210, %211 : vector<8x1x1xf32>
    %213 = vector.broadcast %212 : vector<8x1x1xf32> to vector<8x2x256xf32>
    %214 = arith.subf %206, %213 : vector<8x2x256xf32>
    %215 = arith.mulf %214, %214 : vector<8x2x256xf32>
    %cst_137 = arith.constant dense<0.000000e+00> : vector<8x2xf32>
    %216 = vector.multi_reduction <add>, %215, %cst_137 [2] : vector<8x2x256xf32> to vector<8x2xf32>
    %217 = vector.shape_cast %216 : vector<8x2xf32> to vector<8x2x1xf32>
    %cst_138 = arith.constant dense<0.000000e+00> : vector<8x1xf32>
    %218 = vector.multi_reduction <add>, %217, %cst_138 [1] : vector<8x2x1xf32> to vector<8x1xf32>
    %219 = vector.shape_cast %218 : vector<8x1xf32> to vector<8x1x1xf32>
    %cst_139 = arith.constant 0.001953125 : f32
    %220 = vector.broadcast %cst_139 : f32 to vector<8x1x1xf32>
    %221 = arith.mulf %219, %220 : vector<8x1x1xf32>
    %cst_140 = arith.constant 9.99999974E-6 : f32
    %222 = vector.broadcast %cst_140 : f32 to vector<8x1x1xf32>
    %223 = arith.addf %221, %222 : vector<8x1x1xf32>
    %224 = math.rsqrt %223 : vector<8x1x1xf32>
    %225 = vector.broadcast %224 : vector<8x1x1xf32> to vector<8x2x256xf32>
    %226 = arith.mulf %214, %225 : vector<8x2x256xf32>
    %227 = vector.shape_cast %226 : vector<8x2x256xf32> to vector<16x256xf32>
    %228 = vector.broadcast %204 : vector<16x1xf32> to vector<16x256xf32>
    %229 = arith.mulf %227, %228 : vector<16x256xf32>
    %230 = vector.broadcast %205 : vector<16x1xf32> to vector<16x256xf32>
    %231 = arith.addf %229, %230 : vector<16x256xf32>
    %232 = arith.negf %231 : vector<16x256xf32>
    %233 = math.exp %232 : vector<16x256xf32>
    %cst_141 = arith.constant 1.000000e+00 : f32
    %234 = vector.broadcast %cst_141 : f32 to vector<16x256xf32>
    %235 = arith.addf %234, %233 : vector<16x256xf32>
    %236 = arith.divf %234, %235 : vector<16x256xf32>
    %237 = arith.mulf %231, %236 : vector<16x256xf32>
    %c0_142 = arith.constant 0 : index
    %c0_143 = arith.constant 0 : index
    %c0_144 = arith.constant 0 : index
    %238 = vector.load %arg9[%c0_142, %c0_143, %c0_144] : memref<1x16x256xf32, #tpu.memory_space<vmem>>, vector<1x16x256xf32>
    %239 = vector.shape_cast %238 : vector<1x16x256xf32> to vector<16x256xf32>
    %240 = vector.shape_cast %237 : vector<16x256xf32> to vector<1x16x256xf32>
    tpu.vector_store %arg9[%c0_142, %c0_143, %c0_144], %240 {strides = array<i32>} : memref<1x16x256xf32, #tpu.memory_space<vmem>>, vector<1x16x256xf32>,
    return
  }
  func.func @transform_0(%arg0: i32) -> (i32, i32, i32) {
    %c0_i32 = arith.constant 0 : i32
    %c0_i32_0 = arith.constant 0 : i32
    %c0_i32_1 = arith.constant 0 : i32
    return %arg0, %c0_i32, %c0_i32_0 : i32, i32, i32
  }
  func.func @transform_1(%arg0: i32) -> (i32, i32, i32) {
    %c0_i32 = arith.constant 0 : i32
    %c0_i32_0 = arith.constant 0 : i32
    %c0_i32_1 = arith.constant 0 : i32
    return %arg0, %c0_i32, %c0_i32_0 : i32, i32, i32
  }
  func.func @transform_2(%arg0: i32) -> (i32, i32, i32) {
    %c0_i32 = arith.constant 0 : i32
    %c0_i32_0 = arith.constant 0 : i32
    %c0_i32_1 = arith.constant 0 : i32
    return %arg0, %c0_i32, %c0_i32_0 : i32, i32, i32
  }
  func.func @transform_3(%arg0: i32) -> (i32, i32) {
    %c0_i32 = arith.constant 0 : i32
    %c0_i32_0 = arith.constant 0 : i32
    %c0_i32_1 = arith.constant 0 : i32
    return %c0_i32, %c0_i32_0 : i32, i32
  }
  func.func @transform_4(%arg0: i32) -> (i32, i32, i32) {
    %c0_i32 = arith.constant 0 : i32
    %c0_i32_0 = arith.constant 0 : i32
    %c0_i32_1 = arith.constant 0 : i32
    %c0_i32_2 = arith.constant 0 : i32
    return %c0_i32, %c0_i32_0, %c0_i32_1 : i32, i32, i32
  }
  func.func @transform_5(%arg0: i32) -> (i32, i32, i32) {
    %c0_i32 = arith.constant 0 : i32
    %c0_i32_0 = arith.constant 0 : i32
    %c0_i32_1 = arith.constant 0 : i32
    %c0_i32_2 = arith.constant 0 : i32
    return %c0_i32, %c0_i32_0, %c0_i32_1 : i32, i32, i32
  }
  func.func @transform_6(%arg0: i32) -> (i32, i32) {
    %c0_i32 = arith.constant 0 : i32
    %c0_i32_0 = arith.constant 0 : i32
    %c0_i32_1 = arith.constant 0 : i32
    return %c0_i32, %c0_i32_0 : i32, i32
  }
  func.func @transform_7(%arg0: i32) -> (i32, i32) {
    %c0_i32 = arith.constant 0 : i32
    %c0_i32_0 = arith.constant 0 : i32
    %c0_i32_1 = arith.constant 0 : i32
    return %c0_i32, %c0_i32_0 : i32, i32
  }
  func.func @transform_8(%arg0: i32) -> (i32, i32, i32) {
    %c0_i32 = arith.constant 0 : i32
    %c0_i32_0 = arith.constant 0 : i32
    %c0_i32_1 = arith.constant 0 : i32
    return %arg0, %c0_i32, %c0_i32_0 : i32, i32, i32
  }
}

</mosaic_0001>

<llo_original>
// kernel: up_forward.1
$region0: #{up_forward.1}
  #allocation0 [shape = 'u32[]', space=smem, size = 0x4, offset = 0x4, fixed_abs, tag = 'smem constant byte address 0x4 - core index']
  #allocation1 [shape = 'u32[144,128]{1,0:T(1,128)}', space=vmem, size = 0x12000, scoped, tag = 'internal scratch']
  %s0 = inlined_call_operand.vmem [shape: bf16[2,8,64], index: 0, kind: input, shape index: {}]
  %s1 = inlined_call_operand.vmem [shape: bf16[2,8,256], index: 1, kind: input, shape index: {}]
  %s2 = inlined_call_operand.vmem [shape: bf16[2,4,256], index: 2, kind: input, shape index: {}]
  %s3 = inlined_call_operand.vmem [shape: bf16[64,256], index: 3, kind: input, shape index: {}]
  %s4 = inlined_call_operand.vmem [shape: bf16[9,16,16], index: 4, kind: input, shape index: {}]
  %s5 = inlined_call_operand.vmem [shape: bf16[9,16,20], index: 5, kind: input, shape index: {}]
  %s6 = inlined_call_operand.vmem [shape: f32[16,6], index: 6, kind: input, shape index: {}]
  %s7 = inlined_call_operand.vmem [shape: f32[9,256], index: 7, kind: input, shape index: {}]
  %s8 = inlined_call_operand.vmem [shape: f32[2,16,256], index: 8, kind: output, shape index: {}]
  %s9 = sld [smem:[#allocation0]]
  $region65: #{up_forward.1} parent=0
    _
  %s11 = ssub.s32 1, %s9
  %s12 = scalar_select 0, %s11, %s9
  loop: start=0, step=1, limit=4
  $region2: #{up_forward.1} parent=0 // loop_pre_header
    _
  $region3: #{up_forward.1} parent=0 // loop_header
    %s14 = sphi 0, %s18
    %p15 = scmp.ge.s32.totalorder %s14, 4
    %s24 = sphi 0, %s26
    %s27 = sphi 0, %s24
    %s28 = sphi 0, %s27
    %s44 = sphi 0, %s28
    %s50 = sphi 0, %s52
    %s53 = sphi 0, %s50
    %s54 = sphi 0, %s53
    %s70 = sphi 0, %s54
    %s76 = sphi 0, %s78
    %s79 = sphi 0, %s76
    %s80 = sphi 0, %s79
    %s96 = sphi 0, %s80
    %s100 = sphi 0, %s100
    %s102 = sphi 0, %s100
    %s103 = sphi 0, %s102
    %s117 = sphi 0, %s103
    %s121 = sphi 0, %s121
    %s123 = sphi 0, %s121
    %s124 = sphi 0, %s123
    %s138 = sphi 0, %s124
    %s142 = sphi 0, %s142
    %s144 = sphi 0, %s142
    %s145 = sphi 0, %s144
    %s159 = sphi 0, %s145
    %s163 = sphi 0, %s163
    %s165 = sphi 0, %s163
    %s166 = sphi 0, %s165
    %s180 = sphi 0, %s166
    %s184 = sphi 0, %s184
    %s186 = sphi 0, %s184
    %s187 = sphi 0, %s186
    %s201 = sphi 0, %s187
    %s207 = sphi 0, %s209
    %s210 = sphi 0, %s207
    %s211 = sphi 0, %s210
    %s227 = sphi 0, %s211
  $region4: #{up_forward.1} parent=0 // loop_header_branch
    %17 = sbr.rel (%p15) target = $region8
  $region5: #{up_forward.1} parent=0 // loop_body
    %s19 = ssub.s32 %s14, 1
    %s20 = ssub.s32 %s14, 2
    %s21 = sadd.s32 %s14, 1
    %s22 = ssub.s32 %s14, %s21
    %p23 = scmp.eq.s32.totalorder %s22, 0
    %s25 = sadd.s32 %s24, 1
    %s26 = scalar_select %p23, %s24, %s25
    %p29 = pneg %p23
    %p30 = scmp.eq.s32.totalorder %s14, 1
    %p31 = por %p29, %p30
    %p32 = scmp.ne.s32.totalorder %s24, %s27
    %p33 = scmp.eq.s32.totalorder %s14, 0
    %p34 = por %p32, %p33
    %p35 = scmp.ne.s32.totalorder %s24, %s27
    %p36 = scmp.eq.s32.totalorder %s19, 1
    %p37 = por %p35, %p36
    %p38 = scmp.ne.s32.totalorder %s27, %s28
    %p39 = scmp.eq.s32.totalorder %s19, 0
    %p40 = por %p38, %p39
    %p41 = scmp.ne.s32.totalorder %s27, %s28
    %p42 = scmp.eq.s32.totalorder %s20, 1
    %p43 = por %p41, %p42
    %p45 = scmp.ne.s32.totalorder %s28, %s44
    %p46 = scmp.eq.s32.totalorder %s20, 0
    %p47 = por %p45, %p46
    %s48 = ssub.s32 %s14, %s21
    %p49 = scmp.eq.s32.totalorder %s48, 0
    %s51 = sadd.s32 %s50, 1
    %s52 = scalar_select %p49, %s50, %s51
    %p55 = pneg %p49
    %p56 = scmp.eq.s32.totalorder %s14, 1
    %p57 = por %p55, %p56
    %p58 = scmp.ne.s32.totalorder %s50, %s53
    %p59 = scmp.eq.s32.totalorder %s14, 0
    %p60 = por %p58, %p59
    %p61 = scmp.ne.s32.totalorder %s50, %s53
    %p62 = scmp.eq.s32.totalorder %s19, 1
    %p63 = por %p61, %p62
    %p64 = scmp.ne.s32.totalorder %s53, %s54
    %p65 = scmp.eq.s32.totalorder %s19, 0
    %p66 = por %p64, %p65
    %p67 = scmp.ne.s32.totalorder %s53, %s54
    %p68 = scmp.eq.s32.totalorder %s20, 1
    %p69 = por %p67, %p68
    %p71 = scmp.ne.s32.totalorder %s54, %s70
    %p72 = scmp.eq.s32.totalorder %s20, 0
    %p73 = por %p71, %p72
    %s74 = ssub.s32 %s14, %s21
    %p75 = scmp.eq.s32.totalorder %s74, 0
    %s77 = sadd.s32 %s76, 1
    %s78 = scalar_select %p75, %s76, %s77
    %p81 = pneg %p75
    %p82 = scmp.eq.s32.totalorder %s14, 1
    %p83 = por %p81, %p82
    %p84 = scmp.ne.s32.totalorder %s76, %s79
    %p85 = scmp.eq.s32.totalorder %s14, 0
    %p86 = por %p84, %p85
    %p87 = scmp.ne.s32.totalorder %s76, %s79
    %p88 = scmp.eq.s32.totalorder %s19, 1
    %p89 = por %p87, %p88
    %p90 = scmp.ne.s32.totalorder %s79, %s80
    %p91 = scmp.eq.s32.totalorder %s19, 0
    %p92 = por %p90, %p91
    %p93 = scmp.ne.s32.totalorder %s79, %s80
    %p94 = scmp.eq.s32.totalorder %s20, 1
    %p95 = por %p93, %p94
    %p97 = scmp.ne.s32.totalorder %s80, %s96
    %p98 = scmp.eq.s32.totalorder %s20, 0
    %p99 = por %p97, %p98
    %s101 = sadd.s32 %s100, 1
    %p104 = scmp.eq.s32.totalorder %s14, 1
    %p105 = scmp.ne.s32.totalorder %s100, %s102
    %p106 = scmp.eq.s32.totalorder %s14, 0
    %p107 = por %p105, %p106
    %p108 = scmp.ne.s32.totalorder %s100, %s102
    %p109 = scmp.eq.s32.totalorder %s19, 1
    %p110 = por %p108, %p109
    %p111 = scmp.ne.s32.totalorder %s102, %s103
    %p112 = scmp.eq.s32.totalorder %s19, 0
    %p113 = por %p111, %p112
    %p114 = scmp.ne.s32.totalorder %s102, %s103
    %p115 = scmp.eq.s32.totalorder %s20, 1
    %p116 = por %p114, %p115
    %p118 = scmp.ne.s32.totalorder %s103, %s117
    %p119 = scmp.eq.s32.totalorder %s20, 0
    %p120 = por %p118, %p119
    %s122 = sadd.s32 %s121, 1
    %p125 = scmp.eq.s32.totalorder %s14, 1
    %p126 = scmp.ne.s32.totalorder %s121, %s123
    %p127 = scmp.eq.s32.totalorder %s14, 0
    %p128 = por %p126, %p127
    %p129 = scmp.ne.s32.totalorder %s121, %s123
    %p130 = scmp.eq.s32.totalorder %s19, 1
    %p131 = por %p129, %p130
    %p132 = scmp.ne.s32.totalorder %s123, %s124
    %p133 = scmp.eq.s32.totalorder %s19, 0
    %p134 = por %p132, %p133
    %p135 = scmp.ne.s32.totalorder %s123, %s124
    %p136 = scmp.eq.s32.totalorder %s20, 1
    %p137 = por %p135, %p136
    %p139 = scmp.ne.s32.totalorder %s124, %s138
    %p140 = scmp.eq.s32.totalorder %s20, 0
    %p141 = por %p139, %p140
    %s143 = sadd.s32 %s142, 1
    %p146 = scmp.eq.s32.totalorder %s14, 1
    %p147 = scmp.ne.s32.totalorder %s142, %s144
    %p148 = scmp.eq.s32.totalorder %s14, 0
    %p149 = por %p147, %p148
    %p150 = scmp.ne.s32.totalorder %s142, %s144
    %p151 = scmp.eq.s32.totalorder %s19, 1
    %p152 = por %p150, %p151
    %p153 = scmp.ne.s32.totalorder %s144, %s145
    %p154 = scmp.eq.s32.totalorder %s19, 0
    %p155 = por %p153, %p154
    %p156 = scmp.ne.s32.totalorder %s144, %s145
    %p157 = scmp.eq.s32.totalorder %s20, 1
    %p158 = por %p156, %p157
    %p160 = scmp.ne.s32.totalorder %s145, %s159
    %p161 = scmp.eq.s32.totalorder %s20, 0
    %p162 = por %p160, %p161
    %s164 = sadd.s32 %s163, 1
    %p167 = scmp.eq.s32.totalorder %s14, 1
    %p168 = scmp.ne.s32.totalorder %s163, %s165
    %p169 = scmp.eq.s32.totalorder %s14, 0
    %p170 = por %p168, %p169
    %p171 = scmp.ne.s32.totalorder %s163, %s165
    %p172 = scmp.eq.s32.totalorder %s19, 1
    %p173 = por %p171, %p172
    %p174 = scmp.ne.s32.totalorder %s165, %s166
    %p175 = scmp.eq.s32.totalorder %s19, 0
    %p176 = por %p174, %p175
    %p177 = scmp.ne.s32.totalorder %s165, %s166
    %p178 = scmp.eq.s32.totalorder %s20, 1
    %p179 = por %p177, %p178
    %p181 = scmp.ne.s32.totalorder %s166, %s180
    %p182 = scmp.eq.s32.totalorder %s20, 0
    %p183 = por %p181, %p182
    %s185 = sadd.s32 %s184, 1
    %p188 = scmp.eq.s32.totalorder %s14, 1
    %p189 = scmp.ne.s32.totalorder %s184, %s186
    %p190 = scmp.eq.s32.totalorder %s14, 0
    %p191 = por %p189, %p190
    %p192 = scmp.ne.s32.totalorder %s184, %s186
    %p193 = scmp.eq.s32.totalorder %s19, 1
    %p194 = por %p192, %p193
    %p195 = scmp.ne.s32.totalorder %s186, %s187
    %p196 = scmp.eq.s32.totalorder %s19, 0
    %p197 = por %p195, %p196
    %p198 = scmp.ne.s32.totalorder %s186, %s187
    %p199 = scmp.eq.s32.totalorder %s20, 1
    %p200 = por %p198, %p199
    %p202 = scmp.ne.s32.totalorder %s187, %s201
    %p203 = scmp.eq.s32.totalorder %s20, 0
    %p204 = por %p202, %p203
    %s205 = ssub.s32 %s14, %s21
    %p206 = scmp.eq.s32.totalorder %s205, 0
    %s208 = sadd.s32 %s207, 1
    %s209 = scalar_select %p206, %s207, %s208
    %p212 = pneg %p206
    %p213 = scmp.eq.s32.totalorder %s14, 1
    %p214 = por %p212, %p213
    %p215 = scmp.ne.s32.totalorder %s207, %s210
    %p216 = scmp.eq.s32.totalorder %s14, 0
    %p217 = por %p215, %p216
    %p218 = scmp.ne.s32.totalorder %s207, %s210
    %p219 = scmp.eq.s32.totalorder %s19, 1
    %p220 = por %p218, %p219
    %p221 = scmp.ne.s32.totalorder %s210, %s211
    %p222 = scmp.eq.s32.totalorder %s19, 0
    %p223 = por %p221, %p222
    %p224 = scmp.ne.s32.totalorder %s210, %s211
    %p225 = scmp.eq.s32.totalorder %s20, 1
    %p226 = por %p224, %p225
    %p228 = scmp.ne.s32.totalorder %s211, %s227
    %p229 = scmp.eq.s32.totalorder %s20, 0
    %p230 = por %p228, %p229
    %p231 = scmp.le.s32.totalorder 1, %s14
    %p232 = scmp.lt.s32.totalorder %s14, 3
    %p233 = pnand %p231, %p232
    %p234 = pneg %p233
    // Predicated region
    $region9: #{up_forward.1} parent=5 // pred_check
      _
    $region10: #{up_forward.1} parent=5 // pred_check_branch
      %236 = sbr.rel (%p233) target = $region12
    $region11: #{up_forward.1} parent=5 // pred_region
      %s237 = ssub.s32 %s14, 1
      // Predicated region
      $region13: #{up_forward.1} parent=11 // pred_check
        %p238 = pneg %p113
      $region14: #{up_forward.1} parent=11 // pred_check_branch
        %240 = sbr.rel (%p238) target = $region16
      $region15: #{up_forward.1} parent=11 // pred_region
        _
      $region16: #{up_forward.1} parent=11 // pred_fallthru
        _
      // Predicated region
      $region17: #{up_forward.1} parent=11 // pred_check
        %p241 = pneg %p134
      $region18: #{up_forward.1} parent=11 // pred_check_branch
        %243 = sbr.rel (%p241) target = $region20
      $region19: #{up_forward.1} parent=11 // pred_region
        _
      $region20: #{up_forward.1} parent=11 // pred_fallthru
        _
      // Predicated region
      $region21: #{up_forward.1} parent=11 // pred_check
        %p244 = pneg %p155
      $region22: #{up_forward.1} parent=11 // pred_check_branch
        %246 = sbr.rel (%p244) target = $region24
      $region23: #{up_forward.1} parent=11 // pred_region
        _
      $region24: #{up_forward.1} parent=11 // pred_fallthru
        _
      // Predicated region
      $region25: #{up_forward.1} parent=11 // pred_check
        %p247 = pneg %p176
      $region26: #{up_forward.1} parent=11 // pred_check_branch
        %249 = sbr.rel (%p247) target = $region28
      $region27: #{up_forward.1} parent=11 // pred_region
        _
      $region28: #{up_forward.1} parent=11 // pred_fallthru
        _
      // Predicated region
      $region29: #{up_forward.1} parent=11 // pred_check
        %p250 = pneg %p197
      $region30: #{up_forward.1} parent=11 // pred_check_branch
        %252 = sbr.rel (%p250) target = $region32
      $region31: #{up_forward.1} parent=11 // pred_region
        _
      $region32: #{up_forward.1} parent=11 // pred_fallthru
        _
    $region12: #{up_forward.1} parent=5 // pred_fallthru
      _
    %p253 = scmp.lt.s32.totalorder %s14, 2
    // Predicated region
    $region33: #{up_forward.1} parent=5 // pred_check
      %p254 = pneg %p253
    $region34: #{up_forward.1} parent=5 // pred_check_branch
      %256 = sbr.rel (%p254) target = $region36
    $region35: #{up_forward.1} parent=5 // pred_region
      // Predicated region
      $region37: #{up_forward.1} parent=35 // pred_check
        %p257 = pneg %p34
      $region38: #{up_forward.1} parent=35 // pred_check_branch
        %259 = sbr.rel (%p257) target = $region40
      $region39: #{up_forward.1} parent=35 // pred_region
        %p260 = scmp.lt.s32.totalorder %s14, 1
        %s261 = scalar_select %p260, %s14, 1
        %s262 = smul.addr %s261, 4
        %s263 = scalar_lea.vmem %s0, %s262
      $region40: #{up_forward.1} parent=35 // pred_fallthru
        _
      // Predicated region
      $region41: #{up_forward.1} parent=35 // pred_check
        %p264 = pneg %p60
      $region42: #{up_forward.1} parent=35 // pred_check_branch
        %266 = sbr.rel (%p264) target = $region44
      $region43: #{up_forward.1} parent=35 // pred_region
        %p267 = scmp.lt.s32.totalorder %s14, 1
        %s268 = scalar_select %p267, %s14, 1
        %s269 = smul.addr %s268, 2
        %s270 = smul.addr %s269, 4
        %s271 = scalar_lea.vmem %s1, %s270
      $region44: #{up_forward.1} parent=35 // pred_fallthru
        _
      // Predicated region
      $region45: #{up_forward.1} parent=35 // pred_check
        %p272 = pneg %p86
      $region46: #{up_forward.1} parent=35 // pred_check_branch
        %274 = sbr.rel (%p272) target = $region48
      $region47: #{up_forward.1} parent=35 // pred_region
        %p275 = scmp.lt.s32.totalorder %s14, 1
        %s276 = scalar_select %p275, %s14, 1
        %s277 = smul.addr %s276, 2
        %s278 = smul.addr %s277, 2
        %s279 = scalar_lea.vmem %s2, %s278
      $region48: #{up_forward.1} parent=35 // pred_fallthru
        _
    $region36: #{up_forward.1} parent=5 // pred_fallthru
      _
    %p280 = scmp.le.s32.totalorder 1, %s14
    %p281 = scmp.lt.s32.totalorder %s14, 3
    %p282 = pnand %p280, %p281
    %p283 = pneg %p282
    // Predicated region
    $region49: #{up_forward.1} parent=5 // pred_check
      _
    $region50: #{up_forward.1} parent=5 // pred_check_branch
      %285 = sbr.rel (%p282) target = $region52
    $region51: #{up_forward.1} parent=5 // pred_region
      %s286 = ssub.s32 %s14, 1
      %p287 = scmp.lt.s32.totalorder %s19, 1
      %s288 = scalar_select %p287, %s19, 1
      %s289 = smul.addr %s288, 4
      %s290 = scalar_lea.vmem %s0, %s289
      %p291 = pneg %p40
      %p292 = pneg %p37
      %p293 = scmp.lt.s32.totalorder %s19, 1
      %s294 = scalar_select %p293, %s19, 1
      %s295 = smul.addr %s294, 2
      %s296 = smul.addr %s295, 4
      %s297 = scalar_lea.vmem %s1, %s296
      %p298 = pneg %p66
      %p299 = pneg %p63
      %p300 = scmp.lt.s32.totalorder %s19, 1
      %s301 = scalar_select %p300, %s19, 1
      %s302 = smul.addr %s301, 2
      %s303 = smul.addr %s302, 2
      %s304 = scalar_lea.vmem %s2, %s303
      %p305 = pneg %p92
      %p306 = pneg %p89
      %p307 = pneg %p113
      %p308 = pneg %p110
      %p309 = pneg %p134
      %p310 = pneg %p131
      %p311 = pneg %p155
      %p312 = pneg %p152
      %p313 = pneg %p176
      %p314 = pneg %p173
      %p315 = pneg %p197
      %p316 = pneg %p194
      %p317 = pneg %p223
      %p318 = pneg %p220
      %p319 = scmp.lt.s32.totalorder %s19, 1
      %s320 = scalar_select %p319, %s19, 1
      %s321 = smul.addr %s320, 4
      %s322 = smul.addr %s321, 8
      %s323 = scalar_lea.vmem %s8, %s322
      %p324 = scmp.lt.s32.totalorder %s19, 1
      %s325 = scalar_select %p324, %s19, 1
      %s326 = smul.addr %s325, 4
      %s327 = scalar_lea.vmem %s0, %s326
      %p328 = scmp.lt.s32.totalorder %s19, 1
      %s329 = scalar_select %p328, %s19, 1
      %s330 = smul.addr %s329, 2
      %s331 = smul.addr %s330, 4
      %s332 = scalar_lea.vmem %s1, %s331
      %p333 = scmp.lt.s32.totalorder %s19, 1
      %s334 = scalar_select %p333, %s19, 1
      %s335 = smul.addr %s334, 2
      %s336 = smul.addr %s335, 2
      %s337 = scalar_lea.vmem %s2, %s336
      %p338 = scmp.lt.s32.totalorder %s19, 1
      %s339 = scalar_select %p338, %s19, 1
      %s340 = smul.addr %s339, 4
      %s341 = smul.addr %s340, 8
      %s342 = scalar_lea.vmem %s8, %s341
      %v344 = vld [vmem:[%s327] sm:$0xf]
      %v345 = vld [vmem:[%s3] sm:$0xff]
      %v346 = vld [vmem:[%s3 + $0x8] sm:$0xff]
      %v347 = vld [vmem:[%s3 + $0x10] sm:$0xff]
      %v348 = vld [vmem:[%s3 + $0x18] sm:$0xff]
      %v349 = vld [vmem:[%s3 + $0x20] sm:$0xff]
      %v350 = vld [vmem:[%s3 + $0x28] sm:$0xff]
      %v351 = vld [vmem:[%s3 + $0x30] sm:$0xff]
      %v352 = vld [vmem:[%s3 + $0x38] sm:$0xff]
      %v361 = vunpack.c.l.b16 %v345
      %v362 = vunpack.c.h.b16 %v345
      %v363 = vunpack.c.l.b16 %v346
      %v364 = vunpack.c.h.b16 %v346
      %v365 = vunpack.c.l.b16 %v347
      %v366 = vunpack.c.h.b16 %v347
      %v367 = vunpack.c.l.b16 %v348
      %v368 = vunpack.c.h.b16 %v348
      %v369 = vunpack.c.l.b16 %v349
      %v370 = vunpack.c.h.b16 %v349
      %v371 = vunpack.c.l.b16 %v350
      %v372 = vunpack.c.h.b16 %v350
      %v373 = vunpack.c.l.b16 %v351
      %v374 = vunpack.c.h.b16 %v351
      %v375 = vunpack.c.l.b16 %v352
      %v376 = vunpack.c.h.b16 %v352
      %v377 = vpack.c.b16 %v363, %v361
      %v378 = vpack.c.b16 %v364, %v362
      %v379 = vpack.c.b16 %v367, %v365
      %v380 = vpack.c.b16 %v368, %v366
      %v381 = vpack.c.b16 %v371, %v369
      %v382 = vpack.c.b16 %v372, %v370
      %v383 = vpack.c.b16 %v375, %v373
      %v384 = vpack.c.b16 %v376, %v374
      %vm393 = vcmask 523264
      %v395 = vsel %vm393, %v344, 0
      %397 = vmatprep.subr.bf16.mxu0 0
      %398 = vmatpush1.bf16.msra.mxu0 0
      %399 = vmatprep.subr.bf16.mxu0 0
      %400 = vmatpush1.bf16.msra.mxu0 0
      %401 = vmatprep.subr.bf16.mxu0 0
      %402 = vmatpush1.bf16.msra.mxu0 0
      %403 = vmatprep.subr.bf16.mxu0 0
      %404 = vmatpush1.bf16.msra.mxu0 0
      %405 = vmatprep.subr.bf16.mxu0 %v384
      %406 = vmatpush1.bf16.msra.mxu0 %v383
      %407 = vmatprep.subr.bf16.mxu0 %v382
      %408 = vmatpush1.bf16.msra.mxu0 %v381
      %409 = vmatprep.subr.bf16.mxu0 %v380
      %410 = vmatpush1.bf16.msra.mxu0 %v379
      %411 = vmatprep.subr.bf16.mxu0 %v378
      %412 = vmatpush1.bf16.msra.mxu0 %v377
      %413 = vmatprep.subr.bf16.mxu0 0
      %414 = vmatpush2.bf16.msra.mxu0 0
      %415 = vmatprep.subr.bf16.mxu0 0
      %416 = vmatpush2.bf16.msra.mxu0 0
      %417 = vmatprep.subr.bf16.mxu0 0
      %418 = vmatpush2.bf16.msra.mxu0 0
      %419 = vmatprep.subr.bf16.mxu0 0
      %420 = vmatpush2.bf16.msra.mxu0 0
      %421 = vmatprep.subr.bf16.mxu0 0
      %422 = vmatpush2.bf16.msra.mxu0 0
      %423 = vmatprep.subr.bf16.mxu0 0
      %424 = vmatpush2.bf16.msra.mxu0 0
      %425 = vmatprep.subr.bf16.mxu0 0
      %426 = vmatpush2.bf16.msra.mxu0 0
      %427 = vmatprep.subr.bf16.mxu0 0
      %428 = vmatpush2.bf16.msra.mxu0 0
      %429 = vmatprep.mubr.bf16.mxu0 0
      %430 = vmatmul.mubr.bf16.gmra.mxu0 %v395
      %v431 = vpop.f32.mrf.mxu0
      %v432 = vadd.f32 0.0, %v431
      %v433 = vpop.f32.mrf.mxu0
      %v434 = vadd.f32 0.0, %v433
      %v435 = vpop.f32.mrf.mxu0
      %v436 = vpop.f32.mrf.mxu0
      %437 = vdwg.mxu0
      %v438 = vld [vmem:[%s332] sm:$0xff]
      %v439 = vunpack.c.l.bf16 %v438
      %v440 = vunpack.c.h.bf16 %v438
      %v441 = vld [vmem:[%s6] sm:$0xff]
      %v442 = vld [vmem:[%s6 + $0x8] sm:$0xff]
      %443 = vrot.lane.b32.xlu0 %v439, 17
      %v444 = vpop.permute.xlu0 %443
      %445 = vrot.lane.b32.xlu0 %v432, 17
      %v446 = vpop.permute.xlu0 %445
      %447 = vrot.lane.b32.xlu0 %v440, 17
      %v448 = vpop.permute.xlu0 %447
      %449 = vrot.lane.b32.xlu0 %v434, 17
      %v450 = vpop.permute.xlu0 %449
      %v451 = vlaneseq
      %v452 = vand.u32 %v451, 127
      %vm453 = vcmp.lt.s32.totalorder %v452, 17
      %v454 = vsel %vm453, %v444, %v448
      %v455 = vsel %vm453, %v446, %v450
      %v456 = vsel %vm453, %v448, %v444
      %v457 = vsel %vm453, %v450, %v446
      %v458 = vld [vmem:[%s7] ss:$8 sm:$0x3]
      %v460 = vlaneseq
      %v461 = vshrl.u32 %v460, 7
      %v462 = vsub.s32 0, %v461
      %v463 = vrot.slane %v458, %v462
      %v464 = vlaneseq
      %v465 = vshrl.u32 %v464, 7
      %v466 = vsub.s32 1, %v465
      %v467 = vrot.slane %v458, %v466
      %v470 = vmul.f32 %v456, %v463
      %v471 = vmul.f32 %v454, %v467
      %v472 = vmul.f32 %v457, %v463
      %v473 = vmul.f32 %v455, %v467
      %v474 = vld [vmem:[%s4] sm:$0xf]
      %v475 = vld [vmem:[%s4 + $0x4] sm:$0xf]
      %v476 = vpack.c.bf16 %v472, %v470
      %v477 = vpack.c.bf16 %v473, %v471
      %478 = vrot.lane.b32.xlu0 %v439, 16
      %v479 = vpop.permute.xlu0 %478
      %480 = vrot.lane.b32.xlu0 %v432, 16
      %v481 = vpop.permute.xlu0 %480
      %482 = vrot.lane.b32.xlu0 %v440, 16
      %v483 = vpop.permute.xlu0 %482
      %484 = vrot.lane.b32.xlu0 %v434, 16
      %v485 = vpop.permute.xlu0 %484
      %vm486 = vcmp.lt.s32.totalorder %v452, 16
      %v487 = vsel %vm486, %v479, %v483
      %v488 = vsel %vm486, %v481, %v485
      %v489 = vsel %vm486, %v483, %v479
      %v490 = vsel %vm486, %v485, %v481
      %s491 = scalar_lea.vmem %s7, 1
      %v492 = vld [vmem:[%s491] ss:$8 sm:$0x3]
      %v494 = vlaneseq
      %v495 = vshrl.u32 %v494, 7
      %v496 = vsub.s32 0, %v495
      %v497 = vrot.slane %v492, %v496
      %v498 = vlaneseq
      %v499 = vshrl.u32 %v498, 7
      %v500 = vsub.s32 1, %v499
      %v501 = vrot.slane %v492, %v500
      %v504 = vmul.f32 %v489, %v497
      %v505 = vmul.f32 %v487, %v501
      %v506 = vmul.f32 %v490, %v497
      %v507 = vmul.f32 %v488, %v501
      %s508 = scalar_lea.vmem %s4, 8
      %v509 = vld [vmem:[%s508] sm:$0xf]
      %v510 = vld [vmem:[%s508 + $0x4] sm:$0xf]
      %v511 = vpack.c.bf16 %v506, %v504
      %v512 = vpack.c.bf16 %v507, %v505
      %v515 = vunpack.c.l.b16 %v509
      %v516 = vunpack.c.l.b16 %v510
      %v517 = vpack.c.b16 %v516, %v515
      %vm518 = vcmask 130048
      %v520 = vsel %vm518, %v517, 0
      %522 = vmatprep.subr.bf16.mxu0 0
      %523 = vmatpush1.bf16.msra.mxu0 0
      %524 = vmatprep.subr.bf16.mxu0 0
      %525 = vmatpush1.bf16.msra.mxu0 0
      %526 = vmatprep.subr.bf16.mxu0 0
      %527 = vmatpush1.bf16.msra.mxu0 0
      %528 = vmatprep.subr.bf16.mxu0 0
      %529 = vmatpush1.bf16.msra.mxu0 0
      %530 = vmatprep.subr.bf16.mxu0 0
      %531 = vmatpush1.bf16.msra.mxu0 0
      %532 = vmatprep.subr.bf16.mxu0 0
      %533 = vmatpush1.bf16.msra.mxu0 0
      %534 = vmatprep.subr.bf16.mxu0 0
      %535 = vmatpush1.bf16.msra.mxu0 0
      %536 = vmatprep.subr.bf16.mxu0 %v512
      %537 = vmatpush1.bf16.msra.mxu0 %v511
      %538 = vmatprep.subr.bf16.mxu0 0
      %539 = vmatpush2.bf16.msra.mxu0 0
      %540 = vmatprep.subr.bf16.mxu0 0
      %541 = vmatpush2.bf16.msra.mxu0 0
      %542 = vmatprep.subr.bf16.mxu0 0
      %543 = vmatpush2.bf16.msra.mxu0 0
      %544 = vmatprep.subr.bf16.mxu0 0
      %545 = vmatpush2.bf16.msra.mxu0 0
      %546 = vmatprep.subr.bf16.mxu0 0
      %547 = vmatpush2.bf16.msra.mxu0 0
      %548 = vmatprep.subr.bf16.mxu0 0
      %549 = vmatpush2.bf16.msra.mxu0 0
      %550 = vmatprep.subr.bf16.mxu0 0
      %551 = vmatpush2.bf16.msra.mxu0 0
      %552 = vmatprep.subr.bf16.mxu0 0
      %553 = vmatpush2.bf16.msra.mxu0 0
      %554 = vmatprep.mubr.bf16.mxu0 0
      %555 = vmatmul.mubr.bf16.gmra.mxu0 %v520
      %v556 = vpop.f32.mrf.mxu0
      %v557 = vadd.f32 0.0, %v556
      %v558 = vpop.f32.mrf.mxu0
      %v559 = vadd.f32 0.0, %v558
      %v560 = vpop.f32.mrf.mxu0
      %v561 = vadd.f32 0.0, %v560
      %v562 = vpop.f32.mrf.mxu0
      %v563 = vadd.f32 0.0, %v562
      %564 = vdwg.mxu0
      %v567 = vunpack.c.l.b16 %v474
      %v568 = vunpack.c.l.b16 %v475
      %v569 = vpack.c.b16 %v568, %v567
      %v571 = vsel %vm518, %v569, 0
      %573 = vmatprep.subr.bf16.mxu0 0
      %574 = vmatpush1.bf16.msra.mxu0 0
      %575 = vmatprep.subr.bf16.mxu0 0
      %576 = vmatpush1.bf16.msra.mxu0 0
      %577 = vmatprep.subr.bf16.mxu0 0
      %578 = vmatpush1.bf16.msra.mxu0 0
      %579 = vmatprep.subr.bf16.mxu0 0
      %580 = vmatpush1.bf16.msra.mxu0 0
      %581 = vmatprep.subr.bf16.mxu0 0
      %582 = vmatpush1.bf16.msra.mxu0 0
      %583 = vmatprep.subr.bf16.mxu0 0
      %584 = vmatpush1.bf16.msra.mxu0 0
      %585 = vmatprep.subr.bf16.mxu0 0
      %586 = vmatpush1.bf16.msra.mxu0 0
      %587 = vmatprep.subr.bf16.mxu0 %v477
      %588 = vmatpush1.bf16.msra.mxu0 %v476
      %589 = vmatprep.subr.bf16.mxu0 0
      %590 = vmatpush2.bf16.msra.mxu0 0
      %591 = vmatprep.subr.bf16.mxu0 0
      %592 = vmatpush2.bf16.msra.mxu0 0
      %593 = vmatprep.subr.bf16.mxu0 0
      %594 = vmatpush2.bf16.msra.mxu0 0
      %595 = vmatprep.subr.bf16.mxu0 0
      %596 = vmatpush2.bf16.msra.mxu0 0
      %597 = vmatprep.subr.bf16.mxu0 0
      %598 = vmatpush2.bf16.msra.mxu0 0
      %599 = vmatprep.subr.bf16.mxu0 0
      %600 = vmatpush2.bf16.msra.mxu0 0
      %601 = vmatprep.subr.bf16.mxu0 0
      %602 = vmatpush2.bf16.msra.mxu0 0
      %603 = vmatprep.subr.bf16.mxu0 0
      %604 = vmatpush2.bf16.msra.mxu0 0
      %605 = vmatprep.mubr.bf16.mxu0 0
      %606 = vmatmul.mubr.bf16.gmra.mxu0 %v571
      %v607 = vpop.f32.mrf.mxu0
      %v608 = vadd.f32 %v557, %v607
      %v609 = vpop.f32.mrf.mxu0
      %v610 = vadd.f32 %v559, %v609
      %v611 = vpop.f32.mrf.mxu0
      %v612 = vadd.f32 %v561, %v611
      %v613 = vpop.f32.mrf.mxu0
      %v614 = vadd.f32 %v563, %v613
      %615 = vdwg.mxu0
      %616 = vrot.lane.b32.xlu0 %v439, 15
      %v617 = vpop.permute.xlu0 %616
      %618 = vrot.lane.b32.xlu0 %v432, 15
      %v619 = vpop.permute.xlu0 %618
      %620 = vrot.lane.b32.xlu0 %v440, 15
      %v621 = vpop.permute.xlu0 %620
      %622 = vrot.lane.b32.xlu0 %v434, 15
      %v623 = vpop.permute.xlu0 %622
      %vm624 = vcmp.lt.s32.totalorder %v452, 15
      %v625 = vsel %vm624, %v617, %v621
      %v626 = vsel %vm624, %v619, %v623
      %v627 = vsel %vm624, %v621, %v617
      %v628 = vsel %vm624, %v623, %v619
      %s629 = scalar_lea.vmem %s7, 2
      %v630 = vld [vmem:[%s629] ss:$8 sm:$0x3]
      %v632 = vlaneseq
      %v633 = vshrl.u32 %v632, 7
      %v634 = vsub.s32 0, %v633
      %v635 = vrot.slane %v630, %v634
      %v636 = vlaneseq
      %v637 = vshrl.u32 %v636, 7
      %v638 = vsub.s32 1, %v637
      %v639 = vrot.slane %v630, %v638
      %v642 = vmul.f32 %v627, %v635
      %v643 = vmul.f32 %v625, %v639
      %v644 = vmul.f32 %v628, %v635
      %v645 = vmul.f32 %v626, %v639
      %s646 = scalar_lea.vmem %s4, 16
      %v647 = vld [vmem:[%s646] sm:$0xf]
      %v648 = vld [vmem:[%s646 + $0x4] sm:$0xf]
      %v649 = vpack.c.bf16 %v644, %v642
      %v650 = vpack.c.bf16 %v645, %v643
      %v653 = vunpack.c.l.b16 %v647
      %v654 = vunpack.c.l.b16 %v648
      %v655 = vpack.c.b16 %v654, %v653
      %v657 = vsel %vm518, %v655, 0
      %659 = vmatprep.subr.bf16.mxu0 0
      %660 = vmatpush1.bf16.msra.mxu0 0
      %661 = vmatprep.subr.bf16.mxu0 0
      %662 = vmatpush1.bf16.msra.mxu0 0
      %663 = vmatprep.subr.bf16.mxu0 0
      %664 = vmatpush1.bf16.msra.mxu0 0
      %665 = vmatprep.subr.bf16.mxu0 0
      %666 = vmatpush1.bf16.msra.mxu0 0
      %667 = vmatprep.subr.bf16.mxu0 0
      %668 = vmatpush1.bf16.msra.mxu0 0
      %669 = vmatprep.subr.bf16.mxu0 0
      %670 = vmatpush1.bf16.msra.mxu0 0
      %671 = vmatprep.subr.bf16.mxu0 0
      %672 = vmatpush1.bf16.msra.mxu0 0
      %673 = vmatprep.subr.bf16.mxu0 %v650
      %674 = vmatpush1.bf16.msra.mxu0 %v649
      %675 = vmatprep.subr.bf16.mxu0 0
      %676 = vmatpush2.bf16.msra.mxu0 0
      %677 = vmatprep.subr.bf16.mxu0 0
      %678 = vmatpush2.bf16.msra.mxu0 0
      %679 = vmatprep.subr.bf16.mxu0 0
      %680 = vmatpush2.bf16.msra.mxu0 0
      %681 = vmatprep.subr.bf16.mxu0 0
      %682 = vmatpush2.bf16.msra.mxu0 0
      %683 = vmatprep.subr.bf16.mxu0 0
      %684 = vmatpush2.bf16.msra.mxu0 0
      %685 = vmatprep.subr.bf16.mxu0 0
      %686 = vmatpush2.bf16.msra.mxu0 0
      %687 = vmatprep.subr.bf16.mxu0 0
      %688 = vmatpush2.bf16.msra.mxu0 0
      %689 = vmatprep.subr.bf16.mxu0 0
      %690 = vmatpush2.bf16.msra.mxu0 0
      %691 = vmatprep.mubr.bf16.mxu0 0
      %692 = vmatmul.mubr.bf16.gmra.mxu0 %v657
      %v693 = vpop.f32.mrf.mxu0
      %v694 = vadd.f32 0.0, %v693
      %v695 = vpop.f32.mrf.mxu0
      %v696 = vadd.f32 0.0, %v695
      %v697 = vpop.f32.mrf.mxu0
      %v698 = vadd.f32 0.0, %v697
      %v699 = vpop.f32.mrf.mxu0
      %v700 = vadd.f32 0.0, %v699
      %701 = vdwg.mxu0
      %v702 = vadd.f32 %v608, %v694
      %v703 = vadd.f32 %v610, %v696
      %v704 = vadd.f32 %v612, %v698
      %v705 = vadd.f32 %v614, %v700
      %706 = vrot.lane.b32.xlu0 %v439, 1
      %v707 = vpop.permute.xlu0 %706
      %708 = vrot.lane.b32.xlu0 %v432, 1
      %v709 = vpop.permute.xlu0 %708
      %710 = vrot.lane.b32.xlu0 %v440, 1
      %v711 = vpop.permute.xlu0 %710
      %712 = vrot.lane.b32.xlu0 %v434, 1
      %v713 = vpop.permute.xlu0 %712
      %vm714 = vcmp.lt.s32.totalorder %v452, 1
      %v715 = vsel %vm714, %v707, %v711
      %v716 = vsel %vm714, %v709, %v713
      %v717 = vsel %vm714, %v711, %v707
      %v718 = vsel %vm714, %v713, %v709
      %s719 = scalar_lea.vmem %s7, 3
      %v720 = vld [vmem:[%s719] ss:$8 sm:$0x3]
      %v722 = vlaneseq
      %v723 = vshrl.u32 %v722, 7
      %v724 = vsub.s32 0, %v723
      %v725 = vrot.slane %v720, %v724
      %v726 = vlaneseq
      %v727 = vshrl.u32 %v726, 7
      %v728 = vsub.s32 1, %v727
      %v729 = vrot.slane %v720, %v728
      %v732 = vmul.f32 %v717, %v725
      %v733 = vmul.f32 %v715, %v729
      %v734 = vmul.f32 %v718, %v725
      %v735 = vmul.f32 %v716, %v729
      %s736 = scalar_lea.vmem %s4, 24
      %v737 = vld [vmem:[%s736] sm:$0xf]
      %v738 = vld [vmem:[%s736 + $0x4] sm:$0xf]
      %v739 = vpack.c.bf16 %v734, %v732
      %v740 = vpack.c.bf16 %v735, %v733
      %v743 = vunpack.c.l.b16 %v737
      %v744 = vunpack.c.l.b16 %v738
      %v745 = vpack.c.b16 %v744, %v743
      %v747 = vsel %vm518, %v745, 0
      %749 = vmatprep.subr.bf16.mxu0 0
      %750 = vmatpush1.bf16.msra.mxu0 0
      %751 = vmatprep.subr.bf16.mxu0 0
      %752 = vmatpush1.bf16.msra.mxu0 0
      %753 = vmatprep.subr.bf16.mxu0 0
      %754 = vmatpush1.bf16.msra.mxu0 0
      %755 = vmatprep.subr.bf16.mxu0 0
      %756 = vmatpush1.bf16.msra.mxu0 0
      %757 = vmatprep.subr.bf16.mxu0 0
      %758 = vmatpush1.bf16.msra.mxu0 0
      %759 = vmatprep.subr.bf16.mxu0 0
      %760 = vmatpush1.bf16.msra.mxu0 0
      %761 = vmatprep.subr.bf16.mxu0 0
      %762 = vmatpush1.bf16.msra.mxu0 0
      %763 = vmatprep.subr.bf16.mxu0 %v740
      %764 = vmatpush1.bf16.msra.mxu0 %v739
      %765 = vmatprep.subr.bf16.mxu0 0
      %766 = vmatpush2.bf16.msra.mxu0 0
      %767 = vmatprep.subr.bf16.mxu0 0
      %768 = vmatpush2.bf16.msra.mxu0 0
      %769 = vmatprep.subr.bf16.mxu0 0
      %770 = vmatpush2.bf16.msra.mxu0 0
      %771 = vmatprep.subr.bf16.mxu0 0
      %772 = vmatpush2.bf16.msra.mxu0 0
      %773 = vmatprep.subr.bf16.mxu0 0
      %774 = vmatpush2.bf16.msra.mxu0 0
      %775 = vmatprep.subr.bf16.mxu0 0
      %776 = vmatpush2.bf16.msra.mxu0 0
      %777 = vmatprep.subr.bf16.mxu0 0
      %778 = vmatpush2.bf16.msra.mxu0 0
      %779 = vmatprep.subr.bf16.mxu0 0
      %780 = vmatpush2.bf16.msra.mxu0 0
      %781 = vmatprep.mubr.bf16.mxu0 0
      %782 = vmatmul.mubr.bf16.gmra.mxu0 %v747
      %v783 = vpop.f32.mrf.mxu0
      %v784 = vadd.f32 0.0, %v783
      %v785 = vpop.f32.mrf.mxu0
      %v786 = vadd.f32 0.0, %v785
      %v787 = vpop.f32.mrf.mxu0
      %v788 = vadd.f32 0.0, %v787
      %v789 = vpop.f32.mrf.mxu0
      %v790 = vadd.f32 0.0, %v789
      %791 = vdwg.mxu0
      %v792 = vadd.f32 %v702, %v784
      %v793 = vadd.f32 %v703, %v786
      %v794 = vadd.f32 %v704, %v788
      %v795 = vadd.f32 %v705, %v790
      %s796 = scalar_lea.vmem %s4, 32
      %v797 = vld [vmem:[%s796] sm:$0xf]
      %v798 = vld [vmem:[%s796 + $0x4] sm:$0xf]
      %v799 = vpack.c.bf16 %v432, %v439
      %v800 = vpack.c.bf16 %v434, %v440
      %v803 = vunpack.c.l.b16 %v797
      %v804 = vunpack.c.l.b16 %v798
      %v805 = vpack.c.b16 %v804, %v803
      %v807 = vsel %vm518, %v805, 0
      %809 = vmatprep.subr.bf16.mxu0 0
      %810 = vmatpush1.bf16.msra.mxu0 0
      %811 = vmatprep.subr.bf16.mxu0 0
      %812 = vmatpush1.bf16.msra.mxu0 0
      %813 = vmatprep.subr.bf16.mxu0 0
      %814 = vmatpush1.bf16.msra.mxu0 0
      %815 = vmatprep.subr.bf16.mxu0 0
      %816 = vmatpush1.bf16.msra.mxu0 0
      %817 = vmatprep.subr.bf16.mxu0 0
      %818 = vmatpush1.bf16.msra.mxu0 0
      %819 = vmatprep.subr.bf16.mxu0 0
      %820 = vmatpush1.bf16.msra.mxu0 0
      %821 = vmatprep.subr.bf16.mxu0 0
      %822 = vmatpush1.bf16.msra.mxu0 0
      %823 = vmatprep.subr.bf16.mxu0 %v800
      %824 = vmatpush1.bf16.msra.mxu0 %v799
      %825 = vmatprep.subr.bf16.mxu0 0
      %826 = vmatpush2.bf16.msra.mxu0 0
      %827 = vmatprep.subr.bf16.mxu0 0
      %828 = vmatpush2.bf16.msra.mxu0 0
      %829 = vmatprep.subr.bf16.mxu0 0
      %830 = vmatpush2.bf16.msra.mxu0 0
      %831 = vmatprep.subr.bf16.mxu0 0
      %832 = vmatpush2.bf16.msra.mxu0 0
      %833 = vmatprep.subr.bf16.mxu0 0
      %834 = vmatpush2.bf16.msra.mxu0 0
      %835 = vmatprep.subr.bf16.mxu0 0
      %836 = vmatpush2.bf16.msra.mxu0 0
      %837 = vmatprep.subr.bf16.mxu0 0
      %838 = vmatpush2.bf16.msra.mxu0 0
      %839 = vmatprep.subr.bf16.mxu0 0
      %840 = vmatpush2.bf16.msra.mxu0 0
      %841 = vmatprep.mubr.bf16.mxu0 0
      %842 = vmatmul.mubr.bf16.gmra.mxu0 %v807
      %v843 = vpop.f32.mrf.mxu0
      %v844 = vadd.f32 0.0, %v843
      %v845 = vpop.f32.mrf.mxu0
      %v846 = vadd.f32 0.0, %v845
      %v847 = vpop.f32.mrf.mxu0
      %v848 = vadd.f32 0.0, %v847
      %v849 = vpop.f32.mrf.mxu0
      %v850 = vadd.f32 0.0, %v849
      %851 = vdwg.mxu0
      %v852 = vadd.f32 %v792, %v844
      %v853 = vadd.f32 %v793, %v846
      %v854 = vadd.f32 %v794, %v848
      %v855 = vadd.f32 %v795, %v850
      %856 = vrot.lane.b32.xlu0 %v439, 127
      %v857 = vpop.permute.xlu0 %856
      %858 = vrot.lane.b32.xlu0 %v432, 127
      %v859 = vpop.permute.xlu0 %858
      %860 = vrot.lane.b32.xlu0 %v440, 127
      %v861 = vpop.permute.xlu0 %860
      %862 = vrot.lane.b32.xlu0 %v434, 127
      %v863 = vpop.permute.xlu0 %862
      %vm864 = vcmp.lt.s32.totalorder %v452, 127
      %v865 = vsel %vm864, %v857, %v861
      %v866 = vsel %vm864, %v859, %v863
      %v867 = vsel %vm864, %v861, %v857
      %v868 = vsel %vm864, %v863, %v859
      %s869 = scalar_lea.vmem %s7, 5
      %v870 = vld [vmem:[%s869] ss:$8 sm:$0x3]
      %v872 = vlaneseq
      %v873 = vshrl.u32 %v872, 7
      %v874 = vsub.s32 0, %v873
      %v875 = vrot.slane %v870, %v874
      %v876 = vlaneseq
      %v877 = vshrl.u32 %v876, 7
      %v878 = vsub.s32 1, %v877
      %v879 = vrot.slane %v870, %v878
      %v882 = vmul.f32 %v865, %v875
      %v883 = vmul.f32 %v867, %v879
      %v884 = vmul.f32 %v866, %v875
      %v885 = vmul.f32 %v868, %v879
      %s886 = scalar_lea.vmem %s4, 40
      %v887 = vld [vmem:[%s886] sm:$0xf]
      %v888 = vld [vmem:[%s886 + $0x4] sm:$0xf]
      %v889 = vpack.c.bf16 %v884, %v882
      %v890 = vpack.c.bf16 %v885, %v883
      %v893 = vunpack.c.l.b16 %v887
      %v894 = vunpack.c.l.b16 %v888
      %v895 = vpack.c.b16 %v894, %v893
      %v897 = vsel %vm518, %v895, 0
      %899 = vmatprep.subr.bf16.mxu0 0
      %900 = vmatpush1.bf16.msra.mxu0 0
      %901 = vmatprep.subr.bf16.mxu0 0
      %902 = vmatpush1.bf16.msra.mxu0 0
      %903 = vmatprep.subr.bf16.mxu0 0
      %904 = vmatpush1.bf16.msra.mxu0 0
      %905 = vmatprep.subr.bf16.mxu0 0
      %906 = vmatpush1.bf16.msra.mxu0 0
      %907 = vmatprep.subr.bf16.mxu0 0
      %908 = vmatpush1.bf16.msra.mxu0 0
      %909 = vmatprep.subr.bf16.mxu0 0
      %910 = vmatpush1.bf16.msra.mxu0 0
      %911 = vmatprep.subr.bf16.mxu0 0
      %912 = vmatpush1.bf16.msra.mxu0 0
      %913 = vmatprep.subr.bf16.mxu0 %v890
      %914 = vmatpush1.bf16.msra.mxu0 %v889
      %915 = vmatprep.subr.bf16.mxu0 0
      %916 = vmatpush2.bf16.msra.mxu0 0
      %917 = vmatprep.subr.bf16.mxu0 0
      %918 = vmatpush2.bf16.msra.mxu0 0
      %919 = vmatprep.subr.bf16.mxu0 0
      %920 = vmatpush2.bf16.msra.mxu0 0
      %921 = vmatprep.subr.bf16.mxu0 0
      %922 = vmatpush2.bf16.msra.mxu0 0
      %923 = vmatprep.subr.bf16.mxu0 0
      %924 = vmatpush2.bf16.msra.mxu0 0
      %925 = vmatprep.subr.bf16.mxu0 0
      %926 = vmatpush2.bf16.msra.mxu0 0
      %927 = vmatprep.subr.bf16.mxu0 0
      %928 = vmatpush2.bf16.msra.mxu0 0
      %929 = vmatprep.subr.bf16.mxu0 0
      %930 = vmatpush2.bf16.msra.mxu0 0
      %931 = vmatprep.mubr.bf16.mxu0 0
      %932 = vmatmul.mubr.bf16.gmra.mxu0 %v897
      %v933 = vpop.f32.mrf.mxu0
      %v934 = vadd.f32 0.0, %v933
      %v935 = vpop.f32.mrf.mxu0
      %v936 = vadd.f32 0.0, %v935
      %v937 = vpop.f32.mrf.mxu0
      %v938 = vadd.f32 0.0, %v937
      %v939 = vpop.f32.mrf.mxu0
      %v940 = vadd.f32 0.0, %v939
      %941 = vdwg.mxu0
      %v942 = vadd.f32 %v852, %v934
      %v943 = vadd.f32 %v853, %v936
      %v944 = vadd.f32 %v854, %v938
      %v945 = vadd.f32 %v855, %v940
      %946 = vrot.lane.b32.xlu0 %v439, 113
      %v947 = vpop.permute.xlu0 %946
      %948 = vrot.lane.b32.xlu0 %v432, 113
      %v949 = vpop.permute.xlu0 %948
      %950 = vrot.lane.b32.xlu0 %v440, 113
      %v951 = vpop.permute.xlu0 %950
      %952 = vrot.lane.b32.xlu0 %v434, 113
      %v953 = vpop.permute.xlu0 %952
      %vm954 = vcmp.lt.s32.totalorder %v452, 113
      %v955 = vsel %vm954, %v947, %v951
      %v956 = vsel %vm954, %v949, %v953
      %v957 = vsel %vm954, %v951, %v947
      %v958 = vsel %vm954, %v953, %v949
      %s959 = scalar_lea.vmem %s7, 6
      %v960 = vld [vmem:[%s959] ss:$8 sm:$0x3]
      %v962 = vlaneseq
      %v963 = vshrl.u32 %v962, 7
      %v964 = vsub.s32 0, %v963
      %v965 = vrot.slane %v960, %v964
      %v966 = vlaneseq
      %v967 = vshrl.u32 %v966, 7
      %v968 = vsub.s32 1, %v967
      %v969 = vrot.slane %v960, %v968
      %v972 = vmul.f32 %v955, %v965
      %v973 = vmul.f32 %v957, %v969
      %v974 = vmul.f32 %v956, %v965
      %v975 = vmul.f32 %v958, %v969
      %s976 = scalar_lea.vmem %s4, 48
      %v977 = vld [vmem:[%s976] sm:$0xf]
      %v978 = vld [vmem:[%s976 + $0x4] sm:$0xf]
      %v979 = vpack.c.bf16 %v974, %v972
      %v980 = vpack.c.bf16 %v975, %v973
      %v983 = vunpack.c.l.b16 %v977
      %v984 = vunpack.c.l.b16 %v978
      %v985 = vpack.c.b16 %v984, %v983
      %v987 = vsel %vm518, %v985, 0
      %989 = vmatprep.subr.bf16.mxu0 0
      %990 = vmatpush1.bf16.msra.mxu0 0
      %991 = vmatprep.subr.bf16.mxu0 0
      %992 = vmatpush1.bf16.msra.mxu0 0
      %993 = vmatprep.subr.bf16.mxu0 0
      %994 = vmatpush1.bf16.msra.mxu0 0
      %995 = vmatprep.subr.bf16.mxu0 0
      %996 = vmatpush1.bf16.msra.mxu0 0
      %997 = vmatprep.subr.bf16.mxu0 0
      %998 = vmatpush1.bf16.msra.mxu0 0
      %999 = vmatprep.subr.bf16.mxu0 0
      %1000 = vmatpush1.bf16.msra.mxu0 0
      %1001 = vmatprep.subr.bf16.mxu0 0
      %1002 = vmatpush1.bf16.msra.mxu0 0
      %1003 = vmatprep.subr.bf16.mxu0 %v980
      %1004 = vmatpush1.bf16.msra.mxu0 %v979
      %1005 = vmatprep.subr.bf16.mxu0 0
      %1006 = vmatpush2.bf16.msra.mxu0 0
      %1007 = vmatprep.subr.bf16.mxu0 0
      %1008 = vmatpush2.bf16.msra.mxu0 0
      %1009 = vmatprep.subr.bf16.mxu0 0
      %1010 = vmatpush2.bf16.msra.mxu0 0
      %1011 = vmatprep.subr.bf16.mxu0 0
      %1012 = vmatpush2.bf16.msra.mxu0 0
      %1013 = vmatprep.subr.bf16.mxu0 0
      %1014 = vmatpush2.bf16.msra.mxu0 0
      %1015 = vmatprep.subr.bf16.mxu0 0
      %1016 = vmatpush2.bf16.msra.mxu0 0
      %1017 = vmatprep.subr.bf16.mxu0 0
      %1018 = vmatpush2.bf16.msra.mxu0 0
      %1019 = vmatprep.subr.bf16.mxu0 0
      %1020 = vmatpush2.bf16.msra.mxu0 0
      %1021 = vmatprep.mubr.bf16.mxu0 0
      %1022 = vmatmul.mubr.bf16.gmra.mxu0 %v987
      %v1023 = vpop.f32.mrf.mxu0
      %v1024 = vadd.f32 0.0, %v1023
      %v1025 = vpop.f32.mrf.mxu0
      %v1026 = vadd.f32 0.0, %v1025
      %v1027 = vpop.f32.mrf.mxu0
      %v1028 = vadd.f32 0.0, %v1027
      %v1029 = vpop.f32.mrf.mxu0
      %v1030 = vadd.f32 0.0, %v1029
      %1031 = vdwg.mxu0
      %v1032 = vadd.f32 %v942, %v1024
      %v1033 = vadd.f32 %v943, %v1026
      %v1034 = vadd.f32 %v944, %v1028
      %v1035 = vadd.f32 %v945, %v1030
      %1036 = vrot.lane.b32.xlu0 %v439, 112
      %v1037 = vpop.permute.xlu0 %1036
      %1038 = vrot.lane.b32.xlu0 %v432, 112
      %v1039 = vpop.permute.xlu0 %1038
      %1040 = vrot.lane.b32.xlu0 %v440, 112
      %v1041 = vpop.permute.xlu0 %1040
      %1042 = vrot.lane.b32.xlu0 %v434, 112
      %v1043 = vpop.permute.xlu0 %1042
      %vm1044 = vcmp.lt.s32.totalorder %v452, 112
      %v1045 = vsel %vm1044, %v1037, %v1041
      %v1046 = vsel %vm1044, %v1039, %v1043
      %v1047 = vsel %vm1044, %v1041, %v1037
      %v1048 = vsel %vm1044, %v1043, %v1039
      %s1049 = scalar_lea.vmem %s7, 7
      %v1050 = vld [vmem:[%s1049] ss:$8 sm:$0x3]
      %v1052 = vlaneseq
      %v1053 = vshrl.u32 %v1052, 7
      %v1054 = vsub.s32 0, %v1053
      %v1055 = vrot.slane %v1050, %v1054
      %v1056 = vlaneseq
      %v1057 = vshrl.u32 %v1056, 7
      %v1058 = vsub.s32 1, %v1057
      %v1059 = vrot.slane %v1050, %v1058
      %v1062 = vmul.f32 %v1045, %v1055
      %v1063 = vmul.f32 %v1047, %v1059
      %v1064 = vmul.f32 %v1046, %v1055
      %v1065 = vmul.f32 %v1048, %v1059
      %s1066 = scalar_lea.vmem %s4, 56
      %v1067 = vld [vmem:[%s1066] sm:$0xf]
      %v1068 = vld [vmem:[%s1066 + $0x4] sm:$0xf]
      %v1069 = vpack.c.bf16 %v1064, %v1062
      %v1070 = vpack.c.bf16 %v1065, %v1063
      %v1073 = vunpack.c.l.b16 %v1067
      %v1074 = vunpack.c.l.b16 %v1068
      %v1075 = vpack.c.b16 %v1074, %v1073
      %v1077 = vsel %vm518, %v1075, 0
      %1079 = vmatprep.subr.bf16.mxu0 0
      %1080 = vmatpush1.bf16.msra.mxu0 0
      %1081 = vmatprep.subr.bf16.mxu0 0
      %1082 = vmatpush1.bf16.msra.mxu0 0
      %1083 = vmatprep.subr.bf16.mxu0 0
      %1084 = vmatpush1.bf16.msra.mxu0 0
      %1085 = vmatprep.subr.bf16.mxu0 0
      %1086 = vmatpush1.bf16.msra.mxu0 0
      %1087 = vmatprep.subr.bf16.mxu0 0
      %1088 = vmatpush1.bf16.msra.mxu0 0
      %1089 = vmatprep.subr.bf16.mxu0 0
      %1090 = vmatpush1.bf16.msra.mxu0 0
      %1091 = vmatprep.subr.bf16.mxu0 0
      %1092 = vmatpush1.bf16.msra.mxu0 0
      %1093 = vmatprep.subr.bf16.mxu0 %v1070
      %1094 = vmatpush1.bf16.msra.mxu0 %v1069
      %1095 = vmatprep.subr.bf16.mxu0 0
      %1096 = vmatpush2.bf16.msra.mxu0 0
      %1097 = vmatprep.subr.bf16.mxu0 0
      %1098 = vmatpush2.bf16.msra.mxu0 0
      %1099 = vmatprep.subr.bf16.mxu0 0
      %1100 = vmatpush2.bf16.msra.mxu0 0
      %1101 = vmatprep.subr.bf16.mxu0 0
      %1102 = vmatpush2.bf16.msra.mxu0 0
      %1103 = vmatprep.subr.bf16.mxu0 0
      %1104 = vmatpush2.bf16.msra.mxu0 0
      %1105 = vmatprep.subr.bf16.mxu0 0
      %1106 = vmatpush2.bf16.msra.mxu0 0
      %1107 = vmatprep.subr.bf16.mxu0 0
      %1108 = vmatpush2.bf16.msra.mxu0 0
      %1109 = vmatprep.subr.bf16.mxu0 0
      %1110 = vmatpush2.bf16.msra.mxu0 0
      %1111 = vmatprep.mubr.bf16.mxu0 0
      %1112 = vmatmul.mubr.bf16.gmra.mxu0 %v1077
      %v1113 = vpop.f32.mrf.mxu0
      %v1114 = vadd.f32 0.0, %v1113
      %v1115 = vpop.f32.mrf.mxu0
      %v1116 = vadd.f32 0.0, %v1115
      %v1117 = vpop.f32.mrf.mxu0
      %v1118 = vadd.f32 0.0, %v1117
      %v1119 = vpop.f32.mrf.mxu0
      %v1120 = vadd.f32 0.0, %v1119
      %1121 = vdwg.mxu0
      %v1122 = vadd.f32 %v1032, %v1114
      %v1123 = vadd.f32 %v1033, %v1116
      %v1124 = vadd.f32 %v1034, %v1118
      %v1125 = vadd.f32 %v1035, %v1120
      %1126 = vrot.lane.b32.xlu0 %v439, 111
      %v1127 = vpop.permute.xlu0 %1126
      %1128 = vrot.lane.b32.xlu0 %v432, 111
      %v1129 = vpop.permute.xlu0 %1128
      %1130 = vrot.lane.b32.xlu0 %v440, 111
      %v1131 = vpop.permute.xlu0 %1130
      %1132 = vrot.lane.b32.xlu0 %v434, 111
      %v1133 = vpop.permute.xlu0 %1132
      %vm1134 = vcmp.lt.s32.totalorder %v452, 111
      %v1135 = vsel %vm1134, %v1127, %v1131
      %v1136 = vsel %vm1134, %v1129, %v1133
      %v1137 = vsel %vm1134, %v1131, %v1127
      %v1138 = vsel %vm1134, %v1133, %v1129
      %s1139 = scalar_lea.vmem %s7, 16
      %v1140 = vld [vmem:[%s1139] ss:$8 sm:$0x3]
      %v1142 = vlaneseq
      %v1143 = vshrl.u32 %v1142, 7
      %v1144 = vsub.s32 0, %v1143
      %v1145 = vrot.slane %v1140, %v1144
      %v1146 = vlaneseq
      %v1147 = vshrl.u32 %v1146, 7
      %v1148 = vsub.s32 1, %v1147
      %v1149 = vrot.slane %v1140, %v1148
      %v1152 = vmul.f32 %v1135, %v1145
      %v1153 = vmul.f32 %v1137, %v1149
      %v1154 = vmul.f32 %v1136, %v1145
      %v1155 = vmul.f32 %v1138, %v1149
      %s1156 = scalar_lea.vmem %s4, 64
      %v1157 = vld [vmem:[%s1156] sm:$0xf]
      %v1158 = vld [vmem:[%s1156 + $0x4] sm:$0xf]
      %v1159 = vpack.c.bf16 %v1154, %v1152
      %v1160 = vpack.c.bf16 %v1155, %v1153
      %v1163 = vunpack.c.l.b16 %v1157
      %v1164 = vunpack.c.l.b16 %v1158
      %v1165 = vpack.c.b16 %v1164, %v1163
      %v1167 = vsel %vm518, %v1165, 0
      %1169 = vmatprep.subr.bf16.mxu0 0
      %1170 = vmatpush1.bf16.msra.mxu0 0
      %1171 = vmatprep.subr.bf16.mxu0 0
      %1172 = vmatpush1.bf16.msra.mxu0 0
      %1173 = vmatprep.subr.bf16.mxu0 0
      %1174 = vmatpush1.bf16.msra.mxu0 0
      %1175 = vmatprep.subr.bf16.mxu0 0
      %1176 = vmatpush1.bf16.msra.mxu0 0
      %1177 = vmatprep.subr.bf16.mxu0 0
      %1178 = vmatpush1.bf16.msra.mxu0 0
      %1179 = vmatprep.subr.bf16.mxu0 0
      %1180 = vmatpush1.bf16.msra.mxu0 0
      %1181 = vmatprep.subr.bf16.mxu0 0
      %1182 = vmatpush1.bf16.msra.mxu0 0
      %1183 = vmatprep.subr.bf16.mxu0 %v1160
      %1184 = vmatpush1.bf16.msra.mxu0 %v1159
      %1185 = vmatprep.subr.bf16.mxu0 0
      %1186 = vmatpush2.bf16.msra.mxu0 0
      %1187 = vmatprep.subr.bf16.mxu0 0
      %1188 = vmatpush2.bf16.msra.mxu0 0
      %1189 = vmatprep.subr.bf16.mxu0 0
      %1190 = vmatpush2.bf16.msra.mxu0 0
      %1191 = vmatprep.subr.bf16.mxu0 0
      %1192 = vmatpush2.bf16.msra.mxu0 0
      %1193 = vmatprep.subr.bf16.mxu0 0
      %1194 = vmatpush2.bf16.msra.mxu0 0
      %1195 = vmatprep.subr.bf16.mxu0 0
      %1196 = vmatpush2.bf16.msra.mxu0 0
      %1197 = vmatprep.subr.bf16.mxu0 0
      %1198 = vmatpush2.bf16.msra.mxu0 0
      %1199 = vmatprep.subr.bf16.mxu0 0
      %1200 = vmatpush2.bf16.msra.mxu0 0
      %1201 = vmatprep.mubr.bf16.mxu0 0
      %1202 = vmatmul.mubr.bf16.gmra.mxu0 %v1167
      %v1203 = vpop.f32.mrf.mxu0
      %v1204 = vadd.f32 0.0, %v1203
      %v1205 = vpop.f32.mrf.mxu0
      %v1206 = vadd.f32 0.0, %v1205
      %v1207 = vpop.f32.mrf.mxu0
      %v1208 = vadd.f32 0.0, %v1207
      %v1209 = vpop.f32.mrf.mxu0
      %v1210 = vadd.f32 0.0, %v1209
      %1211 = vdwg.mxu0
      %v1212 = vadd.f32 %v1122, %v1204
      %v1213 = vadd.f32 %v1123, %v1206
      %v1214 = vadd.f32 %v1124, %v1208
      %v1215 = vadd.f32 %v1125, %v1210
      %1217 = vset.pattern.permute.xlu0 0
      %1218 = vperm.xlu0 %1217, %v441
      %v1219 = vpop.permute.xlu0 %1218
      %1222 = vset.pattern.permute.xlu0 0
      %1223 = vperm.xlu0 %1222, %v442
      %v1224 = vpop.permute.xlu0 %1223
      %v1226 = vadd.f32 %v1212, %v1219
      %v1227 = vadd.f32 %v1213, %v1219
      %v1228 = vadd.f32 %v1214, %v1224
      %v1229 = vadd.f32 %v1215, %v1224
      %v1234 = vcombine.low %v1226, %v1227
      %v1235 = vcombine.high %v1226, %v1227
      %v1237 = vunpack.c.l.s4 1983009808
      %v1238 = vunpack.c.0.s8 %v1237
      %v1239 = vlaneseq
      %v1240 = vshrl.u32 %v1239, 7
      %v1241 = vsub.s32 %v1238, %v1240
      %v1242 = vrot.slane %v1234, %v1241
      %v1244 = vunpack.c.l.s4 1983009808
      %v1245 = vunpack.c.0.s8 %v1244
      %v1246 = vlaneseq
      %v1247 = vshrl.u32 %v1246, 7
      %v1248 = vsub.s32 %v1245, %v1247
      %v1249 = vrot.slane %v1235, %v1248
      %v1250 = vcombine.high %v1242, %v1242
      %v1251 = vcombine.high %v1249, %v1249
      %v1252 = vcombine.low %v1228, %v1229
      %v1253 = vcombine.high %v1228, %v1229
      %v1255 = vunpack.c.l.s4 1983009808
      %v1256 = vunpack.c.0.s8 %v1255
      %v1257 = vlaneseq
      %v1258 = vshrl.u32 %v1257, 7
      %v1259 = vsub.s32 %v1256, %v1258
      %v1260 = vrot.slane %v1252, %v1259
      %v1262 = vunpack.c.l.s4 1983009808
      %v1263 = vunpack.c.0.s8 %v1262
      %v1264 = vlaneseq
      %v1265 = vshrl.u32 %v1264, 7
      %v1266 = vsub.s32 %v1263, %v1265
      %v1267 = vrot.slane %v1253, %v1266
      %v1268 = vcombine.high %v1260, %v1260
      %v1269 = vcombine.high %v1267, %v1267
      %v1279 = vunpack.c.l.s4 1983009808
      %v1280 = vunpack.c.0.s8 %v1279
      %v1281 = vlaneseq
      %v1282 = vshrl.u32 %v1281, 7
      %v1283 = vsub.s32 %v1280, %v1282
      %v1284 = vrot.slane %v1242, %v1283
      %v1285 = vcombine.high %v1284, %v1284
      %v1287 = vunpack.c.l.s4 1983009808
      %v1288 = vunpack.c.0.s8 %v1287
      %v1289 = vlaneseq
      %v1290 = vshrl.u32 %v1289, 7
      %v1291 = vsub.s32 %v1288, %v1290
      %v1292 = vrot.slane %v1250, %v1291
      %v1293 = vcombine.high %v1292, %v1292
      %v1295 = vunpack.c.l.s4 1983009808
      %v1296 = vunpack.c.0.s8 %v1295
      %v1297 = vlaneseq
      %v1298 = vshrl.u32 %v1297, 7
      %v1299 = vsub.s32 %v1296, %v1298
      %v1300 = vrot.slane %v1249, %v1299
      %v1301 = vcombine.high %v1300, %v1300
      %v1303 = vunpack.c.l.s4 1983009808
      %v1304 = vunpack.c.0.s8 %v1303
      %v1305 = vlaneseq
      %v1306 = vshrl.u32 %v1305, 7
      %v1307 = vsub.s32 %v1304, %v1306
      %v1308 = vrot.slane %v1251, %v1307
      %v1309 = vcombine.high %v1308, %v1308
      %v1311 = vunpack.c.l.s4 1983009808
      %v1312 = vunpack.c.0.s8 %v1311
      %v1313 = vlaneseq
      %v1314 = vshrl.u32 %v1313, 7
      %v1315 = vsub.s32 %v1312, %v1314
      %v1316 = vrot.slane %v1260, %v1315
      %v1317 = vcombine.high %v1316, %v1316
      %v1319 = vunpack.c.l.s4 1983009808
      %v1320 = vunpack.c.0.s8 %v1319
      %v1321 = vlaneseq
      %v1322 = vshrl.u32 %v1321, 7
      %v1323 = vsub.s32 %v1320, %v1322
      %v1324 = vrot.slane %v1268, %v1323
      %v1325 = vcombine.high %v1324, %v1324
      %v1327 = vunpack.c.l.s4 1983009808
      %v1328 = vunpack.c.0.s8 %v1327
      %v1329 = vlaneseq
      %v1330 = vshrl.u32 %v1329, 7
      %v1331 = vsub.s32 %v1328, %v1330
      %v1332 = vrot.slane %v1267, %v1331
      %v1333 = vcombine.high %v1332, %v1332
      %v1335 = vunpack.c.l.s4 1983009808
      %v1336 = vunpack.c.0.s8 %v1335
      %v1337 = vlaneseq
      %v1338 = vshrl.u32 %v1337, 7
      %v1339 = vsub.s32 %v1336, %v1338
      %v1340 = vrot.slane %v1269, %v1339
      %v1341 = vcombine.high %v1340, %v1340
      %vm1358 = vcmask 1041408
      %v1359 = vsel %vm1358, %v1284, 0.0
      %v1360 = vsel %vm1358, %v1285, 0.0
      %v1361 = vadd.f32 %v1359, %v1360
      %1362 = vadd.xlane.f32.xlu0 %v1361
      %v1363 = vpop.xlane.xlu0 %1362
      %v1364 = vsel %vm1358, %v1292, 0.0
      %v1365 = vsel %vm1358, %v1293, 0.0
      %v1366 = vadd.f32 %v1364, %v1365
      %1367 = vadd.xlane.f32.xlu0 %v1366
      %v1368 = vpop.xlane.xlu0 %1367
      %v1369 = vsel %vm1358, %v1300, 0.0
      %v1370 = vsel %vm1358, %v1301, 0.0
      %v1371 = vadd.f32 %v1369, %v1370
      %1372 = vadd.xlane.f32.xlu0 %v1371
      %v1373 = vpop.xlane.xlu0 %1372
      %v1374 = vsel %vm1358, %v1308, 0.0
      %v1375 = vsel %vm1358, %v1309, 0.0
      %v1376 = vadd.f32 %v1374, %v1375
      %1377 = vadd.xlane.f32.xlu0 %v1376
      %v1378 = vpop.xlane.xlu0 %1377
      %v1379 = vsel %vm1358, %v1316, 0.0
      %v1380 = vsel %vm1358, %v1317, 0.0
      %v1381 = vadd.f32 %v1379, %v1380
      %1382 = vadd.xlane.f32.xlu0 %v1381
      %v1383 = vpop.xlane.xlu0 %1382
      %v1384 = vsel %vm1358, %v1324, 0.0
      %v1385 = vsel %vm1358, %v1325, 0.0
      %v1386 = vadd.f32 %v1384, %v1385
      %1387 = vadd.xlane.f32.xlu0 %v1386
      %v1388 = vpop.xlane.xlu0 %1387
      %v1389 = vsel %vm1358, %v1332, 0.0
      %v1390 = vsel %vm1358, %v1333, 0.0
      %v1391 = vadd.f32 %v1389, %v1390
      %1392 = vadd.xlane.f32.xlu0 %v1391
      %v1393 = vpop.xlane.xlu0 %1392
      %v1394 = vsel %vm1358, %v1340, 0.0
      %v1395 = vsel %vm1358, %v1341, 0.0
      %v1396 = vadd.f32 %v1394, %v1395
      %1397 = vadd.xlane.f32.xlu0 %v1396
      %v1398 = vpop.xlane.xlu0 %1397
      %v1399 = vsel %vm1358, %v1363, 0.0
      %v1400 = vrot.slane %v1399, 4
      %v1401 = vadd.f32 %v1399, %v1400
      %v1402 = vrot.slane %v1401, 2
      %v1403 = vadd.f32 %v1401, %v1402
      %v1404 = vrot.slane %v1403, 1
      %v1405 = vadd.f32 %v1403, %v1404
      %v1406 = vsel %vm1358, %v1368, 0.0
      %v1407 = vrot.slane %v1406, 4
      %v1408 = vadd.f32 %v1406, %v1407
      %v1409 = vrot.slane %v1408, 2
      %v1410 = vadd.f32 %v1408, %v1409
      %v1411 = vrot.slane %v1410, 1
      %v1412 = vadd.f32 %v1410, %v1411
      %v1413 = vsel %vm1358, %v1373, 0.0
      %v1414 = vrot.slane %v1413, 4
      %v1415 = vadd.f32 %v1413, %v1414
      %v1416 = vrot.slane %v1415, 2
      %v1417 = vadd.f32 %v1415, %v1416
      %v1418 = vrot.slane %v1417, 1
      %v1419 = vadd.f32 %v1417, %v1418
      %v1420 = vsel %vm1358, %v1378, 0.0
      %v1421 = vrot.slane %v1420, 4
      %v1422 = vadd.f32 %v1420, %v1421
      %v1423 = vrot.slane %v1422, 2
      %v1424 = vadd.f32 %v1422, %v1423
      %v1425 = vrot.slane %v1424, 1
      %v1426 = vadd.f32 %v1424, %v1425
      %v1427 = vsel %vm1358, %v1383, 0.0
      %v1428 = vrot.slane %v1427, 4
      %v1429 = vadd.f32 %v1427, %v1428
      %v1430 = vrot.slane %v1429, 2
      %v1431 = vadd.f32 %v1429, %v1430
      %v1432 = vrot.slane %v1431, 1
      %v1433 = vadd.f32 %v1431, %v1432
      %v1434 = vsel %vm1358, %v1388, 0.0
      %v1435 = vrot.slane %v1434, 4
      %v1436 = vadd.f32 %v1434, %v1435
      %v1437 = vrot.slane %v1436, 2
      %v1438 = vadd.f32 %v1436, %v1437
      %v1439 = vrot.slane %v1438, 1
      %v1440 = vadd.f32 %v1438, %v1439
      %v1441 = vsel %vm1358, %v1393, 0.0
      %v1442 = vrot.slane %v1441, 4
      %v1443 = vadd.f32 %v1441, %v1442
      %v1444 = vrot.slane %v1443, 2
      %v1445 = vadd.f32 %v1443, %v1444
      %v1446 = vrot.slane %v1445, 1
      %v1447 = vadd.f32 %v1445, %v1446
      %v1448 = vsel %vm1358, %v1398, 0.0
      %v1449 = vrot.slane %v1448, 4
      %v1450 = vadd.f32 %v1448, %v1449
      %v1451 = vrot.slane %v1450, 2
      %v1452 = vadd.f32 %v1450, %v1451
      %v1453 = vrot.slane %v1452, 1
      %v1454 = vadd.f32 %v1452, %v1453
      %v1455 = vmul.f32 %v1405, 0.001953125
      %v1456 = vmul.f32 %v1412, 0.001953125
      %v1457 = vmul.f32 %v1419, 0.001953125
      %v1458 = vmul.f32 %v1426, 0.001953125
      %v1459 = vmul.f32 %v1433, 0.001953125
      %v1460 = vmul.f32 %v1440, 0.001953125
      %v1461 = vmul.f32 %v1447, 0.001953125
      %v1462 = vmul.f32 %v1454, 0.001953125
      %v1463 = vsub.f32 %v1242, %v1455
      %v1464 = vsub.f32 %v1250, %v1456
      %v1465 = vsub.f32 %v1249, %v1457
      %v1466 = vsub.f32 %v1251, %v1458
      %v1467 = vsub.f32 %v1260, %v1459
      %v1468 = vsub.f32 %v1268, %v1460
      %v1469 = vsub.f32 %v1267, %v1461
      %v1470 = vsub.f32 %v1269, %v1462
      %v1471 = vmul.f32 %v1463, %v1463
      %v1472 = vmul.f32 %v1464, %v1464
      %v1473 = vmul.f32 %v1465, %v1465
      %v1474 = vmul.f32 %v1466, %v1466
      %v1475 = vmul.f32 %v1467, %v1467
      %v1476 = vmul.f32 %v1468, %v1468
      %v1477 = vmul.f32 %v1469, %v1469
      %v1478 = vmul.f32 %v1470, %v1470
      %v1488 = vunpack.c.l.s4 1983009808
      %v1489 = vunpack.c.0.s8 %v1488
      %v1490 = vlaneseq
      %v1491 = vshrl.u32 %v1490, 7
      %v1492 = vsub.s32 %v1489, %v1491
      %v1493 = vrot.slane %v1471, %v1492
      %v1494 = vcombine.high %v1493, %v1493
      %v1496 = vunpack.c.l.s4 1983009808
      %v1497 = vunpack.c.0.s8 %v1496
      %v1498 = vlaneseq
      %v1499 = vshrl.u32 %v1498, 7
      %v1500 = vsub.s32 %v1497, %v1499
      %v1501 = vrot.slane %v1472, %v1500
      %v1502 = vcombine.high %v1501, %v1501
      %v1504 = vunpack.c.l.s4 1983009808
      %v1505 = vunpack.c.0.s8 %v1504
      %v1506 = vlaneseq
      %v1507 = vshrl.u32 %v1506, 7
      %v1508 = vsub.s32 %v1505, %v1507
      %v1509 = vrot.slane %v1473, %v1508
      %v1510 = vcombine.high %v1509, %v1509
      %v1512 = vunpack.c.l.s4 1983009808
      %v1513 = vunpack.c.0.s8 %v1512
      %v1514 = vlaneseq
      %v1515 = vshrl.u32 %v1514, 7
      %v1516 = vsub.s32 %v1513, %v1515
      %v1517 = vrot.slane %v1474, %v1516
      %v1518 = vcombine.high %v1517, %v1517
      %v1520 = vunpack.c.l.s4 1983009808
      %v1521 = vunpack.c.0.s8 %v1520
      %v1522 = vlaneseq
      %v1523 = vshrl.u32 %v1522, 7
      %v1524 = vsub.s32 %v1521, %v1523
      %v1525 = vrot.slane %v1475, %v1524
      %v1526 = vcombine.high %v1525, %v1525
      %v1528 = vunpack.c.l.s4 1983009808
      %v1529 = vunpack.c.0.s8 %v1528
      %v1530 = vlaneseq
      %v1531 = vshrl.u32 %v1530, 7
      %v1532 = vsub.s32 %v1529, %v1531
      %v1533 = vrot.slane %v1476, %v1532
      %v1534 = vcombine.high %v1533, %v1533
      %v1536 = vunpack.c.l.s4 1983009808
      %v1537 = vunpack.c.0.s8 %v1536
      %v1538 = vlaneseq
      %v1539 = vshrl.u32 %v1538, 7
      %v1540 = vsub.s32 %v1537, %v1539
      %v1541 = vrot.slane %v1477, %v1540
      %v1542 = vcombine.high %v1541, %v1541
      %v1544 = vunpack.c.l.s4 1983009808
      %v1545 = vunpack.c.0.s8 %v1544
      %v1546 = vlaneseq
      %v1547 = vshrl.u32 %v1546, 7
      %v1548 = vsub.s32 %v1545, %v1547
      %v1549 = vrot.slane %v1478, %v1548
      %v1550 = vcombine.high %v1549, %v1549
      %v1567 = vsel %vm1358, %v1493, 0.0
      %v1568 = vsel %vm1358, %v1494, 0.0
      %v1569 = vadd.f32 %v1567, %v1568
      %1570 = vadd.xlane.f32.xlu0 %v1569
      %v1571 = vpop.xlane.xlu0 %1570
      %v1572 = vsel %vm1358, %v1501, 0.0
      %v1573 = vsel %vm1358, %v1502, 0.0
      %v1574 = vadd.f32 %v1572, %v1573
      %1575 = vadd.xlane.f32.xlu0 %v1574
      %v1576 = vpop.xlane.xlu0 %1575
      %v1577 = vsel %vm1358, %v1509, 0.0
      %v1578 = vsel %vm1358, %v1510, 0.0
      %v1579 = vadd.f32 %v1577, %v1578
      %1580 = vadd.xlane.f32.xlu0 %v1579
      %v1581 = vpop.xlane.xlu0 %1580
      %v1582 = vsel %vm1358, %v1517, 0.0
      %v1583 = vsel %vm1358, %v1518, 0.0
      %v1584 = vadd.f32 %v1582, %v1583
      %1585 = vadd.xlane.f32.xlu0 %v1584
      %v1586 = vpop.xlane.xlu0 %1585
      %v1587 = vsel %vm1358, %v1525, 0.0
      %v1588 = vsel %vm1358, %v1526, 0.0
      %v1589 = vadd.f32 %v1587, %v1588
      %1590 = vadd.xlane.f32.xlu0 %v1589
      %v1591 = vpop.xlane.xlu0 %1590
      %v1592 = vsel %vm1358, %v1533, 0.0
      %v1593 = vsel %vm1358, %v1534, 0.0
      %v1594 = vadd.f32 %v1592, %v1593
      %1595 = vadd.xlane.f32.xlu0 %v1594
      %v1596 = vpop.xlane.xlu0 %1595
      %v1597 = vsel %vm1358, %v1541, 0.0
      %v1598 = vsel %vm1358, %v1542, 0.0
      %v1599 = vadd.f32 %v1597, %v1598
      %1600 = vadd.xlane.f32.xlu0 %v1599
      %v1601 = vpop.xlane.xlu0 %1600
      %v1602 = vsel %vm1358, %v1549, 0.0
      %v1603 = vsel %vm1358, %v1550, 0.0
      %v1604 = vadd.f32 %v1602, %v1603
      %1605 = vadd.xlane.f32.xlu0 %v1604
      %v1606 = vpop.xlane.xlu0 %1605
      %v1607 = vsel %vm1358, %v1571, 0.0
      %v1608 = vrot.slane %v1607, 4
      %v1609 = vadd.f32 %v1607, %v1608
      %v1610 = vrot.slane %v1609, 2
      %v1611 = vadd.f32 %v1609, %v1610
      %v1612 = vrot.slane %v1611, 1
      %v1613 = vadd.f32 %v1611, %v1612
      %v1614 = vsel %vm1358, %v1576, 0.0
      %v1615 = vrot.slane %v1614, 4
      %v1616 = vadd.f32 %v1614, %v1615
      %v1617 = vrot.slane %v1616, 2
      %v1618 = vadd.f32 %v1616, %v1617
      %v1619 = vrot.slane %v1618, 1
      %v1620 = vadd.f32 %v1618, %v1619
      %v1621 = vsel %vm1358, %v1581, 0.0
      %v1622 = vrot.slane %v1621, 4
      %v1623 = vadd.f32 %v1621, %v1622
      %v1624 = vrot.slane %v1623, 2
      %v1625 = vadd.f32 %v1623, %v1624
      %v1626 = vrot.slane %v1625, 1
      %v1627 = vadd.f32 %v1625, %v1626
      %v1628 = vsel %vm1358, %v1586, 0.0
      %v1629 = vrot.slane %v1628, 4
      %v1630 = vadd.f32 %v1628, %v1629
      %v1631 = vrot.slane %v1630, 2
      %v1632 = vadd.f32 %v1630, %v1631
      %v1633 = vrot.slane %v1632, 1
      %v1634 = vadd.f32 %v1632, %v1633
      %v1635 = vsel %vm1358, %v1591, 0.0
      %v1636 = vrot.slane %v1635, 4
      %v1637 = vadd.f32 %v1635, %v1636
      %v1638 = vrot.slane %v1637, 2
      %v1639 = vadd.f32 %v1637, %v1638
      %v1640 = vrot.slane %v1639, 1
      %v1641 = vadd.f32 %v1639, %v1640
      %v1642 = vsel %vm1358, %v1596, 0.0
      %v1643 = vrot.slane %v1642, 4
      %v1644 = vadd.f32 %v1642, %v1643
      %v1645 = vrot.slane %v1644, 2
      %v1646 = vadd.f32 %v1644, %v1645
      %v1647 = vrot.slane %v1646, 1
      %v1648 = vadd.f32 %v1646, %v1647
      %v1649 = vsel %vm1358, %v1601, 0.0
      %v1650 = vrot.slane %v1649, 4
      %v1651 = vadd.f32 %v1649, %v1650
      %v1652 = vrot.slane %v1651, 2
      %v1653 = vadd.f32 %v1651, %v1652
      %v1654 = vrot.slane %v1653, 1
      %v1655 = vadd.f32 %v1653, %v1654
      %v1656 = vsel %vm1358, %v1606, 0.0
      %v1657 = vrot.slane %v1656, 4
      %v1658 = vadd.f32 %v1656, %v1657
      %v1659 = vrot.slane %v1658, 2
      %v1660 = vadd.f32 %v1658, %v1659
      %v1661 = vrot.slane %v1660, 1
      %v1662 = vadd.f32 %v1660, %v1661
      %v1663 = vmul.f32 %v1613, 0.001953125
      %v1664 = vmul.f32 %v1620, 0.001953125
      %v1665 = vmul.f32 %v1627, 0.001953125
      %v1666 = vmul.f32 %v1634, 0.001953125
      %v1667 = vmul.f32 %v1641, 0.001953125
      %v1668 = vmul.f32 %v1648, 0.001953125
      %v1669 = vmul.f32 %v1655, 0.001953125
      %v1670 = vmul.f32 %v1662, 0.001953125
      %v1671 = vadd.f32 %v1663, 1e-05
      %v1672 = vadd.f32 %v1664, 1e-05
      %v1673 = vadd.f32 %v1665, 1e-05
      %v1674 = vadd.f32 %v1666, 1e-05
      %v1675 = vadd.f32 %v1667, 1e-05
      %v1676 = vadd.f32 %v1668, 1e-05
      %v1677 = vadd.f32 %v1669, 1e-05
      %v1678 = vadd.f32 %v1670, 1e-05
      %v1679 = vrsqrt.pop %v1671
      %v1680 = vrsqrt.pop %v1672
      %v1681 = vrsqrt.pop %v1673
      %v1682 = vrsqrt.pop %v1674
      %v1683 = vrsqrt.pop %v1675
      %v1684 = vrsqrt.pop %v1676
      %v1685 = vrsqrt.pop %v1677
      %v1686 = vrsqrt.pop %v1678
      %v1687 = vmul.f32 %v1463, %v1679
      %v1688 = vmul.f32 %v1464, %v1680
      %v1689 = vmul.f32 %v1465, %v1681
      %v1690 = vmul.f32 %v1466, %v1682
      %v1691 = vmul.f32 %v1467, %v1683
      %v1692 = vmul.f32 %v1468, %v1684
      %v1693 = vmul.f32 %v1469, %v1685
      %v1694 = vmul.f32 %v1470, %v1686
      %1695 = vset.pattern.permute.xlu0 1
      %1696 = vperm.xlu0 %1695, %v441
      %v1697 = vpop.permute.xlu0 %1696
      %1698 = vset.pattern.permute.xlu0 1
      %1699 = vperm.xlu0 %1698, %v442
      %v1700 = vpop.permute.xlu0 %1699
      %v1702 = vunpack.c.l.s4 269488144
      %v1703 = vunpack.c.0.s8 %v1702
      %v1704 = vlaneseq
      %v1705 = vshrl.u32 %v1704, 7
      %v1706 = vsub.s32 %v1703, %v1705
      %v1707 = vrot.slane %v1697, %v1706
      %v1709 = vunpack.c.l.s4 842150450
      %v1710 = vunpack.c.0.s8 %v1709
      %v1711 = vlaneseq
      %v1712 = vshrl.u32 %v1711, 7
      %v1713 = vsub.s32 %v1710, %v1712
      %v1714 = vrot.slane %v1697, %v1713
      %v1716 = vunpack.c.l.s4 1414812756
      %v1717 = vunpack.c.0.s8 %v1716
      %v1718 = vlaneseq
      %v1719 = vshrl.u32 %v1718, 7
      %v1720 = vsub.s32 %v1717, %v1719
      %v1721 = vrot.slane %v1697, %v1720
      %v1723 = vunpack.c.l.s4 1987475062
      %v1724 = vunpack.c.0.s8 %v1723
      %v1725 = vlaneseq
      %v1726 = vshrl.u32 %v1725, 7
      %v1727 = vsub.s32 %v1724, %v1726
      %v1728 = vrot.slane %v1697, %v1727
      %v1730 = vunpack.c.l.s4 269488144
      %v1731 = vunpack.c.0.s8 %v1730
      %v1732 = vlaneseq
      %v1733 = vshrl.u32 %v1732, 7
      %v1734 = vsub.s32 %v1731, %v1733
      %v1735 = vrot.slane %v1700, %v1734
      %v1737 = vunpack.c.l.s4 842150450
      %v1738 = vunpack.c.0.s8 %v1737
      %v1739 = vlaneseq
      %v1740 = vshrl.u32 %v1739, 7
      %v1741 = vsub.s32 %v1738, %v1740
      %v1742 = vrot.slane %v1700, %v1741
      %v1744 = vunpack.c.l.s4 1414812756
      %v1745 = vunpack.c.0.s8 %v1744
      %v1746 = vlaneseq
      %v1747 = vshrl.u32 %v1746, 7
      %v1748 = vsub.s32 %v1745, %v1747
      %v1749 = vrot.slane %v1700, %v1748
      %v1751 = vunpack.c.l.s4 1987475062
      %v1752 = vunpack.c.0.s8 %v1751
      %v1753 = vlaneseq
      %v1754 = vshrl.u32 %v1753, 7
      %v1755 = vsub.s32 %v1752, %v1754
      %v1756 = vrot.slane %v1700, %v1755
      %v1765 = vmul.f32 %v1687, %v1707
      %v1766 = vmul.f32 %v1688, %v1714
      %v1767 = vmul.f32 %v1689, %v1721
      %v1768 = vmul.f32 %v1690, %v1728
      %v1769 = vmul.f32 %v1691, %v1735
      %v1770 = vmul.f32 %v1692, %v1742
      %v1771 = vmul.f32 %v1693, %v1749
      %v1772 = vmul.f32 %v1694, %v1756
      %1773 = vset.pattern.permute.xlu0 2
      %1774 = vperm.xlu0 %1773, %v441
      %v1775 = vpop.permute.xlu0 %1774
      %1776 = vset.pattern.permute.xlu0 2
      %1777 = vperm.xlu0 %1776, %v442
      %v1778 = vpop.permute.xlu0 %1777
      %v1780 = vunpack.c.l.s4 269488144
      %v1781 = vunpack.c.0.s8 %v1780
      %v1782 = vlaneseq
      %v1783 = vshrl.u32 %v1782, 7
      %v1784 = vsub.s32 %v1781, %v1783
      %v1785 = vrot.slane %v1775, %v1784
      %v1787 = vunpack.c.l.s4 842150450
      %v1788 = vunpack.c.0.s8 %v1787
      %v1789 = vlaneseq
      %v1790 = vshrl.u32 %v1789, 7
      %v1791 = vsub.s32 %v1788, %v1790
      %v1792 = vrot.slane %v1775, %v1791
      %v1794 = vunpack.c.l.s4 1414812756
      %v1795 = vunpack.c.0.s8 %v1794
      %v1796 = vlaneseq
      %v1797 = vshrl.u32 %v1796, 7
      %v1798 = vsub.s32 %v1795, %v1797
      %v1799 = vrot.slane %v1775, %v1798
      %v1801 = vunpack.c.l.s4 1987475062
      %v1802 = vunpack.c.0.s8 %v1801
      %v1803 = vlaneseq
      %v1804 = vshrl.u32 %v1803, 7
      %v1805 = vsub.s32 %v1802, %v1804
      %v1806 = vrot.slane %v1775, %v1805
      %v1808 = vunpack.c.l.s4 269488144
      %v1809 = vunpack.c.0.s8 %v1808
      %v1810 = vlaneseq
      %v1811 = vshrl.u32 %v1810, 7
      %v1812 = vsub.s32 %v1809, %v1811
      %v1813 = vrot.slane %v1778, %v1812
      %v1815 = vunpack.c.l.s4 842150450
      %v1816 = vunpack.c.0.s8 %v1815
      %v1817 = vlaneseq
      %v1818 = vshrl.u32 %v1817, 7
      %v1819 = vsub.s32 %v1816, %v1818
      %v1820 = vrot.slane %v1778, %v1819
      %v1822 = vunpack.c.l.s4 1414812756
      %v1823 = vunpack.c.0.s8 %v1822
      %v1824 = vlaneseq
      %v1825 = vshrl.u32 %v1824, 7
      %v1826 = vsub.s32 %v1823, %v1825
      %v1827 = vrot.slane %v1778, %v1826
      %v1829 = vunpack.c.l.s4 1987475062
      %v1830 = vunpack.c.0.s8 %v1829
      %v1831 = vlaneseq
      %v1832 = vshrl.u32 %v1831, 7
      %v1833 = vsub.s32 %v1830, %v1832
      %v1834 = vrot.slane %v1778, %v1833
      %v1843 = vadd.f32 %v1765, %v1785
      %v1844 = vadd.f32 %v1766, %v1792
      %v1845 = vadd.f32 %v1767, %v1799
      %v1846 = vadd.f32 %v1768, %v1806
      %v1847 = vadd.f32 %v1769, %v1813
      %v1848 = vadd.f32 %v1770, %v1820
      %v1849 = vadd.f32 %v1771, %v1827
      %v1850 = vadd.f32 %v1772, %v1834
      %v1851 = vxor.u32 %v1843, 2147483648
      %v1852 = vxor.u32 %v1844, 2147483648
      %v1853 = vxor.u32 %v1845, 2147483648
      %v1854 = vxor.u32 %v1846, 2147483648
      %v1855 = vxor.u32 %v1847, 2147483648
      %v1856 = vxor.u32 %v1848, 2147483648
      %v1857 = vxor.u32 %v1849, 2147483648
      %v1858 = vxor.u32 %v1850, 2147483648
      %v1859 = vmul.f32 %v1851, 1.442695
      %v1860 = vpow.pop %v1859
      %v1861 = vmul.f32 %v1852, 1.442695
      %v1862 = vpow.pop %v1861
      %v1863 = vmul.f32 %v1853, 1.442695
      %v1864 = vpow.pop %v1863
      %v1865 = vmul.f32 %v1854, 1.442695
      %v1866 = vpow.pop %v1865
      %v1867 = vmul.f32 %v1855, 1.442695
      %v1868 = vpow.pop %v1867
      %v1869 = vmul.f32 %v1856, 1.442695
      %v1870 = vpow.pop %v1869
      %v1871 = vmul.f32 %v1857, 1.442695
      %v1872 = vpow.pop %v1871
      %v1873 = vmul.f32 %v1858, 1.442695
      %v1874 = vpow.pop %v1873
      %v1875 = vadd.f32 %v1860, 1.0
      %v1876 = vadd.f32 %v1862, 1.0
      %v1877 = vadd.f32 %v1864, 1.0
      %v1878 = vadd.f32 %v1866, 1.0
      %v1879 = vadd.f32 %v1868, 1.0
      %v1880 = vadd.f32 %v1870, 1.0
      %v1881 = vadd.f32 %v1872, 1.0
      %v1882 = vadd.f32 %v1874, 1.0
      %v1883 = vrcp.pop %v1875
      %v1884 = vmul.f32 1.0, %v1883
      %v1885 = vrcp.pop %v1876
      %v1886 = vmul.f32 1.0, %v1885
      %v1887 = vrcp.pop %v1877
      %v1888 = vmul.f32 1.0, %v1887
      %v1889 = vrcp.pop %v1878
      %v1890 = vmul.f32 1.0, %v1889
      %v1891 = vrcp.pop %v1879
      %v1892 = vmul.f32 1.0, %v1891
      %v1893 = vrcp.pop %v1880
      %v1894 = vmul.f32 1.0, %v1893
      %v1895 = vrcp.pop %v1881
      %v1896 = vmul.f32 1.0, %v1895
      %v1897 = vrcp.pop %v1882
      %v1898 = vmul.f32 1.0, %v1897
      %v1899 = vmul.f32 %v1843, %v1884
      %v1900 = vmul.f32 %v1844, %v1886
      %v1901 = vmul.f32 %v1845, %v1888
      %v1902 = vmul.f32 %v1846, %v1890
      %v1903 = vmul.f32 %v1847, %v1892
      %v1904 = vmul.f32 %v1848, %v1894
      %v1905 = vmul.f32 %v1849, %v1896
      %v1906 = vmul.f32 %v1850, %v1898
      %v1907 = vld [vmem:[%s337] sm:$0xf]
      %v1908 = vunpack.c.l.bf16 %v1907
      %v1917 = vcombine.low %v1899, %v1900
      %v1918 = vcombine.low %v1901, %v1902
      %v1920 = vunpack.c.l.s4 1983009808
      %v1921 = vunpack.c.0.s8 %v1920
      %v1922 = vlaneseq
      %v1923 = vshrl.u32 %v1922, 7
      %v1924 = vsub.s32 %v1921, %v1923
      %v1925 = vrot.slane %v1917, %v1924
      %v1927 = vunpack.c.l.s4 1983009808
      %v1928 = vunpack.c.0.s8 %v1927
      %v1929 = vlaneseq
      %v1930 = vshrl.u32 %v1929, 7
      %v1931 = vsub.s32 %v1928, %v1930
      %v1932 = vrot.slane %v1918, %v1931
      %v1933 = vcombine.low %v1925, %v1932
      %v1934 = vcombine.high %v1925, %v1932
      %v1935 = vcombine.low %v1903, %v1904
      %v1936 = vcombine.low %v1905, %v1906
      %v1938 = vunpack.c.l.s4 1983009808
      %v1939 = vunpack.c.0.s8 %v1938
      %v1940 = vlaneseq
      %v1941 = vshrl.u32 %v1940, 7
      %v1942 = vsub.s32 %v1939, %v1941
      %v1943 = vrot.slane %v1935, %v1942
      %v1945 = vunpack.c.l.s4 1983009808
      %v1946 = vunpack.c.0.s8 %v1945
      %v1947 = vlaneseq
      %v1948 = vshrl.u32 %v1947, 7
      %v1949 = vsub.s32 %v1946, %v1948
      %v1950 = vrot.slane %v1936, %v1949
      %v1951 = vcombine.low %v1943, %v1950
      %v1952 = vcombine.high %v1943, %v1950
      %v1958 = vcombine.high %v1908, %v1908
      %v1960 = vld [vmem:[%s6] sm:$0xff]
      %v1961 = vld [vmem:[%s6 + $0x8] sm:$0xff]
      %1962 = vrot.lane.b32.xlu0 %v1933, 17
      %v1963 = vpop.permute.xlu0 %1962
      %1964 = vrot.lane.b32.xlu0 %v1951, 17
      %v1965 = vpop.permute.xlu0 %1964
      %1966 = vrot.lane.b32.xlu0 %v1908, 17
      %v1967 = vpop.permute.xlu0 %1966
      %1968 = vrot.lane.b32.xlu0 %v1934, 17
      %v1969 = vpop.permute.xlu0 %1968
      %1970 = vrot.lane.b32.xlu0 %v1952, 17
      %v1971 = vpop.permute.xlu0 %1970
      %1972 = vrot.lane.b32.xlu0 %v1958, 17
      %v1973 = vpop.permute.xlu0 %1972
      %v1974 = vsel %vm453, %v1963, %v1969
      %v1975 = vsel %vm453, %v1965, %v1971
      %v1976 = vsel %vm453, %v1967, %v1973
      %v1977 = vsel %vm453, %v1969, %v1963
      %v1978 = vsel %vm453, %v1971, %v1965
      %v1979 = vsel %vm453, %v1973, %v1967
      %v1980 = vmul.f32 %v1977, %v463
      %v1981 = vmul.f32 %v1974, %v467
      %v1982 = vmul.f32 %v1978, %v463
      %v1983 = vmul.f32 %v1975, %v467
      %v1984 = vmul.f32 %v1979, %v463
      %v1985 = vmul.f32 %v1976, %v467
      %v1986 = vld [vmem:[%s5] sm:$0xf]
      %v1987 = vld [vmem:[%s5 + $0x4] sm:$0xf]
      %v1988 = vpack.c.bf16 %v1982, %v1980
      %v1989 = vpack.c.bf16 %v1983, %v1981
      %v1990 = vpack.c.bf16 %v1984, %v1984
      %v1991 = vpack.c.bf16 %v1985, %v1985
      %1992 = vrot.lane.b32.xlu0 %v1933, 16
      %v1993 = vpop.permute.xlu0 %1992
      %1994 = vrot.lane.b32.xlu0 %v1951, 16
      %v1995 = vpop.permute.xlu0 %1994
      %1996 = vrot.lane.b32.xlu0 %v1908, 16
      %v1997 = vpop.permute.xlu0 %1996
      %1998 = vrot.lane.b32.xlu0 %v1934, 16
      %v1999 = vpop.permute.xlu0 %1998
      %2000 = vrot.lane.b32.xlu0 %v1952, 16
      %v2001 = vpop.permute.xlu0 %2000
      %2002 = vrot.lane.b32.xlu0 %v1958, 16
      %v2003 = vpop.permute.xlu0 %2002
      %v2004 = vsel %vm486, %v1993, %v1999
      %v2005 = vsel %vm486, %v1995, %v2001
      %v2006 = vsel %vm486, %v1997, %v2003
      %v2007 = vsel %vm486, %v1999, %v1993
      %v2008 = vsel %vm486, %v2001, %v1995
      %v2009 = vsel %vm486, %v2003, %v1997
      %v2010 = vmul.f32 %v2007, %v497
      %v2011 = vmul.f32 %v2004, %v501
      %v2012 = vmul.f32 %v2008, %v497
      %v2013 = vmul.f32 %v2005, %v501
      %v2014 = vmul.f32 %v2009, %v497
      %v2015 = vmul.f32 %v2006, %v501
      %s2016 = scalar_lea.vmem %s5, 8
      %v2017 = vld [vmem:[%s2016] sm:$0xf]
      %v2018 = vld [vmem:[%s2016 + $0x4] sm:$0xf]
      %v2019 = vpack.c.bf16 %v2012, %v2010
      %v2020 = vpack.c.bf16 %v2013, %v2011
      %v2021 = vpack.c.bf16 %v2014, %v2014
      %v2022 = vpack.c.bf16 %v2015, %v2015
      %v2025 = vunpack.c.l.b16 %v2017
      %v2026 = vunpack.c.l.b16 %v2018
      %v2027 = vpack.c.b16 %v2026, %v2025
      %vm2028 = vcmask 162816
      %v2030 = vsel %vm2028, %v2027, 0
      %v2033 = vsel %vm1358, %v2021, 0
      %v2036 = vsel %vm1358, %v2022, 0
      %2038 = vmatprep.subr.bf16.mxu0 0
      %2039 = vmatpush1.bf16.msra.mxu0 0
      %2040 = vmatprep.subr.bf16.mxu0 0
      %2041 = vmatpush1.bf16.msra.mxu0 0
      %2042 = vmatprep.subr.bf16.mxu0 0
      %2043 = vmatpush1.bf16.msra.mxu0 0
      %2044 = vmatprep.subr.bf16.mxu0 0
      %2045 = vmatpush1.bf16.msra.mxu0 0
      %2046 = vmatprep.subr.bf16.mxu0 0
      %2047 = vmatpush1.bf16.msra.mxu0 0
      %2048 = vmatprep.subr.bf16.mxu0 0
      %2049 = vmatpush1.bf16.msra.mxu0 0
      %2050 = vmatprep.subr.bf16.mxu0 %v2036
      %2051 = vmatpush1.bf16.msra.mxu0 %v2033
      %2052 = vmatprep.subr.bf16.mxu0 %v2020
      %2053 = vmatpush1.bf16.msra.mxu0 %v2019
      %2054 = vmatprep.subr.bf16.mxu0 0
      %2055 = vmatpush2.bf16.msra.mxu0 0
      %2056 = vmatprep.subr.bf16.mxu0 0
      %2057 = vmatpush2.bf16.msra.mxu0 0
      %2058 = vmatprep.subr.bf16.mxu0 0
      %2059 = vmatpush2.bf16.msra.mxu0 0
      %2060 = vmatprep.subr.bf16.mxu0 0
      %2061 = vmatpush2.bf16.msra.mxu0 0
      %2062 = vmatprep.subr.bf16.mxu0 0
      %2063 = vmatpush2.bf16.msra.mxu0 0
      %2064 = vmatprep.subr.bf16.mxu0 0
      %2065 = vmatpush2.bf16.msra.mxu0 0
      %2066 = vmatprep.subr.bf16.mxu0 0
      %2067 = vmatpush2.bf16.msra.mxu0 0
      %2068 = vmatprep.subr.bf16.mxu0 0
      %2069 = vmatpush2.bf16.msra.mxu0 0
      %2070 = vmatprep.mubr.bf16.mxu0 0
      %2071 = vmatmul.mubr.bf16.gmra.mxu0 %v2030
      %v2072 = vpop.f32.mrf.mxu0
      %v2073 = vadd.f32 0.0, %v2072
      %v2074 = vpop.f32.mrf.mxu0
      %v2075 = vadd.f32 0.0, %v2074
      %v2076 = vpop.f32.mrf.mxu0
      %v2077 = vadd.f32 0.0, %v2076
      %v2078 = vpop.f32.mrf.mxu0
      %v2079 = vadd.f32 0.0, %v2078
      %2080 = vdwg.mxu0
      %v2083 = vunpack.c.l.b16 %v1986
      %v2084 = vunpack.c.l.b16 %v1987
      %v2085 = vpack.c.b16 %v2084, %v2083
      %v2087 = vsel %vm2028, %v2085, 0
      %v2090 = vsel %vm1358, %v1990, 0
      %v2093 = vsel %vm1358, %v1991, 0
      %2095 = vmatprep.subr.bf16.mxu0 0
      %2096 = vmatpush1.bf16.msra.mxu0 0
      %2097 = vmatprep.subr.bf16.mxu0 0
      %2098 = vmatpush1.bf16.msra.mxu0 0
      %2099 = vmatprep.subr.bf16.mxu0 0
      %2100 = vmatpush1.bf16.msra.mxu0 0
      %2101 = vmatprep.subr.bf16.mxu0 0
      %2102 = vmatpush1.bf16.msra.mxu0 0
      %2103 = vmatprep.subr.bf16.mxu0 0
      %2104 = vmatpush1.bf16.msra.mxu0 0
      %2105 = vmatprep.subr.bf16.mxu0 0
      %2106 = vmatpush1.bf16.msra.mxu0 0
      %2107 = vmatprep.subr.bf16.mxu0 %v2093
      %2108 = vmatpush1.bf16.msra.mxu0 %v2090
      %2109 = vmatprep.subr.bf16.mxu0 %v1989
      %2110 = vmatpush1.bf16.msra.mxu0 %v1988
      %2111 = vmatprep.subr.bf16.mxu0 0
      %2112 = vmatpush2.bf16.msra.mxu0 0
      %2113 = vmatprep.subr.bf16.mxu0 0
      %2114 = vmatpush2.bf16.msra.mxu0 0
      %2115 = vmatprep.subr.bf16.mxu0 0
      %2116 = vmatpush2.bf16.msra.mxu0 0
      %2117 = vmatprep.subr.bf16.mxu0 0
      %2118 = vmatpush2.bf16.msra.mxu0 0
      %2119 = vmatprep.subr.bf16.mxu0 0
      %2120 = vmatpush2.bf16.msra.mxu0 0
      %2121 = vmatprep.subr.bf16.mxu0 0
      %2122 = vmatpush2.bf16.msra.mxu0 0
      %2123 = vmatprep.subr.bf16.mxu0 0
      %2124 = vmatpush2.bf16.msra.mxu0 0
      %2125 = vmatprep.subr.bf16.mxu0 0
      %2126 = vmatpush2.bf16.msra.mxu0 0
      %2127 = vmatprep.mubr.bf16.mxu0 0
      %2128 = vmatmul.mubr.bf16.gmra.mxu0 %v2087
      %v2129 = vpop.f32.mrf.mxu0
      %v2130 = vadd.f32 %v2073, %v2129
      %v2131 = vpop.f32.mrf.mxu0
      %v2132 = vadd.f32 %v2075, %v2131
      %v2133 = vpop.f32.mrf.mxu0
      %v2134 = vadd.f32 %v2077, %v2133
      %v2135 = vpop.f32.mrf.mxu0
      %v2136 = vadd.f32 %v2079, %v2135
      %2137 = vdwg.mxu0
      %2138 = vrot.lane.b32.xlu0 %v1933, 15
      %v2139 = vpop.permute.xlu0 %2138
      %2140 = vrot.lane.b32.xlu0 %v1951, 15
      %v2141 = vpop.permute.xlu0 %2140
      %2142 = vrot.lane.b32.xlu0 %v1908, 15
      %v2143 = vpop.permute.xlu0 %2142
      %2144 = vrot.lane.b32.xlu0 %v1934, 15
      %v2145 = vpop.permute.xlu0 %2144
      %2146 = vrot.lane.b32.xlu0 %v1952, 15
      %v2147 = vpop.permute.xlu0 %2146
      %2148 = vrot.lane.b32.xlu0 %v1958, 15
      %v2149 = vpop.permute.xlu0 %2148
      %v2150 = vsel %vm624, %v2139, %v2145
      %v2151 = vsel %vm624, %v2141, %v2147
      %v2152 = vsel %vm624, %v2143, %v2149
      %v2153 = vsel %vm624, %v2145, %v2139
      %v2154 = vsel %vm624, %v2147, %v2141
      %v2155 = vsel %vm624, %v2149, %v2143
      %v2156 = vmul.f32 %v2153, %v635
      %v2157 = vmul.f32 %v2150, %v639
      %v2158 = vmul.f32 %v2154, %v635
      %v2159 = vmul.f32 %v2151, %v639
      %v2160 = vmul.f32 %v2155, %v635
      %v2161 = vmul.f32 %v2152, %v639
      %s2162 = scalar_lea.vmem %s5, 16
      %v2163 = vld [vmem:[%s2162] sm:$0xf]
      %v2164 = vld [vmem:[%s2162 + $0x4] sm:$0xf]
      %v2165 = vpack.c.bf16 %v2158, %v2156
      %v2166 = vpack.c.bf16 %v2159, %v2157
      %v2167 = vpack.c.bf16 %v2160, %v2160
      %v2168 = vpack.c.bf16 %v2161, %v2161
      %v2171 = vunpack.c.l.b16 %v2163
      %v2172 = vunpack.c.l.b16 %v2164
      %v2173 = vpack.c.b16 %v2172, %v2171
      %v2175 = vsel %vm2028, %v2173, 0
      %v2178 = vsel %vm1358, %v2167, 0
      %v2181 = vsel %vm1358, %v2168, 0
      %2183 = vmatprep.subr.bf16.mxu0 0
      %2184 = vmatpush1.bf16.msra.mxu0 0
      %2185 = vmatprep.subr.bf16.mxu0 0
      %2186 = vmatpush1.bf16.msra.mxu0 0
      %2187 = vmatprep.subr.bf16.mxu0 0
      %2188 = vmatpush1.bf16.msra.mxu0 0
      %2189 = vmatprep.subr.bf16.mxu0 0
      %2190 = vmatpush1.bf16.msra.mxu0 0
      %2191 = vmatprep.subr.bf16.mxu0 0
      %2192 = vmatpush1.bf16.msra.mxu0 0
      %2193 = vmatprep.subr.bf16.mxu0 0
      %2194 = vmatpush1.bf16.msra.mxu0 0
      %2195 = vmatprep.subr.bf16.mxu0 %v2181
      %2196 = vmatpush1.bf16.msra.mxu0 %v2178
      %2197 = vmatprep.subr.bf16.mxu0 %v2166
      %2198 = vmatpush1.bf16.msra.mxu0 %v2165
      %2199 = vmatprep.subr.bf16.mxu0 0
      %2200 = vmatpush2.bf16.msra.mxu0 0
      %2201 = vmatprep.subr.bf16.mxu0 0
      %2202 = vmatpush2.bf16.msra.mxu0 0
      %2203 = vmatprep.subr.bf16.mxu0 0
      %2204 = vmatpush2.bf16.msra.mxu0 0
      %2205 = vmatprep.subr.bf16.mxu0 0
      %2206 = vmatpush2.bf16.msra.mxu0 0
      %2207 = vmatprep.subr.bf16.mxu0 0
      %2208 = vmatpush2.bf16.msra.mxu0 0
      %2209 = vmatprep.subr.bf16.mxu0 0
      %2210 = vmatpush2.bf16.msra.mxu0 0
      %2211 = vmatprep.subr.bf16.mxu0 0
      %2212 = vmatpush2.bf16.msra.mxu0 0
      %2213 = vmatprep.subr.bf16.mxu0 0
      %2214 = vmatpush2.bf16.msra.mxu0 0
      %2215 = vmatprep.mubr.bf16.mxu0 0
      %2216 = vmatmul.mubr.bf16.gmra.mxu0 %v2175
      %v2217 = vpop.f32.mrf.mxu0
      %v2218 = vadd.f32 0.0, %v2217
      %v2219 = vpop.f32.mrf.mxu0
      %v2220 = vadd.f32 0.0, %v2219
      %v2221 = vpop.f32.mrf.mxu0
      %v2222 = vadd.f32 0.0, %v2221
      %v2223 = vpop.f32.mrf.mxu0
      %v2224 = vadd.f32 0.0, %v2223
      %2225 = vdwg.mxu0
      %v2226 = vadd.f32 %v2130, %v2218
      %v2227 = vadd.f32 %v2132, %v2220
      %v2228 = vadd.f32 %v2134, %v2222
      %v2229 = vadd.f32 %v2136, %v2224
      %2230 = vrot.lane.b32.xlu0 %v1933, 1
      %v2231 = vpop.permute.xlu0 %2230
      %2232 = vrot.lane.b32.xlu0 %v1951, 1
      %v2233 = vpop.permute.xlu0 %2232
      %2234 = vrot.lane.b32.xlu0 %v1908, 1
      %v2235 = vpop.permute.xlu0 %2234
      %2236 = vrot.lane.b32.xlu0 %v1934, 1
      %v2237 = vpop.permute.xlu0 %2236
      %2238 = vrot.lane.b32.xlu0 %v1952, 1
      %v2239 = vpop.permute.xlu0 %2238
      %2240 = vrot.lane.b32.xlu0 %v1958, 1
      %v2241 = vpop.permute.xlu0 %2240
      %v2242 = vsel %vm714, %v2231, %v2237
      %v2243 = vsel %vm714, %v2233, %v2239
      %v2244 = vsel %vm714, %v2235, %v2241
      %v2245 = vsel %vm714, %v2237, %v2231
      %v2246 = vsel %vm714, %v2239, %v2233
      %v2247 = vsel %vm714, %v2241, %v2235
      %v2248 = vmul.f32 %v2245, %v725
      %v2249 = vmul.f32 %v2242, %v729
      %v2250 = vmul.f32 %v2246, %v725
      %v2251 = vmul.f32 %v2243, %v729
      %v2252 = vmul.f32 %v2247, %v725
      %v2253 = vmul.f32 %v2244, %v729
      %s2254 = scalar_lea.vmem %s5, 24
      %v2255 = vld [vmem:[%s2254] sm:$0xf]
      %v2256 = vld [vmem:[%s2254 + $0x4] sm:$0xf]
      %v2257 = vpack.c.bf16 %v2250, %v2248
      %v2258 = vpack.c.bf16 %v2251, %v2249
      %v2259 = vpack.c.bf16 %v2252, %v2252
      %v2260 = vpack.c.bf16 %v2253, %v2253
      %v2263 = vunpack.c.l.b16 %v2255
      %v2264 = vunpack.c.l.b16 %v2256
      %v2265 = vpack.c.b16 %v2264, %v2263
      %v2267 = vsel %vm2028, %v2265, 0
      %v2270 = vsel %vm1358, %v2259, 0
      %v2273 = vsel %vm1358, %v2260, 0
      %2275 = vmatprep.subr.bf16.mxu0 0
      %2276 = vmatpush1.bf16.msra.mxu0 0
      %2277 = vmatprep.subr.bf16.mxu0 0
      %2278 = vmatpush1.bf16.msra.mxu0 0
      %2279 = vmatprep.subr.bf16.mxu0 0
      %2280 = vmatpush1.bf16.msra.mxu0 0
      %2281 = vmatprep.subr.bf16.mxu0 0
      %2282 = vmatpush1.bf16.msra.mxu0 0
      %2283 = vmatprep.subr.bf16.mxu0 0
      %2284 = vmatpush1.bf16.msra.mxu0 0
      %2285 = vmatprep.subr.bf16.mxu0 0
      %2286 = vmatpush1.bf16.msra.mxu0 0
      %2287 = vmatprep.subr.bf16.mxu0 %v2273
      %2288 = vmatpush1.bf16.msra.mxu0 %v2270
      %2289 = vmatprep.subr.bf16.mxu0 %v2258
      %2290 = vmatpush1.bf16.msra.mxu0 %v2257
      %2291 = vmatprep.subr.bf16.mxu0 0
      %2292 = vmatpush2.bf16.msra.mxu0 0
      %2293 = vmatprep.subr.bf16.mxu0 0
      %2294 = vmatpush2.bf16.msra.mxu0 0
      %2295 = vmatprep.subr.bf16.mxu0 0
      %2296 = vmatpush2.bf16.msra.mxu0 0
      %2297 = vmatprep.subr.bf16.mxu0 0
      %2298 = vmatpush2.bf16.msra.mxu0 0
      %2299 = vmatprep.subr.bf16.mxu0 0
      %2300 = vmatpush2.bf16.msra.mxu0 0
      %2301 = vmatprep.subr.bf16.mxu0 0
      %2302 = vmatpush2.bf16.msra.mxu0 0
      %2303 = vmatprep.subr.bf16.mxu0 0
      %2304 = vmatpush2.bf16.msra.mxu0 0
      %2305 = vmatprep.subr.bf16.mxu0 0
      %2306 = vmatpush2.bf16.msra.mxu0 0
      %2307 = vmatprep.mubr.bf16.mxu0 0
      %2308 = vmatmul.mubr.bf16.gmra.mxu0 %v2267
      %v2309 = vpop.f32.mrf.mxu0
      %v2310 = vadd.f32 0.0, %v2309
      %v2311 = vpop.f32.mrf.mxu0
      %v2312 = vadd.f32 0.0, %v2311
      %v2313 = vpop.f32.mrf.mxu0
      %v2314 = vadd.f32 0.0, %v2313
      %v2315 = vpop.f32.mrf.mxu0
      %v2316 = vadd.f32 0.0, %v2315
      %2317 = vdwg.mxu0
      %v2318 = vadd.f32 %v2226, %v2310
      %v2319 = vadd.f32 %v2227, %v2312
      %v2320 = vadd.f32 %v2228, %v2314
      %v2321 = vadd.f32 %v2229, %v2316
      %s2322 = scalar_lea.vmem %s5, 32
      %v2323 = vld [vmem:[%s2322] sm:$0xf]
      %v2324 = vld [vmem:[%s2322 + $0x4] sm:$0xf]
      %v2325 = vpack.c.bf16 %v1951, %v1933
      %v2326 = vpack.c.bf16 %v1952, %v1934
      %v2327 = vpack.c.bf16 %v1908, %v1908
      %v2328 = vpack.c.bf16 %v1958, %v1958
      %v2331 = vunpack.c.l.b16 %v2323
      %v2332 = vunpack.c.l.b16 %v2324
      %v2333 = vpack.c.b16 %v2332, %v2331
      %v2335 = vsel %vm2028, %v2333, 0
      %v2338 = vsel %vm1358, %v2327, 0
      %v2341 = vsel %vm1358, %v2328, 0
      %2343 = vmatprep.subr.bf16.mxu0 0
      %2344 = vmatpush1.bf16.msra.mxu0 0
      %2345 = vmatprep.subr.bf16.mxu0 0
      %2346 = vmatpush1.bf16.msra.mxu0 0
      %2347 = vmatprep.subr.bf16.mxu0 0
      %2348 = vmatpush1.bf16.msra.mxu0 0
      %2349 = vmatprep.subr.bf16.mxu0 0
      %2350 = vmatpush1.bf16.msra.mxu0 0
      %2351 = vmatprep.subr.bf16.mxu0 0
      %2352 = vmatpush1.bf16.msra.mxu0 0
      %2353 = vmatprep.subr.bf16.mxu0 0
      %2354 = vmatpush1.bf16.msra.mxu0 0
      %2355 = vmatprep.subr.bf16.mxu0 %v2341
      %2356 = vmatpush1.bf16.msra.mxu0 %v2338
      %2357 = vmatprep.subr.bf16.mxu0 %v2326
      %2358 = vmatpush1.bf16.msra.mxu0 %v2325
      %2359 = vmatprep.subr.bf16.mxu0 0
      %2360 = vmatpush2.bf16.msra.mxu0 0
      %2361 = vmatprep.subr.bf16.mxu0 0
      %2362 = vmatpush2.bf16.msra.mxu0 0
      %2363 = vmatprep.subr.bf16.mxu0 0
      %2364 = vmatpush2.bf16.msra.mxu0 0
      %2365 = vmatprep.subr.bf16.mxu0 0
      %2366 = vmatpush2.bf16.msra.mxu0 0
      %2367 = vmatprep.subr.bf16.mxu0 0
      %2368 = vmatpush2.bf16.msra.mxu0 0
      %2369 = vmatprep.subr.bf16.mxu0 0
      %2370 = vmatpush2.bf16.msra.mxu0 0
      %2371 = vmatprep.subr.bf16.mxu0 0
      %2372 = vmatpush2.bf16.msra.mxu0 0
      %2373 = vmatprep.subr.bf16.mxu0 0
      %2374 = vmatpush2.bf16.msra.mxu0 0
      %2375 = vmatprep.mubr.bf16.mxu0 0
      %2376 = vmatmul.mubr.bf16.gmra.mxu0 %v2335
      %v2377 = vpop.f32.mrf.mxu0
      %v2378 = vadd.f32 0.0, %v2377
      %v2379 = vpop.f32.mrf.mxu0
      %v2380 = vadd.f32 0.0, %v2379
      %v2381 = vpop.f32.mrf.mxu0
      %v2382 = vadd.f32 0.0, %v2381
      %v2383 = vpop.f32.mrf.mxu0
      %v2384 = vadd.f32 0.0, %v2383
      %2385 = vdwg.mxu0
      %v2386 = vadd.f32 %v2318, %v2378
      %v2387 = vadd.f32 %v2319, %v2380
      %v2388 = vadd.f32 %v2320, %v2382
      %v2389 = vadd.f32 %v2321, %v2384
      %2390 = vrot.lane.b32.xlu0 %v1933, 127
      %v2391 = vpop.permute.xlu0 %2390
      %2392 = vrot.lane.b32.xlu0 %v1951, 127
      %v2393 = vpop.permute.xlu0 %2392
      %2394 = vrot.lane.b32.xlu0 %v1908, 127
      %v2395 = vpop.permute.xlu0 %2394
      %2396 = vrot.lane.b32.xlu0 %v1934, 127
      %v2397 = vpop.permute.xlu0 %2396
      %2398 = vrot.lane.b32.xlu0 %v1952, 127
      %v2399 = vpop.permute.xlu0 %2398
      %2400 = vrot.lane.b32.xlu0 %v1958, 127
      %v2401 = vpop.permute.xlu0 %2400
      %v2402 = vsel %vm864, %v2391, %v2397
      %v2403 = vsel %vm864, %v2393, %v2399
      %v2404 = vsel %vm864, %v2395, %v2401
      %v2405 = vsel %vm864, %v2397, %v2391
      %v2406 = vsel %vm864, %v2399, %v2393
      %v2407 = vsel %vm864, %v2401, %v2395
      %v2408 = vmul.f32 %v2402, %v875
      %v2409 = vmul.f32 %v2405, %v879
      %v2410 = vmul.f32 %v2403, %v875
      %v2411 = vmul.f32 %v2406, %v879
      %v2412 = vmul.f32 %v2404, %v875
      %v2413 = vmul.f32 %v2407, %v879
      %s2414 = scalar_lea.vmem %s5, 40
      %v2415 = vld [vmem:[%s2414] sm:$0xf]
      %v2416 = vld [vmem:[%s2414 + $0x4] sm:$0xf]
      %v2417 = vpack.c.bf16 %v2410, %v2408
      %v2418 = vpack.c.bf16 %v2411, %v2409
      %v2419 = vpack.c.bf16 %v2412, %v2412
      %v2420 = vpack.c.bf16 %v2413, %v2413
      %v2423 = vunpack.c.l.b16 %v2415
      %v2424 = vunpack.c.l.b16 %v2416
      %v2425 = vpack.c.b16 %v2424, %v2423
      %v2427 = vsel %vm2028, %v2425, 0
      %v2430 = vsel %vm1358, %v2419, 0
      %v2433 = vsel %vm1358, %v2420, 0
      %2435 = vmatprep.subr.bf16.mxu0 0
      %2436 = vmatpush1.bf16.msra.mxu0 0
      %2437 = vmatprep.subr.bf16.mxu0 0
      %2438 = vmatpush1.bf16.msra.mxu0 0
      %2439 = vmatprep.subr.bf16.mxu0 0
      %2440 = vmatpush1.bf16.msra.mxu0 0
      %2441 = vmatprep.subr.bf16.mxu0 0
      %2442 = vmatpush1.bf16.msra.mxu0 0
      %2443 = vmatprep.subr.bf16.mxu0 0
      %2444 = vmatpush1.bf16.msra.mxu0 0
      %2445 = vmatprep.subr.bf16.mxu0 0
      %2446 = vmatpush1.bf16.msra.mxu0 0
      %2447 = vmatprep.subr.bf16.mxu0 %v2433
      %2448 = vmatpush1.bf16.msra.mxu0 %v2430
      %2449 = vmatprep.subr.bf16.mxu0 %v2418
      %2450 = vmatpush1.bf16.msra.mxu0 %v2417
      %2451 = vmatprep.subr.bf16.mxu0 0
      %2452 = vmatpush2.bf16.msra.mxu0 0
      %2453 = vmatprep.subr.bf16.mxu0 0
      %2454 = vmatpush2.bf16.msra.mxu0 0
      %2455 = vmatprep.subr.bf16.mxu0 0
      %2456 = vmatpush2.bf16.msra.mxu0 0
      %2457 = vmatprep.subr.bf16.mxu0 0
      %2458 = vmatpush2.bf16.msra.mxu0 0
      %2459 = vmatprep.subr.bf16.mxu0 0
      %2460 = vmatpush2.bf16.msra.mxu0 0
      %2461 = vmatprep.subr.bf16.mxu0 0
      %2462 = vmatpush2.bf16.msra.mxu0 0
      %2463 = vmatprep.subr.bf16.mxu0 0
      %2464 = vmatpush2.bf16.msra.mxu0 0
      %2465 = vmatprep.subr.bf16.mxu0 0
      %2466 = vmatpush2.bf16.msra.mxu0 0
      %2467 = vmatprep.mubr.bf16.mxu0 0
      %2468 = vmatmul.mubr.bf16.gmra.mxu0 %v2427
      %v2469 = vpop.f32.mrf.mxu0
      %v2470 = vadd.f32 0.0, %v2469
      %v2471 = vpop.f32.mrf.mxu0
      %v2472 = vadd.f32 0.0, %v2471
      %v2473 = vpop.f32.mrf.mxu0
      %v2474 = vadd.f32 0.0, %v2473
      %v2475 = vpop.f32.mrf.mxu0
      %v2476 = vadd.f32 0.0, %v2475
      %2477 = vdwg.mxu0
      %v2478 = vadd.f32 %v2386, %v2470
      %v2479 = vadd.f32 %v2387, %v2472
      %v2480 = vadd.f32 %v2388, %v2474
      %v2481 = vadd.f32 %v2389, %v2476
      %2482 = vrot.lane.b32.xlu0 %v1933, 113
      %v2483 = vpop.permute.xlu0 %2482
      %2484 = vrot.lane.b32.xlu0 %v1951, 113
      %v2485 = vpop.permute.xlu0 %2484
      %2486 = vrot.lane.b32.xlu0 %v1908, 113
      %v2487 = vpop.permute.xlu0 %2486
      %2488 = vrot.lane.b32.xlu0 %v1934, 113
      %v2489 = vpop.permute.xlu0 %2488
      %2490 = vrot.lane.b32.xlu0 %v1952, 113
      %v2491 = vpop.permute.xlu0 %2490
      %2492 = vrot.lane.b32.xlu0 %v1958, 113
      %v2493 = vpop.permute.xlu0 %2492
      %v2494 = vsel %vm954, %v2483, %v2489
      %v2495 = vsel %vm954, %v2485, %v2491
      %v2496 = vsel %vm954, %v2487, %v2493
      %v2497 = vsel %vm954, %v2489, %v2483
      %v2498 = vsel %vm954, %v2491, %v2485
      %v2499 = vsel %vm954, %v2493, %v2487
      %v2500 = vmul.f32 %v2494, %v965
      %v2501 = vmul.f32 %v2497, %v969
      %v2502 = vmul.f32 %v2495, %v965
      %v2503 = vmul.f32 %v2498, %v969
      %v2504 = vmul.f32 %v2496, %v965
      %v2505 = vmul.f32 %v2499, %v969
      %s2506 = scalar_lea.vmem %s5, 48
      %v2507 = vld [vmem:[%s2506] sm:$0xf]
      %v2508 = vld [vmem:[%s2506 + $0x4] sm:$0xf]
      %v2509 = vpack.c.bf16 %v2502, %v2500
      %v2510 = vpack.c.bf16 %v2503, %v2501
      %v2511 = vpack.c.bf16 %v2504, %v2504
      %v2512 = vpack.c.bf16 %v2505, %v2505
      %v2515 = vunpack.c.l.b16 %v2507
      %v2516 = vunpack.c.l.b16 %v2508
      %v2517 = vpack.c.b16 %v2516, %v2515
      %v2519 = vsel %vm2028, %v2517, 0
      %v2522 = vsel %vm1358, %v2511, 0
      %v2525 = vsel %vm1358, %v2512, 0
      %2527 = vmatprep.subr.bf16.mxu0 0
      %2528 = vmatpush1.bf16.msra.mxu0 0
      %2529 = vmatprep.subr.bf16.mxu0 0
      %2530 = vmatpush1.bf16.msra.mxu0 0
      %2531 = vmatprep.subr.bf16.mxu0 0
      %2532 = vmatpush1.bf16.msra.mxu0 0
      %2533 = vmatprep.subr.bf16.mxu0 0
      %2534 = vmatpush1.bf16.msra.mxu0 0
      %2535 = vmatprep.subr.bf16.mxu0 0
      %2536 = vmatpush1.bf16.msra.mxu0 0
      %2537 = vmatprep.subr.bf16.mxu0 0
      %2538 = vmatpush1.bf16.msra.mxu0 0
      %2539 = vmatprep.subr.bf16.mxu0 %v2525
      %2540 = vmatpush1.bf16.msra.mxu0 %v2522
      %2541 = vmatprep.subr.bf16.mxu0 %v2510
      %2542 = vmatpush1.bf16.msra.mxu0 %v2509
      %2543 = vmatprep.subr.bf16.mxu0 0
      %2544 = vmatpush2.bf16.msra.mxu0 0
      %2545 = vmatprep.subr.bf16.mxu0 0
      %2546 = vmatpush2.bf16.msra.mxu0 0
      %2547 = vmatprep.subr.bf16.mxu0 0
      %2548 = vmatpush2.bf16.msra.mxu0 0
      %2549 = vmatprep.subr.bf16.mxu0 0
      %2550 = vmatpush2.bf16.msra.mxu0 0
      %2551 = vmatprep.subr.bf16.mxu0 0
      %2552 = vmatpush2.bf16.msra.mxu0 0
      %2553 = vmatprep.subr.bf16.mxu0 0
      %2554 = vmatpush2.bf16.msra.mxu0 0
      %2555 = vmatprep.subr.bf16.mxu0 0
      %2556 = vmatpush2.bf16.msra.mxu0 0
      %2557 = vmatprep.subr.bf16.mxu0 0
      %2558 = vmatpush2.bf16.msra.mxu0 0
      %2559 = vmatprep.mubr.bf16.mxu0 0
      %2560 = vmatmul.mubr.bf16.gmra.mxu0 %v2519
      %v2561 = vpop.f32.mrf.mxu0
      %v2562 = vadd.f32 0.0, %v2561
      %v2563 = vpop.f32.mrf.mxu0
      %v2564 = vadd.f32 0.0, %v2563
      %v2565 = vpop.f32.mrf.mxu0
      %v2566 = vadd.f32 0.0, %v2565
      %v2567 = vpop.f32.mrf.mxu0
      %v2568 = vadd.f32 0.0, %v2567
      %2569 = vdwg.mxu0
      %v2570 = vadd.f32 %v2478, %v2562
      %v2571 = vadd.f32 %v2479, %v2564
      %v2572 = vadd.f32 %v2480, %v2566
      %v2573 = vadd.f32 %v2481, %v2568
      %2574 = vrot.lane.b32.xlu0 %v1933, 112
      %v2575 = vpop.permute.xlu0 %2574
      %2576 = vrot.lane.b32.xlu0 %v1951, 112
      %v2577 = vpop.permute.xlu0 %2576
      %2578 = vrot.lane.b32.xlu0 %v1908, 112
      %v2579 = vpop.permute.xlu0 %2578
      %2580 = vrot.lane.b32.xlu0 %v1934, 112
      %v2581 = vpop.permute.xlu0 %2580
      %2582 = vrot.lane.b32.xlu0 %v1952, 112
      %v2583 = vpop.permute.xlu0 %2582
      %2584 = vrot.lane.b32.xlu0 %v1958, 112
      %v2585 = vpop.permute.xlu0 %2584
      %v2586 = vsel %vm1044, %v2575, %v2581
      %v2587 = vsel %vm1044, %v2577, %v2583
      %v2588 = vsel %vm1044, %v2579, %v2585
      %v2589 = vsel %vm1044, %v2581, %v2575
      %v2590 = vsel %vm1044, %v2583, %v2577
      %v2591 = vsel %vm1044, %v2585, %v2579
      %v2592 = vmul.f32 %v2586, %v1055
      %v2593 = vmul.f32 %v2589, %v1059
      %v2594 = vmul.f32 %v2587, %v1055
      %v2595 = vmul.f32 %v2590, %v1059
      %v2596 = vmul.f32 %v2588, %v1055
      %v2597 = vmul.f32 %v2591, %v1059
      %s2598 = scalar_lea.vmem %s5, 56
      %v2599 = vld [vmem:[%s2598] sm:$0xf]
      %v2600 = vld [vmem:[%s2598 + $0x4] sm:$0xf]
      %v2601 = vpack.c.bf16 %v2594, %v2592
      %v2602 = vpack.c.bf16 %v2595, %v2593
      %v2603 = vpack.c.bf16 %v2596, %v2596
      %v2604 = vpack.c.bf16 %v2597, %v2597
      %v2607 = vunpack.c.l.b16 %v2599
      %v2608 = vunpack.c.l.b16 %v2600
      %v2609 = vpack.c.b16 %v2608, %v2607
      %v2611 = vsel %vm2028, %v2609, 0
      %v2614 = vsel %vm1358, %v2603, 0
      %v2617 = vsel %vm1358, %v2604, 0
      %2619 = vmatprep.subr.bf16.mxu0 0
      %2620 = vmatpush1.bf16.msra.mxu0 0
      %2621 = vmatprep.subr.bf16.mxu0 0
      %2622 = vmatpush1.bf16.msra.mxu0 0
      %2623 = vmatprep.subr.bf16.mxu0 0
      %2624 = vmatpush1.bf16.msra.mxu0 0
      %2625 = vmatprep.subr.bf16.mxu0 0
      %2626 = vmatpush1.bf16.msra.mxu0 0
      %2627 = vmatprep.subr.bf16.mxu0 0
      %2628 = vmatpush1.bf16.msra.mxu0 0
      %2629 = vmatprep.subr.bf16.mxu0 0
      %2630 = vmatpush1.bf16.msra.mxu0 0
      %2631 = vmatprep.subr.bf16.mxu0 %v2617
      %2632 = vmatpush1.bf16.msra.mxu0 %v2614
      %2633 = vmatprep.subr.bf16.mxu0 %v2602
      %2634 = vmatpush1.bf16.msra.mxu0 %v2601
      %2635 = vmatprep.subr.bf16.mxu0 0
      %2636 = vmatpush2.bf16.msra.mxu0 0
      %2637 = vmatprep.subr.bf16.mxu0 0
      %2638 = vmatpush2.bf16.msra.mxu0 0
      %2639 = vmatprep.subr.bf16.mxu0 0
      %2640 = vmatpush2.bf16.msra.mxu0 0
      %2641 = vmatprep.subr.bf16.mxu0 0
      %2642 = vmatpush2.bf16.msra.mxu0 0
      %2643 = vmatprep.subr.bf16.mxu0 0
      %2644 = vmatpush2.bf16.msra.mxu0 0
      %2645 = vmatprep.subr.bf16.mxu0 0
      %2646 = vmatpush2.bf16.msra.mxu0 0
      %2647 = vmatprep.subr.bf16.mxu0 0
      %2648 = vmatpush2.bf16.msra.mxu0 0
      %2649 = vmatprep.subr.bf16.mxu0 0
      %2650 = vmatpush2.bf16.msra.mxu0 0
      %2651 = vmatprep.mubr.bf16.mxu0 0
      %2652 = vmatmul.mubr.bf16.gmra.mxu0 %v2611
      %v2653 = vpop.f32.mrf.mxu0
      %v2654 = vadd.f32 0.0, %v2653
      %v2655 = vpop.f32.mrf.mxu0
      %v2656 = vadd.f32 0.0, %v2655
      %v2657 = vpop.f32.mrf.mxu0
      %v2658 = vadd.f32 0.0, %v2657
      %v2659 = vpop.f32.mrf.mxu0
      %v2660 = vadd.f32 0.0, %v2659
      %2661 = vdwg.mxu0
      %v2662 = vadd.f32 %v2570, %v2654
      %v2663 = vadd.f32 %v2571, %v2656
      %v2664 = vadd.f32 %v2572, %v2658
      %v2665 = vadd.f32 %v2573, %v2660
      %2666 = vrot.lane.b32.xlu0 %v1933, 111
      %v2667 = vpop.permute.xlu0 %2666
      %2668 = vrot.lane.b32.xlu0 %v1951, 111
      %v2669 = vpop.permute.xlu0 %2668
      %2670 = vrot.lane.b32.xlu0 %v1908, 111
      %v2671 = vpop.permute.xlu0 %2670
      %2672 = vrot.lane.b32.xlu0 %v1934, 111
      %v2673 = vpop.permute.xlu0 %2672
      %2674 = vrot.lane.b32.xlu0 %v1952, 111
      %v2675 = vpop.permute.xlu0 %2674
      %2676 = vrot.lane.b32.xlu0 %v1958, 111
      %v2677 = vpop.permute.xlu0 %2676
      %v2678 = vsel %vm1134, %v2667, %v2673
      %v2679 = vsel %vm1134, %v2669, %v2675
      %v2680 = vsel %vm1134, %v2671, %v2677
      %v2681 = vsel %vm1134, %v2673, %v2667
      %v2682 = vsel %vm1134, %v2675, %v2669
      %v2683 = vsel %vm1134, %v2677, %v2671
      %v2684 = vmul.f32 %v2678, %v1145
      %v2685 = vmul.f32 %v2681, %v1149
      %v2686 = vmul.f32 %v2679, %v1145
      %v2687 = vmul.f32 %v2682, %v1149
      %v2688 = vmul.f32 %v2680, %v1145
      %v2689 = vmul.f32 %v2683, %v1149
      %s2690 = scalar_lea.vmem %s5, 64
      %v2691 = vld [vmem:[%s2690] sm:$0xf]
      %v2692 = vld [vmem:[%s2690 + $0x4] sm:$0xf]
      %v2693 = vpack.c.bf16 %v2686, %v2684
      %v2694 = vpack.c.bf16 %v2687, %v2685
      %v2695 = vpack.c.bf16 %v2688, %v2688
      %v2696 = vpack.c.bf16 %v2689, %v2689
      %v2699 = vunpack.c.l.b16 %v2691
      %v2700 = vunpack.c.l.b16 %v2692
      %v2701 = vpack.c.b16 %v2700, %v2699
      %v2703 = vsel %vm2028, %v2701, 0
      %v2706 = vsel %vm1358, %v2695, 0
      %v2709 = vsel %vm1358, %v2696, 0
      %2711 = vmatprep.subr.bf16.mxu0 0
      %2712 = vmatpush1.bf16.msra.mxu0 0
      %2713 = vmatprep.subr.bf16.mxu0 0
      %2714 = vmatpush1.bf16.msra.mxu0 0
      %2715 = vmatprep.subr.bf16.mxu0 0
      %2716 = vmatpush1.bf16.msra.mxu0 0
      %2717 = vmatprep.subr.bf16.mxu0 0
      %2718 = vmatpush1.bf16.msra.mxu0 0
      %2719 = vmatprep.subr.bf16.mxu0 0
      %2720 = vmatpush1.bf16.msra.mxu0 0
      %2721 = vmatprep.subr.bf16.mxu0 0
      %2722 = vmatpush1.bf16.msra.mxu0 0
      %2723 = vmatprep.subr.bf16.mxu0 %v2709
      %2724 = vmatpush1.bf16.msra.mxu0 %v2706
      %2725 = vmatprep.subr.bf16.mxu0 %v2694
      %2726 = vmatpush1.bf16.msra.mxu0 %v2693
      %2727 = vmatprep.subr.bf16.mxu0 0
      %2728 = vmatpush2.bf16.msra.mxu0 0
      %2729 = vmatprep.subr.bf16.mxu0 0
      %2730 = vmatpush2.bf16.msra.mxu0 0
      %2731 = vmatprep.subr.bf16.mxu0 0
      %2732 = vmatpush2.bf16.msra.mxu0 0
      %2733 = vmatprep.subr.bf16.mxu0 0
      %2734 = vmatpush2.bf16.msra.mxu0 0
      %2735 = vmatprep.subr.bf16.mxu0 0
      %2736 = vmatpush2.bf16.msra.mxu0 0
      %2737 = vmatprep.subr.bf16.mxu0 0
      %2738 = vmatpush2.bf16.msra.mxu0 0
      %2739 = vmatprep.subr.bf16.mxu0 0
      %2740 = vmatpush2.bf16.msra.mxu0 0
      %2741 = vmatprep.subr.bf16.mxu0 0
      %2742 = vmatpush2.bf16.msra.mxu0 0
      %2743 = vmatprep.mubr.bf16.mxu0 0
      %2744 = vmatmul.mubr.bf16.gmra.mxu0 %v2703
      %v2745 = vpop.f32.mrf.mxu0
      %v2746 = vadd.f32 0.0, %v2745
      %v2747 = vpop.f32.mrf.mxu0
      %v2748 = vadd.f32 0.0, %v2747
      %v2749 = vpop.f32.mrf.mxu0
      %v2750 = vadd.f32 0.0, %v2749
      %v2751 = vpop.f32.mrf.mxu0
      %v2752 = vadd.f32 0.0, %v2751
      %2753 = vdwg.mxu0
      %v2754 = vadd.f32 %v2662, %v2746
      %v2755 = vadd.f32 %v2663, %v2748
      %v2756 = vadd.f32 %v2664, %v2750
      %v2757 = vadd.f32 %v2665, %v2752
      %2759 = vset.pattern.permute.xlu0 3
      %2760 = vperm.xlu0 %2759, %v1960
      %v2761 = vpop.permute.xlu0 %2760
      %2764 = vset.pattern.permute.xlu0 3
      %2765 = vperm.xlu0 %2764, %v1961
      %v2766 = vpop.permute.xlu0 %2765
      %v2768 = vadd.f32 %v2754, %v2761
      %v2769 = vadd.f32 %v2755, %v2761
      %v2770 = vadd.f32 %v2756, %v2766
      %v2771 = vadd.f32 %v2757, %v2766
      %v2776 = vcombine.low %v2768, %v2769
      %v2777 = vcombine.high %v2768, %v2769
      %v2779 = vunpack.c.l.s4 1983009808
      %v2780 = vunpack.c.0.s8 %v2779
      %v2781 = vlaneseq
      %v2782 = vshrl.u32 %v2781, 7
      %v2783 = vsub.s32 %v2780, %v2782
      %v2784 = vrot.slane %v2776, %v2783
      %v2786 = vunpack.c.l.s4 1983009808
      %v2787 = vunpack.c.0.s8 %v2786
      %v2788 = vlaneseq
      %v2789 = vshrl.u32 %v2788, 7
      %v2790 = vsub.s32 %v2787, %v2789
      %v2791 = vrot.slane %v2777, %v2790
      %v2792 = vcombine.high %v2784, %v2784
      %v2793 = vcombine.high %v2791, %v2791
      %v2794 = vcombine.low %v2770, %v2771
      %v2795 = vcombine.high %v2770, %v2771
      %v2797 = vunpack.c.l.s4 1983009808
      %v2798 = vunpack.c.0.s8 %v2797
      %v2799 = vlaneseq
      %v2800 = vshrl.u32 %v2799, 7
      %v2801 = vsub.s32 %v2798, %v2800
      %v2802 = vrot.slane %v2794, %v2801
      %v2804 = vunpack.c.l.s4 1983009808
      %v2805 = vunpack.c.0.s8 %v2804
      %v2806 = vlaneseq
      %v2807 = vshrl.u32 %v2806, 7
      %v2808 = vsub.s32 %v2805, %v2807
      %v2809 = vrot.slane %v2795, %v2808
      %v2810 = vcombine.high %v2802, %v2802
      %v2811 = vcombine.high %v2809, %v2809
      %v2821 = vunpack.c.l.s4 1983009808
      %v2822 = vunpack.c.0.s8 %v2821
      %v2823 = vlaneseq
      %v2824 = vshrl.u32 %v2823, 7
      %v2825 = vsub.s32 %v2822, %v2824
      %v2826 = vrot.slane %v2784, %v2825
      %v2827 = vcombine.high %v2826, %v2826
      %v2829 = vunpack.c.l.s4 1983009808
      %v2830 = vunpack.c.0.s8 %v2829
      %v2831 = vlaneseq
      %v2832 = vshrl.u32 %v2831, 7
      %v2833 = vsub.s32 %v2830, %v2832
      %v2834 = vrot.slane %v2792, %v2833
      %v2835 = vcombine.high %v2834, %v2834
      %v2837 = vunpack.c.l.s4 1983009808
      %v2838 = vunpack.c.0.s8 %v2837
      %v2839 = vlaneseq
      %v2840 = vshrl.u32 %v2839, 7
      %v2841 = vsub.s32 %v2838, %v2840
      %v2842 = vrot.slane %v2791, %v2841
      %v2843 = vcombine.high %v2842, %v2842
      %v2845 = vunpack.c.l.s4 1983009808
      %v2846 = vunpack.c.0.s8 %v2845
      %v2847 = vlaneseq
      %v2848 = vshrl.u32 %v2847, 7
      %v2849 = vsub.s32 %v2846, %v2848
      %v2850 = vrot.slane %v2793, %v2849
      %v2851 = vcombine.high %v2850, %v2850
      %v2853 = vunpack.c.l.s4 1983009808
      %v2854 = vunpack.c.0.s8 %v2853
      %v2855 = vlaneseq
      %v2856 = vshrl.u32 %v2855, 7
      %v2857 = vsub.s32 %v2854, %v2856
      %v2858 = vrot.slane %v2802, %v2857
      %v2859 = vcombine.high %v2858, %v2858
      %v2861 = vunpack.c.l.s4 1983009808
      %v2862 = vunpack.c.0.s8 %v2861
      %v2863 = vlaneseq
      %v2864 = vshrl.u32 %v2863, 7
      %v2865 = vsub.s32 %v2862, %v2864
      %v2866 = vrot.slane %v2810, %v2865
      %v2867 = vcombine.high %v2866, %v2866
      %v2869 = vunpack.c.l.s4 1983009808
      %v2870 = vunpack.c.0.s8 %v2869
      %v2871 = vlaneseq
      %v2872 = vshrl.u32 %v2871, 7
      %v2873 = vsub.s32 %v2870, %v2872
      %v2874 = vrot.slane %v2809, %v2873
      %v2875 = vcombine.high %v2874, %v2874
      %v2877 = vunpack.c.l.s4 1983009808
      %v2878 = vunpack.c.0.s8 %v2877
      %v2879 = vlaneseq
      %v2880 = vshrl.u32 %v2879, 7
      %v2881 = vsub.s32 %v2878, %v2880
      %v2882 = vrot.slane %v2811, %v2881
      %v2883 = vcombine.high %v2882, %v2882
      %v2900 = vsel %vm1358, %v2826, 0.0
      %v2901 = vsel %vm1358, %v2827, 0.0
      %v2902 = vadd.f32 %v2900, %v2901
      %2903 = vadd.xlane.f32.xlu0 %v2902
      %v2904 = vpop.xlane.xlu0 %2903
      %v2905 = vsel %vm1358, %v2834, 0.0
      %v2906 = vsel %vm1358, %v2835, 0.0
      %v2907 = vadd.f32 %v2905, %v2906
      %2908 = vadd.xlane.f32.xlu0 %v2907
      %v2909 = vpop.xlane.xlu0 %2908
      %v2910 = vsel %vm1358, %v2842, 0.0
      %v2911 = vsel %vm1358, %v2843, 0.0
      %v2912 = vadd.f32 %v2910, %v2911
      %2913 = vadd.xlane.f32.xlu0 %v2912
      %v2914 = vpop.xlane.xlu0 %2913
      %v2915 = vsel %vm1358, %v2850, 0.0
      %v2916 = vsel %vm1358, %v2851, 0.0
      %v2917 = vadd.f32 %v2915, %v2916
      %2918 = vadd.xlane.f32.xlu0 %v2917
      %v2919 = vpop.xlane.xlu0 %2918
      %v2920 = vsel %vm1358, %v2858, 0.0
      %v2921 = vsel %vm1358, %v2859, 0.0
      %v2922 = vadd.f32 %v2920, %v2921
      %2923 = vadd.xlane.f32.xlu0 %v2922
      %v2924 = vpop.xlane.xlu0 %2923
      %v2925 = vsel %vm1358, %v2866, 0.0
      %v2926 = vsel %vm1358, %v2867, 0.0
      %v2927 = vadd.f32 %v2925, %v2926
      %2928 = vadd.xlane.f32.xlu0 %v2927
      %v2929 = vpop.xlane.xlu0 %2928
      %v2930 = vsel %vm1358, %v2874, 0.0
      %v2931 = vsel %vm1358, %v2875, 0.0
      %v2932 = vadd.f32 %v2930, %v2931
      %2933 = vadd.xlane.f32.xlu0 %v2932
      %v2934 = vpop.xlane.xlu0 %2933
      %v2935 = vsel %vm1358, %v2882, 0.0
      %v2936 = vsel %vm1358, %v2883, 0.0
      %v2937 = vadd.f32 %v2935, %v2936
      %2938 = vadd.xlane.f32.xlu0 %v2937
      %v2939 = vpop.xlane.xlu0 %2938
      %v2940 = vsel %vm1358, %v2904, 0.0
      %v2941 = vrot.slane %v2940, 4
      %v2942 = vadd.f32 %v2940, %v2941
      %v2943 = vrot.slane %v2942, 2
      %v2944 = vadd.f32 %v2942, %v2943
      %v2945 = vrot.slane %v2944, 1
      %v2946 = vadd.f32 %v2944, %v2945
      %v2947 = vsel %vm1358, %v2909, 0.0
      %v2948 = vrot.slane %v2947, 4
      %v2949 = vadd.f32 %v2947, %v2948
      %v2950 = vrot.slane %v2949, 2
      %v2951 = vadd.f32 %v2949, %v2950
      %v2952 = vrot.slane %v2951, 1
      %v2953 = vadd.f32 %v2951, %v2952
      %v2954 = vsel %vm1358, %v2914, 0.0
      %v2955 = vrot.slane %v2954, 4
      %v2956 = vadd.f32 %v2954, %v2955
      %v2957 = vrot.slane %v2956, 2
      %v2958 = vadd.f32 %v2956, %v2957
      %v2959 = vrot.slane %v2958, 1
      %v2960 = vadd.f32 %v2958, %v2959
      %v2961 = vsel %vm1358, %v2919, 0.0
      %v2962 = vrot.slane %v2961, 4
      %v2963 = vadd.f32 %v2961, %v2962
      %v2964 = vrot.slane %v2963, 2
      %v2965 = vadd.f32 %v2963, %v2964
      %v2966 = vrot.slane %v2965, 1
      %v2967 = vadd.f32 %v2965, %v2966
      %v2968 = vsel %vm1358, %v2924, 0.0
      %v2969 = vrot.slane %v2968, 4
      %v2970 = vadd.f32 %v2968, %v2969
      %v2971 = vrot.slane %v2970, 2
      %v2972 = vadd.f32 %v2970, %v2971
      %v2973 = vrot.slane %v2972, 1
      %v2974 = vadd.f32 %v2972, %v2973
      %v2975 = vsel %vm1358, %v2929, 0.0
      %v2976 = vrot.slane %v2975, 4
      %v2977 = vadd.f32 %v2975, %v2976
      %v2978 = vrot.slane %v2977, 2
      %v2979 = vadd.f32 %v2977, %v2978
      %v2980 = vrot.slane %v2979, 1
      %v2981 = vadd.f32 %v2979, %v2980
      %v2982 = vsel %vm1358, %v2934, 0.0
      %v2983 = vrot.slane %v2982, 4
      %v2984 = vadd.f32 %v2982, %v2983
      %v2985 = vrot.slane %v2984, 2
      %v2986 = vadd.f32 %v2984, %v2985
      %v2987 = vrot.slane %v2986, 1
      %v2988 = vadd.f32 %v2986, %v2987
      %v2989 = vsel %vm1358, %v2939, 0.0
      %v2990 = vrot.slane %v2989, 4
      %v2991 = vadd.f32 %v2989, %v2990
      %v2992 = vrot.slane %v2991, 2
      %v2993 = vadd.f32 %v2991, %v2992
      %v2994 = vrot.slane %v2993, 1
      %v2995 = vadd.f32 %v2993, %v2994
      %v2996 = vmul.f32 %v2946, 0.001953125
      %v2997 = vmul.f32 %v2953, 0.001953125
      %v2998 = vmul.f32 %v2960, 0.001953125
      %v2999 = vmul.f32 %v2967, 0.001953125
      %v3000 = vmul.f32 %v2974, 0.001953125
      %v3001 = vmul.f32 %v2981, 0.001953125
      %v3002 = vmul.f32 %v2988, 0.001953125
      %v3003 = vmul.f32 %v2995, 0.001953125
      %v3004 = vsub.f32 %v2784, %v2996
      %v3005 = vsub.f32 %v2792, %v2997
      %v3006 = vsub.f32 %v2791, %v2998
      %v3007 = vsub.f32 %v2793, %v2999
      %v3008 = vsub.f32 %v2802, %v3000
      %v3009 = vsub.f32 %v2810, %v3001
      %v3010 = vsub.f32 %v2809, %v3002
      %v3011 = vsub.f32 %v2811, %v3003
      %v3012 = vmul.f32 %v3004, %v3004
      %v3013 = vmul.f32 %v3005, %v3005
      %v3014 = vmul.f32 %v3006, %v3006
      %v3015 = vmul.f32 %v3007, %v3007
      %v3016 = vmul.f32 %v3008, %v3008
      %v3017 = vmul.f32 %v3009, %v3009
      %v3018 = vmul.f32 %v3010, %v3010
      %v3019 = vmul.f32 %v3011, %v3011
      %v3029 = vunpack.c.l.s4 1983009808
      %v3030 = vunpack.c.0.s8 %v3029
      %v3031 = vlaneseq
      %v3032 = vshrl.u32 %v3031, 7
      %v3033 = vsub.s32 %v3030, %v3032
      %v3034 = vrot.slane %v3012, %v3033
      %v3035 = vcombine.high %v3034, %v3034
      %v3037 = vunpack.c.l.s4 1983009808
      %v3038 = vunpack.c.0.s8 %v3037
      %v3039 = vlaneseq
      %v3040 = vshrl.u32 %v3039, 7
      %v3041 = vsub.s32 %v3038, %v3040
      %v3042 = vrot.slane %v3013, %v3041
      %v3043 = vcombine.high %v3042, %v3042
      %v3045 = vunpack.c.l.s4 1983009808
      %v3046 = vunpack.c.0.s8 %v3045
      %v3047 = vlaneseq
      %v3048 = vshrl.u32 %v3047, 7
      %v3049 = vsub.s32 %v3046, %v3048
      %v3050 = vrot.slane %v3014, %v3049
      %v3051 = vcombine.high %v3050, %v3050
      %v3053 = vunpack.c.l.s4 1983009808
      %v3054 = vunpack.c.0.s8 %v3053
      %v3055 = vlaneseq
      %v3056 = vshrl.u32 %v3055, 7
      %v3057 = vsub.s32 %v3054, %v3056
      %v3058 = vrot.slane %v3015, %v3057
      %v3059 = vcombine.high %v3058, %v3058
      %v3061 = vunpack.c.l.s4 1983009808
      %v3062 = vunpack.c.0.s8 %v3061
      %v3063 = vlaneseq
      %v3064 = vshrl.u32 %v3063, 7
      %v3065 = vsub.s32 %v3062, %v3064
      %v3066 = vrot.slane %v3016, %v3065
      %v3067 = vcombine.high %v3066, %v3066
      %v3069 = vunpack.c.l.s4 1983009808
      %v3070 = vunpack.c.0.s8 %v3069
      %v3071 = vlaneseq
      %v3072 = vshrl.u32 %v3071, 7
      %v3073 = vsub.s32 %v3070, %v3072
      %v3074 = vrot.slane %v3017, %v3073
      %v3075 = vcombine.high %v3074, %v3074
      %v3077 = vunpack.c.l.s4 1983009808
      %v3078 = vunpack.c.0.s8 %v3077
      %v3079 = vlaneseq
      %v3080 = vshrl.u32 %v3079, 7
      %v3081 = vsub.s32 %v3078, %v3080
      %v3082 = vrot.slane %v3018, %v3081
      %v3083 = vcombine.high %v3082, %v3082
      %v3085 = vunpack.c.l.s4 1983009808
      %v3086 = vunpack.c.0.s8 %v3085
      %v3087 = vlaneseq
      %v3088 = vshrl.u32 %v3087, 7
      %v3089 = vsub.s32 %v3086, %v3088
      %v3090 = vrot.slane %v3019, %v3089
      %v3091 = vcombine.high %v3090, %v3090
      %v3108 = vsel %vm1358, %v3034, 0.0
      %v3109 = vsel %vm1358, %v3035, 0.0
      %v3110 = vadd.f32 %v3108, %v3109
      %3111 = vadd.xlane.f32.xlu0 %v3110
      %v3112 = vpop.xlane.xlu0 %3111
      %v3113 = vsel %vm1358, %v3042, 0.0
      %v3114 = vsel %vm1358, %v3043, 0.0
      %v3115 = vadd.f32 %v3113, %v3114
      %3116 = vadd.xlane.f32.xlu0 %v3115
      %v3117 = vpop.xlane.xlu0 %3116
      %v3118 = vsel %vm1358, %v3050, 0.0
      %v3119 = vsel %vm1358, %v3051, 0.0
      %v3120 = vadd.f32 %v3118, %v3119
      %3121 = vadd.xlane.f32.xlu0 %v3120
      %v3122 = vpop.xlane.xlu0 %3121
      %v3123 = vsel %vm1358, %v3058, 0.0
      %v3124 = vsel %vm1358, %v3059, 0.0
      %v3125 = vadd.f32 %v3123, %v3124
      %3126 = vadd.xlane.f32.xlu0 %v3125
      %v3127 = vpop.xlane.xlu0 %3126
      %v3128 = vsel %vm1358, %v3066, 0.0
      %v3129 = vsel %vm1358, %v3067, 0.0
      %v3130 = vadd.f32 %v3128, %v3129
      %3131 = vadd.xlane.f32.xlu0 %v3130
      %v3132 = vpop.xlane.xlu0 %3131
      %v3133 = vsel %vm1358, %v3074, 0.0
      %v3134 = vsel %vm1358, %v3075, 0.0
      %v3135 = vadd.f32 %v3133, %v3134
      %3136 = vadd.xlane.f32.xlu0 %v3135
      %v3137 = vpop.xlane.xlu0 %3136
      %v3138 = vsel %vm1358, %v3082, 0.0
      %v3139 = vsel %vm1358, %v3083, 0.0
      %v3140 = vadd.f32 %v3138, %v3139
      %3141 = vadd.xlane.f32.xlu0 %v3140
      %v3142 = vpop.xlane.xlu0 %3141
      %v3143 = vsel %vm1358, %v3090, 0.0
      %v3144 = vsel %vm1358, %v3091, 0.0
      %v3145 = vadd.f32 %v3143, %v3144
      %3146 = vadd.xlane.f32.xlu0 %v3145
      %v3147 = vpop.xlane.xlu0 %3146
      %v3148 = vsel %vm1358, %v3112, 0.0
      %v3149 = vrot.slane %v3148, 4
      %v3150 = vadd.f32 %v3148, %v3149
      %v3151 = vrot.slane %v3150, 2
      %v3152 = vadd.f32 %v3150, %v3151
      %v3153 = vrot.slane %v3152, 1
      %v3154 = vadd.f32 %v3152, %v3153
      %v3155 = vsel %vm1358, %v3117, 0.0
      %v3156 = vrot.slane %v3155, 4
      %v3157 = vadd.f32 %v3155, %v3156
      %v3158 = vrot.slane %v3157, 2
      %v3159 = vadd.f32 %v3157, %v3158
      %v3160 = vrot.slane %v3159, 1
      %v3161 = vadd.f32 %v3159, %v3160
      %v3162 = vsel %vm1358, %v3122, 0.0
      %v3163 = vrot.slane %v3162, 4
      %v3164 = vadd.f32 %v3162, %v3163
      %v3165 = vrot.slane %v3164, 2
      %v3166 = vadd.f32 %v3164, %v3165
      %v3167 = vrot.slane %v3166, 1
      %v3168 = vadd.f32 %v3166, %v3167
      %v3169 = vsel %vm1358, %v3127, 0.0
      %v3170 = vrot.slane %v3169, 4
      %v3171 = vadd.f32 %v3169, %v3170
      %v3172 = vrot.slane %v3171, 2
      %v3173 = vadd.f32 %v3171, %v3172
      %v3174 = vrot.slane %v3173, 1
      %v3175 = vadd.f32 %v3173, %v3174
      %v3176 = vsel %vm1358, %v3132, 0.0
      %v3177 = vrot.slane %v3176, 4
      %v3178 = vadd.f32 %v3176, %v3177
      %v3179 = vrot.slane %v3178, 2
      %v3180 = vadd.f32 %v3178, %v3179
      %v3181 = vrot.slane %v3180, 1
      %v3182 = vadd.f32 %v3180, %v3181
      %v3183 = vsel %vm1358, %v3137, 0.0
      %v3184 = vrot.slane %v3183, 4
      %v3185 = vadd.f32 %v3183, %v3184
      %v3186 = vrot.slane %v3185, 2
      %v3187 = vadd.f32 %v3185, %v3186
      %v3188 = vrot.slane %v3187, 1
      %v3189 = vadd.f32 %v3187, %v3188
      %v3190 = vsel %vm1358, %v3142, 0.0
      %v3191 = vrot.slane %v3190, 4
      %v3192 = vadd.f32 %v3190, %v3191
      %v3193 = vrot.slane %v3192, 2
      %v3194 = vadd.f32 %v3192, %v3193
      %v3195 = vrot.slane %v3194, 1
      %v3196 = vadd.f32 %v3194, %v3195
      %v3197 = vsel %vm1358, %v3147, 0.0
      %v3198 = vrot.slane %v3197, 4
      %v3199 = vadd.f32 %v3197, %v3198
      %v3200 = vrot.slane %v3199, 2
      %v3201 = vadd.f32 %v3199, %v3200
      %v3202 = vrot.slane %v3201, 1
      %v3203 = vadd.f32 %v3201, %v3202
      %v3204 = vmul.f32 %v3154, 0.001953125
      %v3205 = vmul.f32 %v3161, 0.001953125
      %v3206 = vmul.f32 %v3168, 0.001953125
      %v3207 = vmul.f32 %v3175, 0.001953125
      %v3208 = vmul.f32 %v3182, 0.001953125
      %v3209 = vmul.f32 %v3189, 0.001953125
      %v3210 = vmul.f32 %v3196, 0.001953125
      %v3211 = vmul.f32 %v3203, 0.001953125
      %v3212 = vadd.f32 %v3204, 1e-05
      %v3213 = vadd.f32 %v3205, 1e-05
      %v3214 = vadd.f32 %v3206, 1e-05
      %v3215 = vadd.f32 %v3207, 1e-05
      %v3216 = vadd.f32 %v3208, 1e-05
      %v3217 = vadd.f32 %v3209, 1e-05
      %v3218 = vadd.f32 %v3210, 1e-05
      %v3219 = vadd.f32 %v3211, 1e-05
      %v3220 = vrsqrt.pop %v3212
      %v3221 = vrsqrt.pop %v3213
      %v3222 = vrsqrt.pop %v3214
      %v3223 = vrsqrt.pop %v3215
      %v3224 = vrsqrt.pop %v3216
      %v3225 = vrsqrt.pop %v3217
      %v3226 = vrsqrt.pop %v3218
      %v3227 = vrsqrt.pop %v3219
      %v3228 = vmul.f32 %v3004, %v3220
      %v3229 = vmul.f32 %v3005, %v3221
      %v3230 = vmul.f32 %v3006, %v3222
      %v3231 = vmul.f32 %v3007, %v3223
      %v3232 = vmul.f32 %v3008, %v3224
      %v3233 = vmul.f32 %v3009, %v3225
      %v3234 = vmul.f32 %v3010, %v3226
      %v3235 = vmul.f32 %v3011, %v3227
      %3236 = vset.pattern.permute.xlu0 4
      %3237 = vperm.xlu0 %3236, %v1960
      %v3238 = vpop.permute.xlu0 %3237
      %3239 = vset.pattern.permute.xlu0 4
      %3240 = vperm.xlu0 %3239, %v1961
      %v3241 = vpop.permute.xlu0 %3240
      %v3243 = vunpack.c.l.s4 269488144
      %v3244 = vunpack.c.0.s8 %v3243
      %v3245 = vlaneseq
      %v3246 = vshrl.u32 %v3245, 7
      %v3247 = vsub.s32 %v3244, %v3246
      %v3248 = vrot.slane %v3238, %v3247
      %v3250 = vunpack.c.l.s4 842150450
      %v3251 = vunpack.c.0.s8 %v3250
      %v3252 = vlaneseq
      %v3253 = vshrl.u32 %v3252, 7
      %v3254 = vsub.s32 %v3251, %v3253
      %v3255 = vrot.slane %v3238, %v3254
      %v3257 = vunpack.c.l.s4 1414812756
      %v3258 = vunpack.c.0.s8 %v3257
      %v3259 = vlaneseq
      %v3260 = vshrl.u32 %v3259, 7
      %v3261 = vsub.s32 %v3258, %v3260
      %v3262 = vrot.slane %v3238, %v3261
      %v3264 = vunpack.c.l.s4 1987475062
      %v3265 = vunpack.c.0.s8 %v3264
      %v3266 = vlaneseq
      %v3267 = vshrl.u32 %v3266, 7
      %v3268 = vsub.s32 %v3265, %v3267
      %v3269 = vrot.slane %v3238, %v3268
      %v3271 = vunpack.c.l.s4 269488144
      %v3272 = vunpack.c.0.s8 %v3271
      %v3273 = vlaneseq
      %v3274 = vshrl.u32 %v3273, 7
      %v3275 = vsub.s32 %v3272, %v3274
      %v3276 = vrot.slane %v3241, %v3275
      %v3278 = vunpack.c.l.s4 842150450
      %v3279 = vunpack.c.0.s8 %v3278
      %v3280 = vlaneseq
      %v3281 = vshrl.u32 %v3280, 7
      %v3282 = vsub.s32 %v3279, %v3281
      %v3283 = vrot.slane %v3241, %v3282
      %v3285 = vunpack.c.l.s4 1414812756
      %v3286 = vunpack.c.0.s8 %v3285
      %v3287 = vlaneseq
      %v3288 = vshrl.u32 %v3287, 7
      %v3289 = vsub.s32 %v3286, %v3288
      %v3290 = vrot.slane %v3241, %v3289
      %v3292 = vunpack.c.l.s4 1987475062
      %v3293 = vunpack.c.0.s8 %v3292
      %v3294 = vlaneseq
      %v3295 = vshrl.u32 %v3294, 7
      %v3296 = vsub.s32 %v3293, %v3295
      %v3297 = vrot.slane %v3241, %v3296
      %v3306 = vmul.f32 %v3228, %v3248
      %v3307 = vmul.f32 %v3229, %v3255
      %v3308 = vmul.f32 %v3230, %v3262
      %v3309 = vmul.f32 %v3231, %v3269
      %v3310 = vmul.f32 %v3232, %v3276
      %v3311 = vmul.f32 %v3233, %v3283
      %v3312 = vmul.f32 %v3234, %v3290
      %v3313 = vmul.f32 %v3235, %v3297
      %3314 = vset.pattern.permute.xlu0 5
      %3315 = vperm.xlu0 %3314, %v1960
      %v3316 = vpop.permute.xlu0 %3315
      %3317 = vset.pattern.permute.xlu0 5
      %3318 = vperm.xlu0 %3317, %v1961
      %v3319 = vpop.permute.xlu0 %3318
      %v3321 = vunpack.c.l.s4 269488144
      %v3322 = vunpack.c.0.s8 %v3321
      %v3323 = vlaneseq
      %v3324 = vshrl.u32 %v3323, 7
      %v3325 = vsub.s32 %v3322, %v3324
      %v3326 = vrot.slane %v3316, %v3325
      %v3328 = vunpack.c.l.s4 842150450
      %v3329 = vunpack.c.0.s8 %v3328
      %v3330 = vlaneseq
      %v3331 = vshrl.u32 %v3330, 7
      %v3332 = vsub.s32 %v3329, %v3331
      %v3333 = vrot.slane %v3316, %v3332
      %v3335 = vunpack.c.l.s4 1414812756
      %v3336 = vunpack.c.0.s8 %v3335
      %v3337 = vlaneseq
      %v3338 = vshrl.u32 %v3337, 7
      %v3339 = vsub.s32 %v3336, %v3338
      %v3340 = vrot.slane %v3316, %v3339
      %v3342 = vunpack.c.l.s4 1987475062
      %v3343 = vunpack.c.0.s8 %v3342
      %v3344 = vlaneseq
      %v3345 = vshrl.u32 %v3344, 7
      %v3346 = vsub.s32 %v3343, %v3345
      %v3347 = vrot.slane %v3316, %v3346
      %v3349 = vunpack.c.l.s4 269488144
      %v3350 = vunpack.c.0.s8 %v3349
      %v3351 = vlaneseq
      %v3352 = vshrl.u32 %v3351, 7
      %v3353 = vsub.s32 %v3350, %v3352
      %v3354 = vrot.slane %v3319, %v3353
      %v3356 = vunpack.c.l.s4 842150450
      %v3357 = vunpack.c.0.s8 %v3356
      %v3358 = vlaneseq
      %v3359 = vshrl.u32 %v3358, 7
      %v3360 = vsub.s32 %v3357, %v3359
      %v3361 = vrot.slane %v3319, %v3360
      %v3363 = vunpack.c.l.s4 1414812756
      %v3364 = vunpack.c.0.s8 %v3363
      %v3365 = vlaneseq
      %v3366 = vshrl.u32 %v3365, 7
      %v3367 = vsub.s32 %v3364, %v3366
      %v3368 = vrot.slane %v3319, %v3367
      %v3370 = vunpack.c.l.s4 1987475062
      %v3371 = vunpack.c.0.s8 %v3370
      %v3372 = vlaneseq
      %v3373 = vshrl.u32 %v3372, 7
      %v3374 = vsub.s32 %v3371, %v3373
      %v3375 = vrot.slane %v3319, %v3374
      %v3384 = vadd.f32 %v3306, %v3326
      %v3385 = vadd.f32 %v3307, %v3333
      %v3386 = vadd.f32 %v3308, %v3340
      %v3387 = vadd.f32 %v3309, %v3347
      %v3388 = vadd.f32 %v3310, %v3354
      %v3389 = vadd.f32 %v3311, %v3361
      %v3390 = vadd.f32 %v3312, %v3368
      %v3391 = vadd.f32 %v3313, %v3375
      %v3392 = vxor.u32 %v3384, 2147483648
      %v3393 = vxor.u32 %v3385, 2147483648
      %v3394 = vxor.u32 %v3386, 2147483648
      %v3395 = vxor.u32 %v3387, 2147483648
      %v3396 = vxor.u32 %v3388, 2147483648
      %v3397 = vxor.u32 %v3389, 2147483648
      %v3398 = vxor.u32 %v3390, 2147483648
      %v3399 = vxor.u32 %v3391, 2147483648
      %v3400 = vmul.f32 %v3392, 1.442695
      %v3401 = vpow.pop %v3400
      %v3402 = vmul.f32 %v3393, 1.442695
      %v3403 = vpow.pop %v3402
      %v3404 = vmul.f32 %v3394, 1.442695
      %v3405 = vpow.pop %v3404
      %v3406 = vmul.f32 %v3395, 1.442695
      %v3407 = vpow.pop %v3406
      %v3408 = vmul.f32 %v3396, 1.442695
      %v3409 = vpow.pop %v3408
      %v3410 = vmul.f32 %v3397, 1.442695
      %v3411 = vpow.pop %v3410
      %v3412 = vmul.f32 %v3398, 1.442695
      %v3413 = vpow.pop %v3412
      %v3414 = vmul.f32 %v3399, 1.442695
      %v3415 = vpow.pop %v3414
      %v3416 = vadd.f32 %v3401, 1.0
      %v3417 = vadd.f32 %v3403, 1.0
      %v3418 = vadd.f32 %v3405, 1.0
      %v3419 = vadd.f32 %v3407, 1.0
      %v3420 = vadd.f32 %v3409, 1.0
      %v3421 = vadd.f32 %v3411, 1.0
      %v3422 = vadd.f32 %v3413, 1.0
      %v3423 = vadd.f32 %v3415, 1.0
      %v3424 = vrcp.pop %v3416
      %v3425 = vmul.f32 1.0, %v3424
      %v3426 = vrcp.pop %v3417
      %v3427 = vmul.f32 1.0, %v3426
      %v3428 = vrcp.pop %v3418
      %v3429 = vmul.f32 1.0, %v3428
      %v3430 = vrcp.pop %v3419
      %v3431 = vmul.f32 1.0, %v3430
      %v3432 = vrcp.pop %v3420
      %v3433 = vmul.f32 1.0, %v3432
      %v3434 = vrcp.pop %v3421
      %v3435 = vmul.f32 1.0, %v3434
      %v3436 = vrcp.pop %v3422
      %v3437 = vmul.f32 1.0, %v3436
      %v3438 = vrcp.pop %v3423
      %v3439 = vmul.f32 1.0, %v3438
      %v3440 = vmul.f32 %v3384, %v3425
      %v3441 = vmul.f32 %v3385, %v3427
      %v3442 = vmul.f32 %v3386, %v3429
      %v3443 = vmul.f32 %v3387, %v3431
      %v3444 = vmul.f32 %v3388, %v3433
      %v3445 = vmul.f32 %v3389, %v3435
      %v3446 = vmul.f32 %v3390, %v3437
      %v3447 = vmul.f32 %v3391, %v3439
      %v3456 = vcombine.low %v3440, %v3441
      %v3457 = vcombine.low %v3442, %v3443
      %v3459 = vunpack.c.l.s4 1983009808
      %v3460 = vunpack.c.0.s8 %v3459
      %v3461 = vlaneseq
      %v3462 = vshrl.u32 %v3461, 7
      %v3463 = vsub.s32 %v3460, %v3462
      %v3464 = vrot.slane %v3456, %v3463
      %v3466 = vunpack.c.l.s4 1983009808
      %v3467 = vunpack.c.0.s8 %v3466
      %v3468 = vlaneseq
      %v3469 = vshrl.u32 %v3468, 7
      %v3470 = vsub.s32 %v3467, %v3469
      %v3471 = vrot.slane %v3457, %v3470
      %v3472 = vcombine.low %v3464, %v3471
      %v3473 = vcombine.high %v3464, %v3471
      %v3474 = vcombine.low %v3444, %v3445
      %v3475 = vcombine.low %v3446, %v3447
      %v3477 = vunpack.c.l.s4 1983009808
      %v3478 = vunpack.c.0.s8 %v3477
      %v3479 = vlaneseq
      %v3480 = vshrl.u32 %v3479, 7
      %v3481 = vsub.s32 %v3478, %v3480
      %v3482 = vrot.slane %v3474, %v3481
      %v3484 = vunpack.c.l.s4 1983009808
      %v3485 = vunpack.c.0.s8 %v3484
      %v3486 = vlaneseq
      %v3487 = vshrl.u32 %v3486, 7
      %v3488 = vsub.s32 %v3485, %v3487
      %v3489 = vrot.slane %v3475, %v3488
      %v3490 = vcombine.low %v3482, %v3489
      %v3491 = vcombine.high %v3482, %v3489
      %3496 = vst [vmem:[%s342] sm:$0xff] %v3472
      %3497 = vst [vmem:[%s342 + $0x8] sm:$0xff] %v3473
      %3498 = vst [vmem:[%s342 + $0x10] sm:$0xff] %v3490
      %3499 = vst [vmem:[%s342 + $0x18] sm:$0xff] %v3491
      %p3500 = scmp.lt.s32.totalorder %s19, 1
      %s3501 = scalar_select %p3500, %s19, 1
      %s3502 = smul.addr %s3501, 4
      %s3503 = smul.addr %s3502, 8
      %s3504 = scalar_lea.vmem %s8, %s3503
      // Predicated region
      $region53: #{up_forward.1} parent=51 // pred_check
        %p3505 = pneg %p220
      $region54: #{up_forward.1} parent=51 // pred_check_branch
        %3507 = sbr.rel (%p3505) target = $region56
      $region55: #{up_forward.1} parent=51 // pred_region
        _
      $region56: #{up_forward.1} parent=51 // pred_fallthru
        _
    $region52: #{up_forward.1} parent=5 // pred_fallthru
      _
    %p3508 = scmp.le.s32.totalorder 2, %s14
    // Predicated region
    $region57: #{up_forward.1} parent=5 // pred_check
      %p3509 = pneg %p3508
    $region58: #{up_forward.1} parent=5 // pred_check_branch
      %3511 = sbr.rel (%p3509) target = $region60
    $region59: #{up_forward.1} parent=5 // pred_region
      %s3512 = ssub.s32 %s14, 2
      // Predicated region
      $region61: #{up_forward.1} parent=59 // pred_check
        %p3513 = pneg %p226
      $region62: #{up_forward.1} parent=59 // pred_check_branch
        %3515 = sbr.rel (%p3513) target = $region64
      $region63: #{up_forward.1} parent=59 // pred_region
        %p3516 = scmp.lt.s32.totalorder %s20, 1
        %s3517 = scalar_select %p3516, %s20, 1
        %s3518 = smul.addr %s3517, 4
        %s3519 = smul.addr %s3518, 8
        %s3520 = scalar_lea.vmem %s8, %s3519
      $region64: #{up_forward.1} parent=59 // pred_fallthru
        _
    $region60: #{up_forward.1} parent=5 // pred_fallthru
      _
  $region6: #{up_forward.1} parent=0 // loop_footer
    %s18 = sadd.s32 1, %s14
  $region7: #{up_forward.1} parent=0 // loop_footer_branch
    %13 = sbr.rel target = $region3
  $region8: #{up_forward.1} parent=0 // loop_exit
    _

</llo_original>
